<compile_context>
chip_gen: v5e
topology: v5e:2x2
jax: 0.10.0
libtpu: 0.0.40
codegen_flags: <defaults>
</compile_context>

<pallas_src>
import functools

import jax
import jax.numpy as jnp
from jax.experimental import pallas as pl
from jax.experimental.pallas import tpu as pltpu


LANE = 128


def _round_up(x, m):
    return ((x + m - 1) // m) * m


def _cdiv(a, b):
    return -(-a // b)


@functools.lru_cache(maxsize=1)
def _gen_config():
    """Per-TPU-generation tiling / scoped-VMEM budgets."""
    kind = ""
    try:
        kind = jax.devices()[0].device_kind.lower()
    except Exception:
        pass
    if ("v5" in kind) or ("v6" in kind):
        # 128 MiB physical VMEM, one TensorCore per chip: big row tiles amortize
        # per-grid-step overhead and per-row-tile weight re-reads.
        return {"tm_max": 4096, "vmem_limit": 96 * 1024 * 1024, "min_row_tiles": 1}
    # v7x (2 TCs/chip, 64 MiB VMEM/TC) and unknown parts: conservative VMEM,
    # and make sure at least 2 blocks exist on a parallel axis (both TCs busy).
    return {"tm_max": 2048, "vmem_limit": 48 * 1024 * 1024, "min_row_tiles": 2}


def _pick_tm(rows, tm_max, min_row_tiles):
    """Row-tile size: multiple of 8, capped, prefers an exact divisor of `rows`
    (avoids row padding and the post-call row slice)."""
    tm = min(_round_up(rows, 8), tm_max)
    if min_row_tiles > 1 and rows > 8 * min_row_tiles:
        tm = min(tm, _round_up(_cdiv(rows, min_row_tiles), 8))
    if rows % 8 == 0:
        lo = max(tm // 2, 8)
        for cand in range(tm, lo - 1, -8):
            if rows % cand == 0:
                return cand
    return tm


# -----------------------------------------------------------------------------
# Pallas kernels (hot paths)
# -----------------------------------------------------------------------------
def _conv_gemm_kernel(p_ref, w_ref, b_ref, *rest, leaky, has_residual):
    """Tiled im2col GEMM, f32 accumulation over the K grid axis.

    Epilogue (last K step): + bias (BN folded) + optional LeakyReLU(0.1)
    + optional fused residual add, bf16 lane-dense (TM, TN) store.
    """
    if has_residual:
        r_ref, o_ref, acc_ref = rest
    else:
        r_ref = None
        o_ref, acc_ref = rest

    @pl.when(pl.program_id(2) == 0)
    def _init():
        acc_ref[...] = jnp.zeros_like(acc_ref)

    acc_ref[...] += jnp.dot(p_ref[...], w_ref[...],
                            preferred_element_type=jnp.float32)

    @pl.when(pl.program_id(2) == pl.num_programs(2) - 1)
    def _finalize():
        acc = acc_ref[...] + b_ref[...]
        if leaky:
            acc = jnp.where(acc > 0.0, acc, 0.1 * acc)
        if has_residual:
            acc = acc + r_ref[...].astype(jnp.float32)
        o_ref[...] = acc.astype(o_ref.dtype)


def _add_kernel(a_ref, b_ref, o_ref):
    o_ref[...] = a_ref[...] + b_ref[...]


def _yolo_kernel(p_ref, aux_ref, o_ref, *, stride):
    """YOLO decode in (attrs, M) layout (M = grid*grid*anchors on lanes).

    aux rows: [grid_x, grid_y, anchor_w/stride, anchor_h/stride].
    Matches predict_transform: sigmoid(x,y)+offset, exp(w,h)*anchor,
    sigmoid(obj, classes), box coords * stride.
    """
    p = p_ref[0].astype(jnp.float32)     # (attrs, M), bf16 -> f32 in-kernel
    aux = aux_ref[...]                   # (4, M)
    xy = jax.nn.sigmoid(p[0:2, :]) + aux[0:2, :]
    wh = jnp.exp(p[2:4, :]) * aux[2:4, :]          # only w/h rows exponentiated
    rest = jax.nn.sigmoid(p[4:, :])                # objectness + class scores
    box = jnp.concatenate([xy, wh], axis=0) * stride
    o_ref[0] = jnp.concatenate([box, rest], axis=0)


# -----------------------------------------------------------------------------
# Layer wrappers (NHWC / channel-last, bf16 activations everywhere)
# -----------------------------------------------------------------------------
def conv2d_pallas(x_nhwc, w_oikk, bias_o, stride, pad, leaky, residual=None):
    cfg = _gen_config()
    N, H, W, C = x_nhwc.shape
    Cout, Cin, k, _ = w_oikk.shape
    assert Cin == C
    Ho = (H + 2 * pad - k) // stride + 1
    Wo = (W + 2 * pad - k) // stride + 1
    R = N * Ho * Wo

    x_bf = x_nhwc.astype(jnp.bfloat16)
    if k == 1 and stride == 1 and pad == 0:
        pat = x_bf.reshape(R, C)
    else:
        # TODO(synk): im2col is still XLA glue (one fused bf16 pass under jit);
        # an in-kernel halo-tile im2col (memory_space=pl.ANY + make_async_copy)
        # would cut HBM reads ~k*k x for 3x3 convs.
        xp = jnp.pad(x_bf, ((0, 0), (pad, pad), (pad, pad), (0, 0)))
        slices = [xp[:, kh:kh + stride * Ho:stride, kw:kw + stride * Wo:stride, :]
                  for kh in range(k) for kw in range(k)]
        pat = jnp.stack(slices, axis=3)          # (N, Ho, Wo, k*k, C)
        pat = pat.reshape(R, k * k * C)          # K ordered as (kh, kw, c)
    K = pat.shape[1]

    # weight (Cout, Cin, k, k) -> (k, k, Cin, Cout) -> (K, Cout), same (kh,kw,c) order
    wmat = jnp.transpose(w_oikk, (2, 3, 1, 0)).reshape(k * k * Cin, Cout)
    wmat = wmat.astype(jnp.bfloat16)

    # Tile sizes / padding: lane-dense Cout, padded K, row tiles multiple of 8.
    TN = LANE
    Cout_p = _round_up(Cout, TN)
    TK = min(_round_up(K, LANE), 512)
    K_p = _round_up(K, TK)
    # If the Cout axis already has enough parallel blocks, don't shrink TM.
    min_row_tiles = 1 if (Cout_p // TN) >= cfg["min_row_tiles"] else cfg["min_row_tiles"]
    TM = _pick_tm(R, cfg["tm_max"], min_row_tiles)
    R_p = _round_up(R, TM)

    pat_p = pat if (R_p == R and K_p == K) else \
        jnp.pad(pat, ((0, R_p - R), (0, K_p - K)))
    wmat_p = wmat if (K_p == K and Cout_p == Cout) else \
        jnp.pad(wmat, ((0, K_p - K), (0, Cout_p - Cout)))
    bias_p = jnp.pad(bias_o.reshape(1, Cout), ((0, 0), (0, Cout_p - Cout)))

    in_specs = [
        pl.BlockSpec((TM, TK), lambda i, j, kk: (i, kk)),
        pl.BlockSpec((TK, TN), lambda i, j, kk: (kk, j)),
        pl.BlockSpec((1, TN), lambda i, j, kk: (0, j)),
    ]
    operands = [pat_p, wmat_p, bias_p]
    if residual is not None:
        assert residual.shape == (N, Ho, Wo, Cout)
        r2 = residual.astype(jnp.bfloat16).reshape(R, Cout)
        if R_p != R or Cout_p != Cout:
            r2 = jnp.pad(r2, ((0, R_p - R), (0, Cout_p - Cout)))
        in_specs.append(pl.BlockSpec((TM, TN), lambda i, j, kk: (i, j)))
        operands.append(r2)

    out = pl.pallas_call(
        functools.partial(_conv_gemm_kernel, leaky=leaky,
                          has_residual=residual is not None),
        out_shape=jax.ShapeDtypeStruct((R_p, Cout_p), jnp.bfloat16),
        grid=(R_p // TM, Cout_p // TN, K_p // TK),
        in_specs=in_specs,
        out_specs=pl.BlockSpec((TM, TN), lambda i, j, kk: (i, j)),
        scratch_shapes=[pltpu.VMEM((TM, TN), jnp.float32)],
        compiler_params=pltpu.CompilerParams(
            dimension_semantics=("parallel", "parallel", "arbitrary"),
            vmem_limit_bytes=cfg["vmem_limit"],
        ),
    )(*operands)

    if R_p != R:
        out = out[:R]
    if Cout_p != Cout:
        # TODO(synk): keeping Cout padded to 128 between back-to-back convs
        # (slicing only at route/yolo boundaries) would drop this glue pass.
        out = out[:, :Cout]
    return out.reshape(N, Ho, Wo, Cout)   # stays NHWC, bf16


def shortcut_add(a, b):
    """Lane-dense tiled elementwise add. Fallback only: most shortcuts are
    fused into the preceding conv's epilogue in darknet_forward."""
    cfg = _gen_config()
    shape = a.shape
    n = a.size
    WIDE = 8 * LANE                      # 1024-wide lane-dense rows
    rows = _cdiv(n, WIDE)
    TM = min(_round_up(rows, 8), 1024)
    rows_p = _round_up(rows, TM)
    n_p = rows_p * WIDE
    a1 = a.reshape(-1)
    b1 = b.reshape(-1)
    if n_p != n:
        a1 = jnp.pad(a1, (0, n_p - n))
        b1 = jnp.pad(b1, (0, n_p - n))
    a2 = a1.reshape(rows_p, WIDE)
    b2 = b1.reshape(rows_p, WIDE)
    out = pl.pallas_call(
        _add_kernel,
        out_shape=jax.ShapeDtypeStruct((rows_p, WIDE), a.dtype),
        grid=(rows_p // TM,),
        in_specs=[
            pl.BlockSpec((TM, WIDE), lambda i: (i, 0)),
            pl.BlockSpec((TM, WIDE), lambda i: (i, 0)),
        ],
        out_specs=pl.BlockSpec((TM, WIDE), lambda i: (i, 0)),
        compiler_params=pltpu.CompilerParams(
            dimension_semantics=("parallel",),
            vmem_limit_bytes=cfg["vmem_limit"],
        ),
    )(a2, b2)
    return out.reshape(-1)[:n].reshape(shape)


def upsample2x(x_nhwc):
    # Single materialization (reshape -> broadcast_to -> reshape).
    # TODO(synk): could be folded into the downstream conv's patch index math.
    N, H, W, C = x_nhwc.shape
    y = jnp.broadcast_to(x_nhwc[:, :, None, :, None, :], (N, H, 2, W, 2, C))
    return y.reshape(N, 2 * H, 2 * W, C)


def transform_predictions(pred_nhwc, input_dim, anchors, num_classes):
    cfg = _gen_config()
    B, G, _, _ = pred_nhwc.shape
    stride = input_dim // G
    A = len(anchors)
    attrs = 5 + num_classes
    M = G * G * A

    # NHWC (B,G,G,A*attrs) -> lane-dense (B, attrs, M) with m = (gh*G+gw)*A + a,
    # i.e. exactly the PyTorch predict_transform ordering.
    p = pred_nhwc.reshape(B, G * G, A, attrs)
    p = jnp.transpose(p, (0, 3, 1, 2)).reshape(B, attrs, M)

    # Compact aux: grid offsets + stride-scaled anchors, one row each (4 x M).
    cell = jnp.arange(G * G, dtype=jnp.int32)
    gx = jnp.repeat((cell % G).astype(jnp.float32), A)
    gy = jnp.repeat((cell // G).astype(jnp.float32), A)
    aw = jnp.tile(jnp.asarray([a[0] / stride for a in anchors], jnp.float32), G * G)
    ah = jnp.tile(jnp.asarray([a[1] / stride for a in anchors], jnp.float32), G * G)
    aux = jnp.stack([gx, gy, aw, ah], axis=0)        # (4, M)

    out = pl.pallas_call(
        functools.partial(_yolo_kernel, stride=float(stride)),
        out_shape=jax.ShapeDtypeStruct((B, attrs, M), jnp.float32),
        grid=(B,),
        in_specs=[
            pl.BlockSpec((1, attrs, M), lambda b: (b, 0, 0)),
            pl.BlockSpec((4, M), lambda b: (0, 0)),
        ],
        out_specs=pl.BlockSpec((1, attrs, M), lambda b: (b, 0, 0)),
        compiler_params=pltpu.CompilerParams(
            dimension_semantics=("parallel",),
            vmem_limit_bytes=cfg["vmem_limit"],
        ),
    )(p, aux)

    # Back to PyTorch detections layout (B, M, attrs) for the dim=1 concat.
    return jnp.transpose(out, (0, 2, 1))


# -----------------------------------------------------------------------------
# Synthetic "cfg" (replaces parse_cfg on a file)
# -----------------------------------------------------------------------------
BLOCKS = [
    {"type": "net", "height": 16, "width": 16, "channels": 4},
    {"type": "convolutional", "batch_normalize": 1, "filters": 8,  "size": 3, "stride": 1, "pad": 1, "activation": "leaky"},   # 0
    {"type": "convolutional", "batch_normalize": 1, "filters": 16, "size": 3, "stride": 2, "pad": 1, "activation": "leaky"},   # 1
    {"type": "convolutional", "batch_normalize": 1, "filters": 8,  "size": 1, "stride": 1, "pad": 0, "activation": "leaky"},   # 2
    {"type": "convolutional", "batch_normalize": 1, "filters": 16, "size": 3, "stride": 1, "pad": 1, "activation": "leaky"},   # 3
    {"type": "shortcut", "from": -3},                                                                                          # 4
    {"type": "convolutional", "batch_normalize": 1, "filters": 32, "size": 3, "stride": 2, "pad": 1, "activation": "leaky"},   # 5
    {"type": "convolutional", "batch_normalize": 0, "filters": 21, "size": 1, "stride": 1, "pad": 0, "activation": "linear"},  # 6
    {"type": "yolo", "classes": 2, "anchors": [(10, 13), (16, 30), (33, 23)]},                                                 # 7
    {"type": "route", "layers": "-3"},                                                                                         # 8
    {"type": "convolutional", "batch_normalize": 1, "filters": 8,  "size": 1, "stride": 1, "pad": 0, "activation": "leaky"},   # 9
    {"type": "upsample", "stride": 2},                                                                                         # 10
    {"type": "route", "layers": "-1, 4"},                                                                                      # 11
    {"type": "convolutional", "batch_normalize": 1, "filters": 16, "size": 3, "stride": 1, "pad": 1, "activation": "leaky"},   # 12
    {"type": "convolutional", "batch_normalize": 0, "filters": 21, "size": 1, "stride": 1, "pad": 0, "activation": "linear"},  # 13
    {"type": "yolo", "classes": 2, "anchors": [(30, 61), (62, 45), (59, 119)]},                                                # 14
]


def init_params(blocks, key):
    """Deterministic synthetic weights; BatchNorm folded into conv w/b (inference)."""
    params = []
    prev_filters = int(blocks[0]["channels"])
    output_filters = []
    for i, blk in enumerate(blocks[1:]):
        t = blk["type"]
        p = None
        if t == "convolutional":
            k = blk["size"]
            fo = blk["filters"]
            key, k1, k2, k3, k4, k5, k6 = jax.random.split(key, 7)
            w = jax.random.normal(k1, (fo, prev_filters, k, k), jnp.float32)
            w = w * (1.0 / (prev_filters * k * k) ** 0.5)
            if blk["batch_normalize"]:
                gamma = 1.0 + 0.1 * jax.random.normal(k2, (fo,), jnp.float32)
                beta = 0.1 * jax.random.normal(k3, (fo,), jnp.float32)
                mean = 0.1 * jax.random.normal(k4, (fo,), jnp.float32)
                var = jnp.abs(1.0 + 0.1 * jax.random.normal(k5, (fo,), jnp.float32))
                scale = gamma / jnp.sqrt(var + 1e-5)
                w = w * scale[:, None, None, None]
                b = beta - mean * scale
            else:
                b = 0.1 * jax.random.normal(k6, (fo,), jnp.float32)
            p = {"w": w, "b": b, "stride": blk["stride"], "pad": blk["pad"],
                 "leaky": blk["activation"] == "leaky"}
            prev_filters = fo
        elif t == "route":
            layers = [int(s) for s in str(blk["layers"]).split(",")]
            if layers[0] > 0:
                layers[0] -= i
            if len(layers) == 1:
                prev_filters = output_filters[i + layers[0]]
            else:
                if layers[1] > 0:
                    layers[1] -= i
                prev_filters = output_filters[i + layers[0]] + output_filters[i + layers[1]]
        # shortcut / upsample / yolo keep prev_filters
        params.append(p)
        output_filters.append(prev_filters)
    return params


def darknet_forward(blocks, params, data_tensor_nchw):
    """Mirrors Darknet.forward (NCHW input); activations run channel-last bf16 internally."""
    net_info = blocks[0]
    modules = blocks[1:]
    outputs = {}
    detections = None

    # Which layer outputs are referenced by later route layers / shortcut 'from':
    # a conv directly followed by a shortcut may fuse the residual add into its
    # epilogue only if nothing else references the bare conv output.
    referenced = set()
    for idx, blk in enumerate(modules):
        if blk["type"] == "route":
            layers = [int(s) for s in str(blk["layers"]).split(",")]
            for l in layers:
                if l > 0:
                    l -= idx
                referenced.add(idx + l)
        elif blk["type"] == "shortcut":
            referenced.add(idx + int(blk["from"]))

    fused_shortcuts = set()

    # Single NCHW->NHWC conversion + single f32->bf16 cast for the whole net.
    x = jnp.transpose(data_tensor_nchw, (0, 2, 3, 1)).astype(jnp.bfloat16)
    for index, blk in enumerate(modules):
        layer_type = blk["type"]
        if layer_type == "convolutional":
            p = params[index]
            residual = None
            nxt = modules[index + 1] if index + 1 < len(modules) else None
            if (nxt is not None and nxt["type"] == "shortcut"
                    and index not in referenced):
                src = index + 1 + int(nxt["from"])
                if src in outputs:
                    residual = outputs[src]
                    fused_shortcuts.add(index + 1)
            x = conv2d_pallas(x, p["w"], p["b"], p["stride"], p["pad"],
                              p["leaky"], residual=residual)
        elif layer_type == "upsample":
            x = upsample2x(x)
        elif layer_type == "route":
            layers = [int(s) for s in str(blk["layers"]).split(",")]
            if layers[0] > 0:
                layers[0] -= index
            if len(layers) == 1:
                x = outputs[index + layers[0]]
            else:
                if layers[1] > 0:
                    layers[1] -= index
                # dim=1 (channels) in NCHW == last axis in NHWC
                x = jnp.concatenate(
                    [outputs[index + layers[0]], outputs[index + layers[1]]], axis=-1)
        elif layer_type == "shortcut":
            if index in fused_shortcuts:
                x = outputs[index - 1]   # residual already added in conv epilogue
            else:
                x = shortcut_add(outputs[index - 1],
                                 outputs[index + int(blk["from"])])
        elif layer_type == "yolo":
            anchors = blk["anchors"]
            input_dim = int(net_info["height"])
            num_classes = int(blk["classes"])
            x = transform_predictions(x, input_dim, anchors, num_classes)
            detections = x if detections is None else jnp.concatenate([detections, x], axis=1)
        else:
            raise AssertionError("Unknown layer encountered.")
        outputs[index] = x
    return detections


if __name__ == "__main__":
    key = jax.random.PRNGKey(0)
    kx, kp = jax.random.split(key)
    x = jax.random.normal(kx, (2, 4, 16, 16), jnp.float32)   # NCHW, like PyTorch
    params = init_params(BLOCKS, kp)

    # jit the whole forward so XLA fuses the im2col / pad / transpose glue.
    fwd = jax.jit(lambda data: darknet_forward(BLOCKS, params, data))
    detections = jax.block_until_ready(fwd(x))

    # scale 1: 4x4 grid * 3 anchors = 48 boxes; scale 2: 8x8 * 3 = 192 boxes
    assert detections.shape == (2, 240, 7), detections.shape
    assert bool(jnp.all(jnp.isfinite(detections)))
    print("KERNEL_OK")
</pallas_src>

<mosaic_0001>
module attributes {stable_mosaic.version = 11 : i64} {
  func.func @_conv_gemm_kernel(%arg0: i32, %arg1: i32, %arg2: i32, %arg3: memref<256x128xbf16, #tpu.memory_space<vmem>>, %arg4: memref<128x128xbf16, #tpu.memory_space<vmem>>, %arg5: memref<1x128xf32, #tpu.memory_space<vmem>>, %arg6: memref<256x128xbf16, #tpu.memory_space<vmem>>, %arg7: memref<256x128xf32, #tpu.memory_space<vmem>>) attributes {dimension_semantics = [#tpu.dimension_semantics<parallel>, #tpu.dimension_semantics<parallel>, #tpu.dimension_semantics<arbitrary>], iteration_bounds = array<i64: 2, 1, 1>, scalar_prefetch = 0 : i64, scratch_operands = 1 : i64, tpu.core_type = #tpu.core_type<tc>, window_params = [{transform_indices = @transform_0, window_bounds = array<i64: 256, 128>}, {transform_indices = @transform_1, window_bounds = array<i64: 128, 128>}, {transform_indices = @transform_2, window_bounds = array<i64: 1, 128>}, {transform_indices = @transform_3, window_bounds = array<i64: 256, 128>}]} {
    %c0_i32 = arith.constant 0 : i32
    %0 = arith.cmpi eq, %arg2, %c0_i32 : i32
    %1 = arith.extui %0 : i1 to i32
    %c0_i32_0 = arith.constant 0 : i32
    %2 = arith.cmpi ne, %1, %c0_i32_0 : i32
    scf.if %2 {
      %cst_10 = arith.constant 0.000000e+00 : f32
      %12 = vector.broadcast %cst_10 : f32 to vector<256x128xf32>
      %c0_11 = arith.constant 0 : index
      %c0_12 = arith.constant 0 : index
      %13 = vector.load %arg7[%c0_11, %c0_12] : memref<256x128xf32, #tpu.memory_space<vmem>>, vector<256x128xf32>
      tpu.vector_store %arg7[%c0_11, %c0_12], %12 {strides = array<i32>} : memref<256x128xf32, #tpu.memory_space<vmem>>, vector<256x128xf32>,
    } else {
    }
    %c0 = arith.constant 0 : index
    %c0_1 = arith.constant 0 : index
    %3 = vector.load %arg7[%c0, %c0_1] : memref<256x128xf32, #tpu.memory_space<vmem>>, vector<256x128xf32>
    %c0_2 = arith.constant 0 : index
    %c0_3 = arith.constant 0 : index
    %4 = vector.load %arg3[%c0_2, %c0_3] : memref<256x128xbf16, #tpu.memory_space<vmem>>, vector<256x128xbf16>
    %c0_4 = arith.constant 0 : index
    %c0_5 = arith.constant 0 : index
    %5 = vector.load %arg4[%c0_4, %c0_5] : memref<128x128xbf16, #tpu.memory_space<vmem>>, vector<128x128xbf16>
    %cst = arith.constant dense<0.000000e+00> : vector<256x128xf32>
    %6 = tpu.matmul %4, %5, %cst {dimension_numbers = #tpu.dot_dimension_numbers<[1], [0], [0], [1], [0, 0, 1, 1], [], []>} : vector<256x128xbf16>, vector<128x128xbf16>, vector<256x128xf32> -> vector<256x128xf32>
    %7 = arith.addf %3, %6 : vector<256x128xf32>
    %c0_6 = arith.constant 0 : index
    %c0_7 = arith.constant 0 : index
    %8 = vector.load %arg7[%c0_6, %c0_7] : memref<256x128xf32, #tpu.memory_space<vmem>>, vector<256x128xf32>
    tpu.vector_store %arg7[%c0_6, %c0_7], %7 {strides = array<i32>} : memref<256x128xf32, #tpu.memory_space<vmem>>, vector<256x128xf32>,
    %c0_i32_8 = arith.constant 0 : i32
    %9 = arith.cmpi eq, %arg2, %c0_i32_8 : i32
    %10 = arith.extui %9 : i1 to i32
    %c0_i32_9 = arith.constant 0 : i32
    %11 = arith.cmpi ne, %10, %c0_i32_9 : i32
    scf.if %11 {
      %c0_10 = arith.constant 0 : index
      %c0_11 = arith.constant 0 : index
      %12 = vector.load %arg7[%c0_10, %c0_11] : memref<256x128xf32, #tpu.memory_space<vmem>>, vector<256x128xf32>
      %c0_12 = arith.constant 0 : index
      %c0_13 = arith.constant 0 : index
      %13 = vector.load %arg5[%c0_12, %c0_13] : memref<1x128xf32, #tpu.memory_space<vmem>>, vector<1x128xf32>
      %14 = vector.broadcast %13 : vector<1x128xf32> to vector<256x128xf32>
      %15 = arith.addf %12, %14 : vector<256x128xf32>
      %cst_14 = arith.constant 0.000000e+00 : f32
      %16 = vector.broadcast %cst_14 : f32 to vector<256x128xf32>
      %17 = arith.cmpf ogt, %15, %16 : vector<256x128xf32>
      %cst_15 = arith.constant 1.000000e-01 : f32
      %18 = vector.broadcast %cst_15 : f32 to vector<256x128xf32>
      %19 = arith.mulf %18, %15 : vector<256x128xf32>
      %20 = arith.select %17, %15, %19 : vector<256x128xi1>, vector<256x128xf32>
      %21 = arith.truncf %20 : vector<256x128xf32> to vector<256x128xbf16>
      %c0_16 = arith.constant 0 : index
      %c0_17 = arith.constant 0 : index
      %22 = vector.load %arg6[%c0_16, %c0_17] : memref<256x128xbf16, #tpu.memory_space<vmem>>, vector<256x128xbf16>
      tpu.vector_store %arg6[%c0_16, %c0_17], %21 {strides = array<i32>} : memref<256x128xbf16, #tpu.memory_space<vmem>>, vector<256x128xbf16>,
    } else {
    }
    return
  }
  func.func @transform_0(%arg0: i32, %arg1: i32, %arg2: i32) -> (i32, i32) {
    %c0_i32 = arith.constant 0 : i32
    return %arg0, %arg2 : i32, i32
  }
  func.func @transform_1(%arg0: i32, %arg1: i32, %arg2: i32) -> (i32, i32) {
    %c0_i32 = arith.constant 0 : i32
    return %arg2, %arg1 : i32, i32
  }
  func.func @transform_2(%arg0: i32, %arg1: i32, %arg2: i32) -> (i32, i32) {
    %c0_i32 = arith.constant 0 : i32
    %c0_i32_0 = arith.constant 0 : i32
    return %c0_i32, %arg1 : i32, i32
  }
  func.func @transform_3(%arg0: i32, %arg1: i32, %arg2: i32) -> (i32, i32) {
    %c0_i32 = arith.constant 0 : i32
    return %arg0, %arg1 : i32, i32
  }
}

module attributes {stable_mosaic.version = 11 : i64} {
  func.func @_conv_gemm_kernel(%arg0: i32, %arg1: i32, %arg2: i32, %arg3: memref<64x128xbf16, #tpu.memory_space<vmem>>, %arg4: memref<128x128xbf16, #tpu.memory_space<vmem>>, %arg5: memref<1x128xf32, #tpu.memory_space<vmem>>, %arg6: memref<64x128xbf16, #tpu.memory_space<vmem>>, %arg7: memref<64x128xf32, #tpu.memory_space<vmem>>) attributes {dimension_semantics = [#tpu.dimension_semantics<parallel>, #tpu.dimension_semantics<parallel>, #tpu.dimension_semantics<arbitrary>], iteration_bounds = array<i64: 2, 1, 1>, scalar_prefetch = 0 : i64, scratch_operands = 1 : i64, tpu.core_type = #tpu.core_type<tc>, window_params = [{transform_indices = @transform_0, window_bounds = array<i64: 64, 128>}, {transform_indices = @transform_1, window_bounds = array<i64: 128, 128>}, {transform_indices = @transform_2, window_bounds = array<i64: 1, 128>}, {transform_indices = @transform_3, window_bounds = array<i64: 64, 128>}]} {
    %c0_i32 = arith.constant 0 : i32
    %0 = arith.cmpi eq, %arg2, %c0_i32 : i32
    %1 = arith.extui %0 : i1 to i32
    %c0_i32_0 = arith.constant 0 : i32
    %2 = arith.cmpi ne, %1, %c0_i32_0 : i32
    scf.if %2 {
      %cst_10 = arith.constant 0.000000e+00 : f32
      %12 = vector.broadcast %cst_10 : f32 to vector<64x128xf32>
      %c0_11 = arith.constant 0 : index
      %c0_12 = arith.constant 0 : index
      %13 = vector.load %arg7[%c0_11, %c0_12] : memref<64x128xf32, #tpu.memory_space<vmem>>, vector<64x128xf32>
      tpu.vector_store %arg7[%c0_11, %c0_12], %12 {strides = array<i32>} : memref<64x128xf32, #tpu.memory_space<vmem>>, vector<64x128xf32>,
    } else {
    }
    %c0 = arith.constant 0 : index
    %c0_1 = arith.constant 0 : index
    %3 = vector.load %arg7[%c0, %c0_1] : memref<64x128xf32, #tpu.memory_space<vmem>>, vector<64x128xf32>
    %c0_2 = arith.constant 0 : index
    %c0_3 = arith.constant 0 : index
    %4 = vector.load %arg3[%c0_2, %c0_3] : memref<64x128xbf16, #tpu.memory_space<vmem>>, vector<64x128xbf16>
    %c0_4 = arith.constant 0 : index
    %c0_5 = arith.constant 0 : index
    %5 = vector.load %arg4[%c0_4, %c0_5] : memref<128x128xbf16, #tpu.memory_space<vmem>>, vector<128x128xbf16>
    %cst = arith.constant dense<0.000000e+00> : vector<64x128xf32>
    %6 = tpu.matmul %4, %5, %cst {dimension_numbers = #tpu.dot_dimension_numbers<[1], [0], [0], [1], [0, 0, 1, 1], [], []>} : vector<64x128xbf16>, vector<128x128xbf16>, vector<64x128xf32> -> vector<64x128xf32>
    %7 = arith.addf %3, %6 : vector<64x128xf32>
    %c0_6 = arith.constant 0 : index
    %c0_7 = arith.constant 0 : index
    %8 = vector.load %arg7[%c0_6, %c0_7] : memref<64x128xf32, #tpu.memory_space<vmem>>, vector<64x128xf32>
    tpu.vector_store %arg7[%c0_6, %c0_7], %7 {strides = array<i32>} : memref<64x128xf32, #tpu.memory_space<vmem>>, vector<64x128xf32>,
    %c0_i32_8 = arith.constant 0 : i32
    %9 = arith.cmpi eq, %arg2, %c0_i32_8 : i32
    %10 = arith.extui %9 : i1 to i32
    %c0_i32_9 = arith.constant 0 : i32
    %11 = arith.cmpi ne, %10, %c0_i32_9 : i32
    scf.if %11 {
      %c0_10 = arith.constant 0 : index
      %c0_11 = arith.constant 0 : index
      %12 = vector.load %arg7[%c0_10, %c0_11] : memref<64x128xf32, #tpu.memory_space<vmem>>, vector<64x128xf32>
      %c0_12 = arith.constant 0 : index
      %c0_13 = arith.constant 0 : index
      %13 = vector.load %arg5[%c0_12, %c0_13] : memref<1x128xf32, #tpu.memory_space<vmem>>, vector<1x128xf32>
      %14 = vector.broadcast %13 : vector<1x128xf32> to vector<64x128xf32>
      %15 = arith.addf %12, %14 : vector<64x128xf32>
      %cst_14 = arith.constant 0.000000e+00 : f32
      %16 = vector.broadcast %cst_14 : f32 to vector<64x128xf32>
      %17 = arith.cmpf ogt, %15, %16 : vector<64x128xf32>
      %cst_15 = arith.constant 1.000000e-01 : f32
      %18 = vector.broadcast %cst_15 : f32 to vector<64x128xf32>
      %19 = arith.mulf %18, %15 : vector<64x128xf32>
      %20 = arith.select %17, %15, %19 : vector<64x128xi1>, vector<64x128xf32>
      %21 = arith.truncf %20 : vector<64x128xf32> to vector<64x128xbf16>
      %c0_16 = arith.constant 0 : index
      %c0_17 = arith.constant 0 : index
      %22 = vector.load %arg6[%c0_16, %c0_17] : memref<64x128xbf16, #tpu.memory_space<vmem>>, vector<64x128xbf16>
      tpu.vector_store %arg6[%c0_16, %c0_17], %21 {strides = array<i32>} : memref<64x128xbf16, #tpu.memory_space<vmem>>, vector<64x128xbf16>,
    } else {
    }
    return
  }
  func.func @transform_0(%arg0: i32, %arg1: i32, %arg2: i32) -> (i32, i32) {
    %c0_i32 = arith.constant 0 : i32
    return %arg0, %arg2 : i32, i32
  }
  func.func @transform_1(%arg0: i32, %arg1: i32, %arg2: i32) -> (i32, i32) {
    %c0_i32 = arith.constant 0 : i32
    return %arg2, %arg1 : i32, i32
  }
  func.func @transform_2(%arg0: i32, %arg1: i32, %arg2: i32) -> (i32, i32) {
    %c0_i32 = arith.constant 0 : i32
    %c0_i32_0 = arith.constant 0 : i32
    return %c0_i32, %arg1 : i32, i32
  }
  func.func @transform_3(%arg0: i32, %arg1: i32, %arg2: i32) -> (i32, i32) {
    %c0_i32 = arith.constant 0 : i32
    return %arg0, %arg1 : i32, i32
  }
}

module attributes {stable_mosaic.version = 11 : i64} {
  func.func @_conv_gemm_kernel(%arg0: i32, %arg1: i32, %arg2: i32, %arg3: memref<64x128xbf16, #tpu.memory_space<vmem>>, %arg4: memref<128x128xbf16, #tpu.memory_space<vmem>>, %arg5: memref<1x128xf32, #tpu.memory_space<vmem>>, %arg6: memref<64x128xbf16, #tpu.memory_space<vmem>>, %arg7: memref<64x128xbf16, #tpu.memory_space<vmem>>, %arg8: memref<64x128xf32, #tpu.memory_space<vmem>>) attributes {dimension_semantics = [#tpu.dimension_semantics<parallel>, #tpu.dimension_semantics<parallel>, #tpu.dimension_semantics<arbitrary>], iteration_bounds = array<i64: 2, 1, 1>, scalar_prefetch = 0 : i64, scratch_operands = 1 : i64, tpu.core_type = #tpu.core_type<tc>, window_params = [{transform_indices = @transform_0, window_bounds = array<i64: 64, 128>}, {transform_indices = @transform_1, window_bounds = array<i64: 128, 128>}, {transform_indices = @transform_2, window_bounds = array<i64: 1, 128>}, {transform_indices = @transform_3, window_bounds = array<i64: 64, 128>}, {transform_indices = @transform_4, window_bounds = array<i64: 64, 128>}]} {
    %c0_i32 = arith.constant 0 : i32
    %0 = arith.cmpi eq, %arg2, %c0_i32 : i32
    %1 = arith.extui %0 : i1 to i32
    %c0_i32_0 = arith.constant 0 : i32
    %2 = arith.cmpi ne, %1, %c0_i32_0 : i32
    scf.if %2 {
      %cst_10 = arith.constant 0.000000e+00 : f32
      %12 = vector.broadcast %cst_10 : f32 to vector<64x128xf32>
      %c0_11 = arith.constant 0 : index
      %c0_12 = arith.constant 0 : index
      %13 = vector.load %arg8[%c0_11, %c0_12] : memref<64x128xf32, #tpu.memory_space<vmem>>, vector<64x128xf32>
      tpu.vector_store %arg8[%c0_11, %c0_12], %12 {strides = array<i32>} : memref<64x128xf32, #tpu.memory_space<vmem>>, vector<64x128xf32>,
    } else {
    }
    %c0 = arith.constant 0 : index
    %c0_1 = arith.constant 0 : index
    %3 = vector.load %arg8[%c0, %c0_1] : memref<64x128xf32, #tpu.memory_space<vmem>>, vector<64x128xf32>
    %c0_2 = arith.constant 0 : index
    %c0_3 = arith.constant 0 : index
    %4 = vector.load %arg3[%c0_2, %c0_3] : memref<64x128xbf16, #tpu.memory_space<vmem>>, vector<64x128xbf16>
    %c0_4 = arith.constant 0 : index
    %c0_5 = arith.constant 0 : index
    %5 = vector.load %arg4[%c0_4, %c0_5] : memref<128x128xbf16, #tpu.memory_space<vmem>>, vector<128x128xbf16>
    %cst = arith.constant dense<0.000000e+00> : vector<64x128xf32>
    %6 = tpu.matmul %4, %5, %cst {dimension_numbers = #tpu.dot_dimension_numbers<[1], [0], [0], [1], [0, 0, 1, 1], [], []>} : vector<64x128xbf16>, vector<128x128xbf16>, vector<64x128xf32> -> vector<64x128xf32>
    %7 = arith.addf %3, %6 : vector<64x128xf32>
    %c0_6 = arith.constant 0 : index
    %c0_7 = arith.constant 0 : index
    %8 = vector.load %arg8[%c0_6, %c0_7] : memref<64x128xf32, #tpu.memory_space<vmem>>, vector<64x128xf32>
    tpu.vector_store %arg8[%c0_6, %c0_7], %7 {strides = array<i32>} : memref<64x128xf32, #tpu.memory_space<vmem>>, vector<64x128xf32>,
    %c0_i32_8 = arith.constant 0 : i32
    %9 = arith.cmpi eq, %arg2, %c0_i32_8 : i32
    %10 = arith.extui %9 : i1 to i32
    %c0_i32_9 = arith.constant 0 : i32
    %11 = arith.cmpi ne, %10, %c0_i32_9 : i32
    scf.if %11 {
      %c0_10 = arith.constant 0 : index
      %c0_11 = arith.constant 0 : index
      %12 = vector.load %arg8[%c0_10, %c0_11] : memref<64x128xf32, #tpu.memory_space<vmem>>, vector<64x128xf32>
      %c0_12 = arith.constant 0 : index
      %c0_13 = arith.constant 0 : index
      %13 = vector.load %arg5[%c0_12, %c0_13] : memref<1x128xf32, #tpu.memory_space<vmem>>, vector<1x128xf32>
      %14 = vector.broadcast %13 : vector<1x128xf32> to vector<64x128xf32>
      %15 = arith.addf %12, %14 : vector<64x128xf32>
      %cst_14 = arith.constant 0.000000e+00 : f32
      %16 = vector.broadcast %cst_14 : f32 to vector<64x128xf32>
      %17 = arith.cmpf ogt, %15, %16 : vector<64x128xf32>
      %cst_15 = arith.constant 1.000000e-01 : f32
      %18 = vector.broadcast %cst_15 : f32 to vector<64x128xf32>
      %19 = arith.mulf %18, %15 : vector<64x128xf32>
      %20 = arith.select %17, %15, %19 : vector<64x128xi1>, vector<64x128xf32>
      %c0_16 = arith.constant 0 : index
      %c0_17 = arith.constant 0 : index
      %21 = vector.load %arg6[%c0_16, %c0_17] : memref<64x128xbf16, #tpu.memory_space<vmem>>, vector<64x128xbf16>
      %22 = arith.extf %21 : vector<64x128xbf16> to vector<64x128xf32>
      %23 = arith.addf %20, %22 : vector<64x128xf32>
      %24 = arith.truncf %23 : vector<64x128xf32> to vector<64x128xbf16>
      %c0_18 = arith.constant 0 : index
      %c0_19 = arith.constant 0 : index
      %25 = vector.load %arg7[%c0_18, %c0_19] : memref<64x128xbf16, #tpu.memory_space<vmem>>, vector<64x128xbf16>
      tpu.vector_store %arg7[%c0_18, %c0_19], %24 {strides = array<i32>} : memref<64x128xbf16, #tpu.memory_space<vmem>>, vector<64x128xbf16>,
    } else {
    }
    return
  }
  func.func @transform_0(%arg0: i32, %arg1: i32, %arg2: i32) -> (i32, i32) {
    %c0_i32 = arith.constant 0 : i32
    return %arg0, %arg2 : i32, i32
  }
  func.func @transform_1(%arg0: i32, %arg1: i32, %arg2: i32) -> (i32, i32) {
    %c0_i32 = arith.constant 0 : i32
    return %arg2, %arg1 : i32, i32
  }
  func.func @transform_2(%arg0: i32, %arg1: i32, %arg2: i32) -> (i32, i32) {
    %c0_i32 = arith.constant 0 : i32
    %c0_i32_0 = arith.constant 0 : i32
    return %c0_i32, %arg1 : i32, i32
  }
  func.func @transform_3(%arg0: i32, %arg1: i32, %arg2: i32) -> (i32, i32) {
    %c0_i32 = arith.constant 0 : i32
    return %arg0, %arg1 : i32, i32
  }
  func.func @transform_4(%arg0: i32, %arg1: i32, %arg2: i32) -> (i32, i32) {
    %c0_i32 = arith.constant 0 : i32
    return %arg0, %arg1 : i32, i32
  }
}

module attributes {stable_mosaic.version = 11 : i64} {
  func.func @_conv_gemm_kernel(%arg0: i32, %arg1: i32, %arg2: i32, %arg3: memref<16x256xbf16, #tpu.memory_space<vmem>>, %arg4: memref<256x128xbf16, #tpu.memory_space<vmem>>, %arg5: memref<1x128xf32, #tpu.memory_space<vmem>>, %arg6: memref<16x128xbf16, #tpu.memory_space<vmem>>, %arg7: memref<16x128xf32, #tpu.memory_space<vmem>>) attributes {dimension_semantics = [#tpu.dimension_semantics<parallel>, #tpu.dimension_semantics<parallel>, #tpu.dimension_semantics<arbitrary>], iteration_bounds = array<i64: 2, 1, 1>, scalar_prefetch = 0 : i64, scratch_operands = 1 : i64, tpu.core_type = #tpu.core_type<tc>, window_params = [{transform_indices = @transform_0, window_bounds = array<i64: 16, 256>}, {transform_indices = @transform_1, window_bounds = array<i64: 256, 128>}, {transform_indices = @transform_2, window_bounds = array<i64: 1, 128>}, {transform_indices = @transform_3, window_bounds = array<i64: 16, 128>}]} {
    %c0_i32 = arith.constant 0 : i32
    %0 = arith.cmpi eq, %arg2, %c0_i32 : i32
    %1 = arith.extui %0 : i1 to i32
    %c0_i32_0 = arith.constant 0 : i32
    %2 = arith.cmpi ne, %1, %c0_i32_0 : i32
    scf.if %2 {
      %cst_10 = arith.constant 0.000000e+00 : f32
      %12 = vector.broadcast %cst_10 : f32 to vector<16x128xf32>
      %c0_11 = arith.constant 0 : index
      %c0_12 = arith.constant 0 : index
      %13 = vector.load %arg7[%c0_11, %c0_12] : memref<16x128xf32, #tpu.memory_space<vmem>>, vector<16x128xf32>
      tpu.vector_store %arg7[%c0_11, %c0_12], %12 {strides = array<i32>} : memref<16x128xf32, #tpu.memory_space<vmem>>, vector<16x128xf32>,
    } else {
    }
    %c0 = arith.constant 0 : index
    %c0_1 = arith.constant 0 : index
    %3 = vector.load %arg7[%c0, %c0_1] : memref<16x128xf32, #tpu.memory_space<vmem>>, vector<16x128xf32>
    %c0_2 = arith.constant 0 : index
    %c0_3 = arith.constant 0 : index
    %4 = vector.load %arg3[%c0_2, %c0_3] : memref<16x256xbf16, #tpu.memory_space<vmem>>, vector<16x256xbf16>
    %c0_4 = arith.constant 0 : index
    %c0_5 = arith.constant 0 : index
    %5 = vector.load %arg4[%c0_4, %c0_5] : memref<256x128xbf16, #tpu.memory_space<vmem>>, vector<256x128xbf16>
    %cst = arith.constant dense<0.000000e+00> : vector<16x128xf32>
    %6 = tpu.matmul %4, %5, %cst {dimension_numbers = #tpu.dot_dimension_numbers<[1], [0], [0], [1], [0, 0, 1, 1], [], []>} : vector<16x256xbf16>, vector<256x128xbf16>, vector<16x128xf32> -> vector<16x128xf32>
    %7 = arith.addf %3, %6 : vector<16x128xf32>
    %c0_6 = arith.constant 0 : index
    %c0_7 = arith.constant 0 : index
    %8 = vector.load %arg7[%c0_6, %c0_7] : memref<16x128xf32, #tpu.memory_space<vmem>>, vector<16x128xf32>
    tpu.vector_store %arg7[%c0_6, %c0_7], %7 {strides = array<i32>} : memref<16x128xf32, #tpu.memory_space<vmem>>, vector<16x128xf32>,
    %c0_i32_8 = arith.constant 0 : i32
    %9 = arith.cmpi eq, %arg2, %c0_i32_8 : i32
    %10 = arith.extui %9 : i1 to i32
    %c0_i32_9 = arith.constant 0 : i32
    %11 = arith.cmpi ne, %10, %c0_i32_9 : i32
    scf.if %11 {
      %c0_10 = arith.constant 0 : index
      %c0_11 = arith.constant 0 : index
      %12 = vector.load %arg7[%c0_10, %c0_11] : memref<16x128xf32, #tpu.memory_space<vmem>>, vector<16x128xf32>
      %c0_12 = arith.constant 0 : index
      %c0_13 = arith.constant 0 : index
      %13 = vector.load %arg5[%c0_12, %c0_13] : memref<1x128xf32, #tpu.memory_space<vmem>>, vector<1x128xf32>
      %14 = vector.broadcast %13 : vector<1x128xf32> to vector<16x128xf32>
      %15 = arith.addf %12, %14 : vector<16x128xf32>
      %cst_14 = arith.constant 0.000000e+00 : f32
      %16 = vector.broadcast %cst_14 : f32 to vector<16x128xf32>
      %17 = arith.cmpf ogt, %15, %16 : vector<16x128xf32>
      %cst_15 = arith.constant 1.000000e-01 : f32
      %18 = vector.broadcast %cst_15 : f32 to vector<16x128xf32>
      %19 = arith.mulf %18, %15 : vector<16x128xf32>
      %20 = arith.select %17, %15, %19 : vector<16x128xi1>, vector<16x128xf32>
      %21 = arith.truncf %20 : vector<16x128xf32> to vector<16x128xbf16>
      %c0_16 = arith.constant 0 : index
      %c0_17 = arith.constant 0 : index
      %22 = vector.load %arg6[%c0_16, %c0_17] : memref<16x128xbf16, #tpu.memory_space<vmem>>, vector<16x128xbf16>
      tpu.vector_store %arg6[%c0_16, %c0_17], %21 {strides = array<i32>} : memref<16x128xbf16, #tpu.memory_space<vmem>>, vector<16x128xbf16>,
    } else {
    }
    return
  }
  func.func @transform_0(%arg0: i32, %arg1: i32, %arg2: i32) -> (i32, i32) {
    %c0_i32 = arith.constant 0 : i32
    return %arg0, %arg2 : i32, i32
  }
  func.func @transform_1(%arg0: i32, %arg1: i32, %arg2: i32) -> (i32, i32) {
    %c0_i32 = arith.constant 0 : i32
    return %arg2, %arg1 : i32, i32
  }
  func.func @transform_2(%arg0: i32, %arg1: i32, %arg2: i32) -> (i32, i32) {
    %c0_i32 = arith.constant 0 : i32
    %c0_i32_0 = arith.constant 0 : i32
    return %c0_i32, %arg1 : i32, i32
  }
  func.func @transform_3(%arg0: i32, %arg1: i32, %arg2: i32) -> (i32, i32) {
    %c0_i32 = arith.constant 0 : i32
    return %arg0, %arg1 : i32, i32
  }
}

module attributes {stable_mosaic.version = 11 : i64} {
  func.func @_conv_gemm_kernel(%arg0: i32, %arg1: i32, %arg2: i32, %arg3: memref<16x128xbf16, #tpu.memory_space<vmem>>, %arg4: memref<128x128xbf16, #tpu.memory_space<vmem>>, %arg5: memref<1x128xf32, #tpu.memory_space<vmem>>, %arg6: memref<16x128xbf16, #tpu.memory_space<vmem>>, %arg7: memref<16x128xf32, #tpu.memory_space<vmem>>) attributes {dimension_semantics = [#tpu.dimension_semantics<parallel>, #tpu.dimension_semantics<parallel>, #tpu.dimension_semantics<arbitrary>], iteration_bounds = array<i64: 2, 1, 1>, scalar_prefetch = 0 : i64, scratch_operands = 1 : i64, tpu.core_type = #tpu.core_type<tc>, window_params = [{transform_indices = @transform_0, window_bounds = array<i64: 16, 128>}, {transform_indices = @transform_1, window_bounds = array<i64: 128, 128>}, {transform_indices = @transform_2, window_bounds = array<i64: 1, 128>}, {transform_indices = @transform_3, window_bounds = array<i64: 16, 128>}]} {
    %c0_i32 = arith.constant 0 : i32
    %0 = arith.cmpi eq, %arg2, %c0_i32 : i32
    %1 = arith.extui %0 : i1 to i32
    %c0_i32_0 = arith.constant 0 : i32
    %2 = arith.cmpi ne, %1, %c0_i32_0 : i32
    scf.if %2 {
      %cst_10 = arith.constant 0.000000e+00 : f32
      %12 = vector.broadcast %cst_10 : f32 to vector<16x128xf32>
      %c0_11 = arith.constant 0 : index
      %c0_12 = arith.constant 0 : index
      %13 = vector.load %arg7[%c0_11, %c0_12] : memref<16x128xf32, #tpu.memory_space<vmem>>, vector<16x128xf32>
      tpu.vector_store %arg7[%c0_11, %c0_12], %12 {strides = array<i32>} : memref<16x128xf32, #tpu.memory_space<vmem>>, vector<16x128xf32>,
    } else {
    }
    %c0 = arith.constant 0 : index
    %c0_1 = arith.constant 0 : index
    %3 = vector.load %arg7[%c0, %c0_1] : memref<16x128xf32, #tpu.memory_space<vmem>>, vector<16x128xf32>
    %c0_2 = arith.constant 0 : index
    %c0_3 = arith.constant 0 : index
    %4 = vector.load %arg3[%c0_2, %c0_3] : memref<16x128xbf16, #tpu.memory_space<vmem>>, vector<16x128xbf16>
    %c0_4 = arith.constant 0 : index
    %c0_5 = arith.constant 0 : index
    %5 = vector.load %arg4[%c0_4, %c0_5] : memref<128x128xbf16, #tpu.memory_space<vmem>>, vector<128x128xbf16>
    %cst = arith.constant dense<0.000000e+00> : vector<16x128xf32>
    %6 = tpu.matmul %4, %5, %cst {dimension_numbers = #tpu.dot_dimension_numbers<[1], [0], [0], [1], [0, 0, 1, 1], [], []>} : vector<16x128xbf16>, vector<128x128xbf16>, vector<16x128xf32> -> vector<16x128xf32>
    %7 = arith.addf %3, %6 : vector<16x128xf32>
    %c0_6 = arith.constant 0 : index
    %c0_7 = arith.constant 0 : index
    %8 = vector.load %arg7[%c0_6, %c0_7] : memref<16x128xf32, #tpu.memory_space<vmem>>, vector<16x128xf32>
    tpu.vector_store %arg7[%c0_6, %c0_7], %7 {strides = array<i32>} : memref<16x128xf32, #tpu.memory_space<vmem>>, vector<16x128xf32>,
    %c0_i32_8 = arith.constant 0 : i32
    %9 = arith.cmpi eq, %arg2, %c0_i32_8 : i32
    %10 = arith.extui %9 : i1 to i32
    %c0_i32_9 = arith.constant 0 : i32
    %11 = arith.cmpi ne, %10, %c0_i32_9 : i32
    scf.if %11 {
      %c0_10 = arith.constant 0 : index
      %c0_11 = arith.constant 0 : index
      %12 = vector.load %arg7[%c0_10, %c0_11] : memref<16x128xf32, #tpu.memory_space<vmem>>, vector<16x128xf32>
      %c0_12 = arith.constant 0 : index
      %c0_13 = arith.constant 0 : index
      %13 = vector.load %arg5[%c0_12, %c0_13] : memref<1x128xf32, #tpu.memory_space<vmem>>, vector<1x128xf32>
      %14 = vector.broadcast %13 : vector<1x128xf32> to vector<16x128xf32>
      %15 = arith.addf %12, %14 : vector<16x128xf32>
      %cst_14 = arith.constant 0.000000e+00 : f32
      %16 = vector.broadcast %cst_14 : f32 to vector<16x128xf32>
      %17 = arith.cmpf ogt, %15, %16 : vector<16x128xf32>
      %cst_15 = arith.constant 1.000000e-01 : f32
      %18 = vector.broadcast %cst_15 : f32 to vector<16x128xf32>
      %19 = arith.mulf %18, %15 : vector<16x128xf32>
      %20 = arith.select %17, %15, %19 : vector<16x128xi1>, vector<16x128xf32>
      %21 = arith.truncf %20 : vector<16x128xf32> to vector<16x128xbf16>
      %c0_16 = arith.constant 0 : index
      %c0_17 = arith.constant 0 : index
      %22 = vector.load %arg6[%c0_16, %c0_17] : memref<16x128xbf16, #tpu.memory_space<vmem>>, vector<16x128xbf16>
      tpu.vector_store %arg6[%c0_16, %c0_17], %21 {strides = array<i32>} : memref<16x128xbf16, #tpu.memory_space<vmem>>, vector<16x128xbf16>,
    } else {
    }
    return
  }
  func.func @transform_0(%arg0: i32, %arg1: i32, %arg2: i32) -> (i32, i32) {
    %c0_i32 = arith.constant 0 : i32
    return %arg0, %arg2 : i32, i32
  }
  func.func @transform_1(%arg0: i32, %arg1: i32, %arg2: i32) -> (i32, i32) {
    %c0_i32 = arith.constant 0 : i32
    return %arg2, %arg1 : i32, i32
  }
  func.func @transform_2(%arg0: i32, %arg1: i32, %arg2: i32) -> (i32, i32) {
    %c0_i32 = arith.constant 0 : i32
    %c0_i32_0 = arith.constant 0 : i32
    return %c0_i32, %arg1 : i32, i32
  }
  func.func @transform_3(%arg0: i32, %arg1: i32, %arg2: i32) -> (i32, i32) {
    %c0_i32 = arith.constant 0 : i32
    return %arg0, %arg1 : i32, i32
  }
}

module attributes {stable_mosaic.version = 11 : i64} {
  func.func @_conv_gemm_kernel(%arg0: i32, %arg1: i32, %arg2: i32, %arg3: memref<64x256xbf16, #tpu.memory_space<vmem>>, %arg4: memref<256x128xbf16, #tpu.memory_space<vmem>>, %arg5: memref<1x128xf32, #tpu.memory_space<vmem>>, %arg6: memref<64x128xbf16, #tpu.memory_space<vmem>>, %arg7: memref<64x128xf32, #tpu.memory_space<vmem>>) attributes {dimension_semantics = [#tpu.dimension_semantics<parallel>, #tpu.dimension_semantics<parallel>, #tpu.dimension_semantics<arbitrary>], iteration_bounds = array<i64: 2, 1, 1>, scalar_prefetch = 0 : i64, scratch_operands = 1 : i64, tpu.core_type = #tpu.core_type<tc>, window_params = [{transform_indices = @transform_0, window_bounds = array<i64: 64, 256>}, {transform_indices = @transform_1, window_bounds = array<i64: 256, 128>}, {transform_indices = @transform_2, window_bounds = array<i64: 1, 128>}, {transform_indices = @transform_3, window_bounds = array<i64: 64, 128>}]} {
    %c0_i32 = arith.constant 0 : i32
    %0 = arith.cmpi eq, %arg2, %c0_i32 : i32
    %1 = arith.extui %0 : i1 to i32
    %c0_i32_0 = arith.constant 0 : i32
    %2 = arith.cmpi ne, %1, %c0_i32_0 : i32
    scf.if %2 {
      %cst_10 = arith.constant 0.000000e+00 : f32
      %12 = vector.broadcast %cst_10 : f32 to vector<64x128xf32>
      %c0_11 = arith.constant 0 : index
      %c0_12 = arith.constant 0 : index
      %13 = vector.load %arg7[%c0_11, %c0_12] : memref<64x128xf32, #tpu.memory_space<vmem>>, vector<64x128xf32>
      tpu.vector_store %arg7[%c0_11, %c0_12], %12 {strides = array<i32>} : memref<64x128xf32, #tpu.memory_space<vmem>>, vector<64x128xf32>,
    } else {
    }
    %c0 = arith.constant 0 : index
    %c0_1 = arith.constant 0 : index
    %3 = vector.load %arg7[%c0, %c0_1] : memref<64x128xf32, #tpu.memory_space<vmem>>, vector<64x128xf32>
    %c0_2 = arith.constant 0 : index
    %c0_3 = arith.constant 0 : index
    %4 = vector.load %arg3[%c0_2, %c0_3] : memref<64x256xbf16, #tpu.memory_space<vmem>>, vector<64x256xbf16>
    %c0_4 = arith.constant 0 : index
    %c0_5 = arith.constant 0 : index
    %5 = vector.load %arg4[%c0_4, %c0_5] : memref<256x128xbf16, #tpu.memory_space<vmem>>, vector<256x128xbf16>
    %cst = arith.constant dense<0.000000e+00> : vector<64x128xf32>
    %6 = tpu.matmul %4, %5, %cst {dimension_numbers = #tpu.dot_dimension_numbers<[1], [0], [0], [1], [0, 0, 1, 1], [], []>} : vector<64x256xbf16>, vector<256x128xbf16>, vector<64x128xf32> -> vector<64x128xf32>
    %7 = arith.addf %3, %6 : vector<64x128xf32>
    %c0_6 = arith.constant 0 : index
    %c0_7 = arith.constant 0 : index
    %8 = vector.load %arg7[%c0_6, %c0_7] : memref<64x128xf32, #tpu.memory_space<vmem>>, vector<64x128xf32>
    tpu.vector_store %arg7[%c0_6, %c0_7], %7 {strides = array<i32>} : memref<64x128xf32, #tpu.memory_space<vmem>>, vector<64x128xf32>,
    %c0_i32_8 = arith.constant 0 : i32
    %9 = arith.cmpi eq, %arg2, %c0_i32_8 : i32
    %10 = arith.extui %9 : i1 to i32
    %c0_i32_9 = arith.constant 0 : i32
    %11 = arith.cmpi ne, %10, %c0_i32_9 : i32
    scf.if %11 {
      %c0_10 = arith.constant 0 : index
      %c0_11 = arith.constant 0 : index
      %12 = vector.load %arg7[%c0_10, %c0_11] : memref<64x128xf32, #tpu.memory_space<vmem>>, vector<64x128xf32>
      %c0_12 = arith.constant 0 : index
      %c0_13 = arith.constant 0 : index
      %13 = vector.load %arg5[%c0_12, %c0_13] : memref<1x128xf32, #tpu.memory_space<vmem>>, vector<1x128xf32>
      %14 = vector.broadcast %13 : vector<1x128xf32> to vector<64x128xf32>
      %15 = arith.addf %12, %14 : vector<64x128xf32>
      %cst_14 = arith.constant 0.000000e+00 : f32
      %16 = vector.broadcast %cst_14 : f32 to vector<64x128xf32>
      %17 = arith.cmpf ogt, %15, %16 : vector<64x128xf32>
      %cst_15 = arith.constant 1.000000e-01 : f32
      %18 = vector.broadcast %cst_15 : f32 to vector<64x128xf32>
      %19 = arith.mulf %18, %15 : vector<64x128xf32>
      %20 = arith.select %17, %15, %19 : vector<64x128xi1>, vector<64x128xf32>
      %21 = arith.truncf %20 : vector<64x128xf32> to vector<64x128xbf16>
      %c0_16 = arith.constant 0 : index
      %c0_17 = arith.constant 0 : index
      %22 = vector.load %arg6[%c0_16, %c0_17] : memref<64x128xbf16, #tpu.memory_space<vmem>>, vector<64x128xbf16>
      tpu.vector_store %arg6[%c0_16, %c0_17], %21 {strides = array<i32>} : memref<64x128xbf16, #tpu.memory_space<vmem>>, vector<64x128xbf16>,
    } else {
    }
    return
  }
  func.func @transform_0(%arg0: i32, %arg1: i32, %arg2: i32) -> (i32, i32) {
    %c0_i32 = arith.constant 0 : i32
    return %arg0, %arg2 : i32, i32
  }
  func.func @transform_1(%arg0: i32, %arg1: i32, %arg2: i32) -> (i32, i32) {
    %c0_i32 = arith.constant 0 : i32
    return %arg2, %arg1 : i32, i32
  }
  func.func @transform_2(%arg0: i32, %arg1: i32, %arg2: i32) -> (i32, i32) {
    %c0_i32 = arith.constant 0 : i32
    %c0_i32_0 = arith.constant 0 : i32
    return %c0_i32, %arg1 : i32, i32
  }
  func.func @transform_3(%arg0: i32, %arg1: i32, %arg2: i32) -> (i32, i32) {
    %c0_i32 = arith.constant 0 : i32
    return %arg0, %arg1 : i32, i32
  }
}

module attributes {stable_mosaic.version = 11 : i64} {
  func.func @_conv_gemm_kernel(%arg0: i32, %arg1: i32, %arg2: i32, %arg3: memref<64x128xbf16, #tpu.memory_space<vmem>>, %arg4: memref<128x128xbf16, #tpu.memory_space<vmem>>, %arg5: memref<1x128xf32, #tpu.memory_space<vmem>>, %arg6: memref<64x128xbf16, #tpu.memory_space<vmem>>, %arg7: memref<64x128xf32, #tpu.memory_space<vmem>>) attributes {dimension_semantics = [#tpu.dimension_semantics<parallel>, #tpu.dimension_semantics<parallel>, #tpu.dimension_semantics<arbitrary>], iteration_bounds = array<i64: 2, 1, 1>, scalar_prefetch = 0 : i64, scratch_operands = 1 : i64, tpu.core_type = #tpu.core_type<tc>, window_params = [{transform_indices = @transform_0, window_bounds = array<i64: 64, 128>}, {transform_indices = @transform_1, window_bounds = array<i64: 128, 128>}, {transform_indices = @transform_2, window_bounds = array<i64: 1, 128>}, {transform_indices = @transform_3, window_bounds = array<i64: 64, 128>}]} {
    %c0_i32 = arith.constant 0 : i32
    %0 = arith.cmpi eq, %arg2, %c0_i32 : i32
    %1 = arith.extui %0 : i1 to i32
    %c0_i32_0 = arith.constant 0 : i32
    %2 = arith.cmpi ne, %1, %c0_i32_0 : i32
    scf.if %2 {
      %cst_10 = arith.constant 0.000000e+00 : f32
      %12 = vector.broadcast %cst_10 : f32 to vector<64x128xf32>
      %c0_11 = arith.constant 0 : index
      %c0_12 = arith.constant 0 : index
      %13 = vector.load %arg7[%c0_11, %c0_12] : memref<64x128xf32, #tpu.memory_space<vmem>>, vector<64x128xf32>
      tpu.vector_store %arg7[%c0_11, %c0_12], %12 {strides = array<i32>} : memref<64x128xf32, #tpu.memory_space<vmem>>, vector<64x128xf32>,
    } else {
    }
    %c0 = arith.constant 0 : index
    %c0_1 = arith.constant 0 : index
    %3 = vector.load %arg7[%c0, %c0_1] : memref<64x128xf32, #tpu.memory_space<vmem>>, vector<64x128xf32>
    %c0_2 = arith.constant 0 : index
    %c0_3 = arith.constant 0 : index
    %4 = vector.load %arg3[%c0_2, %c0_3] : memref<64x128xbf16, #tpu.memory_space<vmem>>, vector<64x128xbf16>
    %c0_4 = arith.constant 0 : index
    %c0_5 = arith.constant 0 : index
    %5 = vector.load %arg4[%c0_4, %c0_5] : memref<128x128xbf16, #tpu.memory_space<vmem>>, vector<128x128xbf16>
    %cst = arith.constant dense<0.000000e+00> : vector<64x128xf32>
    %6 = tpu.matmul %4, %5, %cst {dimension_numbers = #tpu.dot_dimension_numbers<[1], [0], [0], [1], [0, 0, 1, 1], [], []>} : vector<64x128xbf16>, vector<128x128xbf16>, vector<64x128xf32> -> vector<64x128xf32>
    %7 = arith.addf %3, %6 : vector<64x128xf32>
    %c0_6 = arith.constant 0 : index
    %c0_7 = arith.constant 0 : index
    %8 = vector.load %arg7[%c0_6, %c0_7] : memref<64x128xf32, #tpu.memory_space<vmem>>, vector<64x128xf32>
    tpu.vector_store %arg7[%c0_6, %c0_7], %7 {strides = array<i32>} : memref<64x128xf32, #tpu.memory_space<vmem>>, vector<64x128xf32>,
    %c0_i32_8 = arith.constant 0 : i32
    %9 = arith.cmpi eq, %arg2, %c0_i32_8 : i32
    %10 = arith.extui %9 : i1 to i32
    %c0_i32_9 = arith.constant 0 : i32
    %11 = arith.cmpi ne, %10, %c0_i32_9 : i32
    scf.if %11 {
      %c0_10 = arith.constant 0 : index
      %c0_11 = arith.constant 0 : index
      %12 = vector.load %arg7[%c0_10, %c0_11] : memref<64x128xf32, #tpu.memory_space<vmem>>, vector<64x128xf32>
      %c0_12 = arith.constant 0 : index
      %c0_13 = arith.constant 0 : index
      %13 = vector.load %arg5[%c0_12, %c0_13] : memref<1x128xf32, #tpu.memory_space<vmem>>, vector<1x128xf32>
      %14 = vector.broadcast %13 : vector<1x128xf32> to vector<64x128xf32>
      %15 = arith.addf %12, %14 : vector<64x128xf32>
      %16 = arith.truncf %15 : vector<64x128xf32> to vector<64x128xbf16>
      %c0_14 = arith.constant 0 : index
      %c0_15 = arith.constant 0 : index
      %17 = vector.load %arg6[%c0_14, %c0_15] : memref<64x128xbf16, #tpu.memory_space<vmem>>, vector<64x128xbf16>
      tpu.vector_store %arg6[%c0_14, %c0_15], %16 {strides = array<i32>} : memref<64x128xbf16, #tpu.memory_space<vmem>>, vector<64x128xbf16>,
    } else {
    }
    return
  }
  func.func @transform_0(%arg0: i32, %arg1: i32, %arg2: i32) -> (i32, i32) {
    %c0_i32 = arith.constant 0 : i32
    return %arg0, %arg2 : i32, i32
  }
  func.func @transform_1(%arg0: i32, %arg1: i32, %arg2: i32) -> (i32, i32) {
    %c0_i32 = arith.constant 0 : i32
    return %arg2, %arg1 : i32, i32
  }
  func.func @transform_2(%arg0: i32, %arg1: i32, %arg2: i32) -> (i32, i32) {
    %c0_i32 = arith.constant 0 : i32
    %c0_i32_0 = arith.constant 0 : i32
    return %c0_i32, %arg1 : i32, i32
  }
  func.func @transform_3(%arg0: i32, %arg1: i32, %arg2: i32) -> (i32, i32) {
    %c0_i32 = arith.constant 0 : i32
    return %arg0, %arg1 : i32, i32
  }
}

module attributes {stable_mosaic.version = 11 : i64} {
  func.func @_yolo_kernel(%arg0: i32, %arg1: memref<1x7x192xbf16, #tpu.memory_space<vmem>>, %arg2: memref<4x192xf32, #tpu.memory_space<vmem>>, %arg3: memref<1x7x192xf32, #tpu.memory_space<vmem>>) attributes {dimension_semantics = [#tpu.dimension_semantics<parallel>], iteration_bounds = array<i64: 2>, scalar_prefetch = 0 : i64, scratch_operands = 0 : i64, tpu.core_type = #tpu.core_type<tc>, window_params = [{transform_indices = @transform_0, window_bounds = array<i64: 1, 7, 192>}, {pipeline_mode = #tpu.pipeline_mode<synchronous>, transform_indices = @transform_1, window_bounds = array<i64: 4, 192>}, {transform_indices = @transform_2, window_bounds = array<i64: 1, 7, 192>}]} {
    %c0 = arith.constant 0 : index
    %c0_0 = arith.constant 0 : index
    %c0_1 = arith.constant 0 : index
    %0 = vector.load %arg1[%c0, %c0_0, %c0_1] : memref<1x7x192xbf16, #tpu.memory_space<vmem>>, vector<1x7x192xbf16>
    %1 = vector.shape_cast %0 : vector<1x7x192xbf16> to vector<7x192xbf16>
    %2 = arith.extf %1 : vector<7x192xbf16> to vector<7x192xf32>
    %c0_2 = arith.constant 0 : index
    %c0_3 = arith.constant 0 : index
    %3 = vector.load %arg2[%c0_2, %c0_3] : memref<4x192xf32, #tpu.memory_space<vmem>>, vector<4x192xf32>
    %4 = vector.extract_strided_slice %2 {offsets = [0, 0], sizes = [2, 192], strides = [1, 1]} : vector<7x192xf32> to vector<2x192xf32>
    %5 = arith.negf %4 : vector<2x192xf32>
    %6 = math.exp %5 : vector<2x192xf32>
    %cst = arith.constant 1.000000e+00 : f32
    %7 = vector.broadcast %cst : f32 to vector<2x192xf32>
    %8 = arith.addf %7, %6 : vector<2x192xf32>
    %9 = arith.divf %7, %8 : vector<2x192xf32>
    %10 = vector.extract_strided_slice %3 {offsets = [0, 0], sizes = [2, 192], strides = [1, 1]} : vector<4x192xf32> to vector<2x192xf32>
    %11 = arith.addf %9, %10 : vector<2x192xf32>
    %12 = vector.extract_strided_slice %2 {offsets = [2, 0], sizes = [2, 192], strides = [1, 1]} : vector<7x192xf32> to vector<2x192xf32>
    %13 = math.exp %12 : vector<2x192xf32>
    %14 = vector.extract_strided_slice %3 {offsets = [2, 0], sizes = [2, 192], strides = [1, 1]} : vector<4x192xf32> to vector<2x192xf32>
    %15 = arith.mulf %13, %14 : vector<2x192xf32>
    %16 = vector.extract_strided_slice %2 {offsets = [4, 0], sizes = [3, 192], strides = [1, 1]} : vector<7x192xf32> to vector<3x192xf32>
    %17 = arith.negf %16 : vector<3x192xf32>
    %18 = math.exp %17 : vector<3x192xf32>
    %cst_4 = arith.constant 1.000000e+00 : f32
    %19 = vector.broadcast %cst_4 : f32 to vector<3x192xf32>
    %20 = arith.addf %19, %18 : vector<3x192xf32>
    %21 = arith.divf %19, %20 : vector<3x192xf32>
    %22 = tpu.concatenate %11, %15 in 0 : vector<2x192xf32>, vector<2x192xf32> -> vector<4x192xf32>
    %cst_5 = arith.constant 2.000000e+00 : f32
    %23 = vector.broadcast %cst_5 : f32 to vector<4x192xf32>
    %24 = arith.mulf %22, %23 : vector<4x192xf32>
    %25 = tpu.concatenate %24, %21 in 0 : vector<4x192xf32>, vector<3x192xf32> -> vector<7x192xf32>
    %c0_6 = arith.constant 0 : index
    %c0_7 = arith.constant 0 : index
    %c0_8 = arith.constant 0 : index
    %26 = vector.load %arg3[%c0_6, %c0_7, %c0_8] : memref<1x7x192xf32, #tpu.memory_space<vmem>>, vector<1x7x192xf32>
    %27 = vector.shape_cast %26 : vector<1x7x192xf32> to vector<7x192xf32>
    %28 = vector.shape_cast %25 : vector<7x192xf32> to vector<1x7x192xf32>
    tpu.vector_store %arg3[%c0_6, %c0_7, %c0_8], %28 {strides = array<i32>} : memref<1x7x192xf32, #tpu.memory_space<vmem>>, vector<1x7x192xf32>,
    return
  }
  func.func @transform_0(%arg0: i32) -> (i32, i32, i32) {
    %c0_i32 = arith.constant 0 : i32
    %c0_i32_0 = arith.constant 0 : i32
    %c0_i32_1 = arith.constant 0 : i32
    return %arg0, %c0_i32, %c0_i32_0 : i32, i32, i32
  }
  func.func @transform_1(%arg0: i32) -> (i32, i32) {
    %c0_i32 = arith.constant 0 : i32
    %c0_i32_0 = arith.constant 0 : i32
    %c0_i32_1 = arith.constant 0 : i32
    return %c0_i32, %c0_i32_0 : i32, i32
  }
  func.func @transform_2(%arg0: i32) -> (i32, i32, i32) {
    %c0_i32 = arith.constant 0 : i32
    %c0_i32_0 = arith.constant 0 : i32
    %c0_i32_1 = arith.constant 0 : i32
    return %arg0, %c0_i32, %c0_i32_0 : i32, i32, i32
  }
}

module attributes {stable_mosaic.version = 11 : i64} {
  func.func @_conv_gemm_kernel(%arg0: i32, %arg1: i32, %arg2: i32, %arg3: memref<16x128xbf16, #tpu.memory_space<vmem>>, %arg4: memref<128x128xbf16, #tpu.memory_space<vmem>>, %arg5: memref<1x128xf32, #tpu.memory_space<vmem>>, %arg6: memref<16x128xbf16, #tpu.memory_space<vmem>>, %arg7: memref<16x128xf32, #tpu.memory_space<vmem>>) attributes {dimension_semantics = [#tpu.dimension_semantics<parallel>, #tpu.dimension_semantics<parallel>, #tpu.dimension_semantics<arbitrary>], iteration_bounds = array<i64: 2, 1, 1>, scalar_prefetch = 0 : i64, scratch_operands = 1 : i64, tpu.core_type = #tpu.core_type<tc>, window_params = [{transform_indices = @transform_0, window_bounds = array<i64: 16, 128>}, {transform_indices = @transform_1, window_bounds = array<i64: 128, 128>}, {transform_indices = @transform_2, window_bounds = array<i64: 1, 128>}, {transform_indices = @transform_3, window_bounds = array<i64: 16, 128>}]} {
    %c0_i32 = arith.constant 0 : i32
    %0 = arith.cmpi eq, %arg2, %c0_i32 : i32
    %1 = arith.extui %0 : i1 to i32
    %c0_i32_0 = arith.constant 0 : i32
    %2 = arith.cmpi ne, %1, %c0_i32_0 : i32
    scf.if %2 {
      %cst_10 = arith.constant 0.000000e+00 : f32
      %12 = vector.broadcast %cst_10 : f32 to vector<16x128xf32>
      %c0_11 = arith.constant 0 : index
      %c0_12 = arith.constant 0 : index
      %13 = vector.load %arg7[%c0_11, %c0_12] : memref<16x128xf32, #tpu.memory_space<vmem>>, vector<16x128xf32>
      tpu.vector_store %arg7[%c0_11, %c0_12], %12 {strides = array<i32>} : memref<16x128xf32, #tpu.memory_space<vmem>>, vector<16x128xf32>,
    } else {
    }
    %c0 = arith.constant 0 : index
    %c0_1 = arith.constant 0 : index
    %3 = vector.load %arg7[%c0, %c0_1] : memref<16x128xf32, #tpu.memory_space<vmem>>, vector<16x128xf32>
    %c0_2 = arith.constant 0 : index
    %c0_3 = arith.constant 0 : index
    %4 = vector.load %arg3[%c0_2, %c0_3] : memref<16x128xbf16, #tpu.memory_space<vmem>>, vector<16x128xbf16>
    %c0_4 = arith.constant 0 : index
    %c0_5 = arith.constant 0 : index
    %5 = vector.load %arg4[%c0_4, %c0_5] : memref<128x128xbf16, #tpu.memory_space<vmem>>, vector<128x128xbf16>
    %cst = arith.constant dense<0.000000e+00> : vector<16x128xf32>
    %6 = tpu.matmul %4, %5, %cst {dimension_numbers = #tpu.dot_dimension_numbers<[1], [0], [0], [1], [0, 0, 1, 1], [], []>} : vector<16x128xbf16>, vector<128x128xbf16>, vector<16x128xf32> -> vector<16x128xf32>
    %7 = arith.addf %3, %6 : vector<16x128xf32>
    %c0_6 = arith.constant 0 : index
    %c0_7 = arith.constant 0 : index
    %8 = vector.load %arg7[%c0_6, %c0_7] : memref<16x128xf32, #tpu.memory_space<vmem>>, vector<16x128xf32>
    tpu.vector_store %arg7[%c0_6, %c0_7], %7 {strides = array<i32>} : memref<16x128xf32, #tpu.memory_space<vmem>>, vector<16x128xf32>,
    %c0_i32_8 = arith.constant 0 : i32
    %9 = arith.cmpi eq, %arg2, %c0_i32_8 : i32
    %10 = arith.extui %9 : i1 to i32
    %c0_i32_9 = arith.constant 0 : i32
    %11 = arith.cmpi ne, %10, %c0_i32_9 : i32
    scf.if %11 {
      %c0_10 = arith.constant 0 : index
      %c0_11 = arith.constant 0 : index
      %12 = vector.load %arg7[%c0_10, %c0_11] : memref<16x128xf32, #tpu.memory_space<vmem>>, vector<16x128xf32>
      %c0_12 = arith.constant 0 : index
      %c0_13 = arith.constant 0 : index
      %13 = vector.load %arg5[%c0_12, %c0_13] : memref<1x128xf32, #tpu.memory_space<vmem>>, vector<1x128xf32>
      %14 = vector.broadcast %13 : vector<1x128xf32> to vector<16x128xf32>
      %15 = arith.addf %12, %14 : vector<16x128xf32>
      %16 = arith.truncf %15 : vector<16x128xf32> to vector<16x128xbf16>
      %c0_14 = arith.constant 0 : index
      %c0_15 = arith.constant 0 : index
      %17 = vector.load %arg6[%c0_14, %c0_15] : memref<16x128xbf16, #tpu.memory_space<vmem>>, vector<16x128xbf16>
      tpu.vector_store %arg6[%c0_14, %c0_15], %16 {strides = array<i32>} : memref<16x128xbf16, #tpu.memory_space<vmem>>, vector<16x128xbf16>,
    } else {
    }
    return
  }
  func.func @transform_0(%arg0: i32, %arg1: i32, %arg2: i32) -> (i32, i32) {
    %c0_i32 = arith.constant 0 : i32
    return %arg0, %arg2 : i32, i32
  }
  func.func @transform_1(%arg0: i32, %arg1: i32, %arg2: i32) -> (i32, i32) {
    %c0_i32 = arith.constant 0 : i32
    return %arg2, %arg1 : i32, i32
  }
  func.func @transform_2(%arg0: i32, %arg1: i32, %arg2: i32) -> (i32, i32) {
    %c0_i32 = arith.constant 0 : i32
    %c0_i32_0 = arith.constant 0 : i32
    return %c0_i32, %arg1 : i32, i32
  }
  func.func @transform_3(%arg0: i32, %arg1: i32, %arg2: i32) -> (i32, i32) {
    %c0_i32 = arith.constant 0 : i32
    return %arg0, %arg1 : i32, i32
  }
}

module attributes {stable_mosaic.version = 11 : i64} {
  func.func @_yolo_kernel(%arg0: i32, %arg1: memref<1x7x48xbf16, #tpu.memory_space<vmem>>, %arg2: memref<4x48xf32, #tpu.memory_space<vmem>>, %arg3: memref<1x7x48xf32, #tpu.memory_space<vmem>>) attributes {dimension_semantics = [#tpu.dimension_semantics<parallel>], iteration_bounds = array<i64: 2>, scalar_prefetch = 0 : i64, scratch_operands = 0 : i64, tpu.core_type = #tpu.core_type<tc>, window_params = [{transform_indices = @transform_0, window_bounds = array<i64: 1, 7, 48>}, {pipeline_mode = #tpu.pipeline_mode<synchronous>, transform_indices = @transform_1, window_bounds = array<i64: 4, 48>}, {transform_indices = @transform_2, window_bounds = array<i64: 1, 7, 48>}]} {
    %c0 = arith.constant 0 : index
    %c0_0 = arith.constant 0 : index
    %c0_1 = arith.constant 0 : index
    %0 = vector.load %arg1[%c0, %c0_0, %c0_1] : memref<1x7x48xbf16, #tpu.memory_space<vmem>>, vector<1x7x48xbf16>
    %1 = vector.shape_cast %0 : vector<1x7x48xbf16> to vector<7x48xbf16>
    %2 = arith.extf %1 : vector<7x48xbf16> to vector<7x48xf32>
    %c0_2 = arith.constant 0 : index
    %c0_3 = arith.constant 0 : index
    %3 = vector.load %arg2[%c0_2, %c0_3] : memref<4x48xf32, #tpu.memory_space<vmem>>, vector<4x48xf32>
    %4 = vector.extract_strided_slice %2 {offsets = [0, 0], sizes = [2, 48], strides = [1, 1]} : vector<7x48xf32> to vector<2x48xf32>
    %5 = arith.negf %4 : vector<2x48xf32>
    %6 = math.exp %5 : vector<2x48xf32>
    %cst = arith.constant 1.000000e+00 : f32
    %7 = vector.broadcast %cst : f32 to vector<2x48xf32>
    %8 = arith.addf %7, %6 : vector<2x48xf32>
    %9 = arith.divf %7, %8 : vector<2x48xf32>
    %10 = vector.extract_strided_slice %3 {offsets = [0, 0], sizes = [2, 48], strides = [1, 1]} : vector<4x48xf32> to vector<2x48xf32>
    %11 = arith.addf %9, %10 : vector<2x48xf32>
    %12 = vector.extract_strided_slice %2 {offsets = [2, 0], sizes = [2, 48], strides = [1, 1]} : vector<7x48xf32> to vector<2x48xf32>
    %13 = math.exp %12 : vector<2x48xf32>
    %14 = vector.extract_strided_slice %3 {offsets = [2, 0], sizes = [2, 48], strides = [1, 1]} : vector<4x48xf32> to vector<2x48xf32>
    %15 = arith.mulf %13, %14 : vector<2x48xf32>
    %16 = vector.extract_strided_slice %2 {offsets = [4, 0], sizes = [3, 48], strides = [1, 1]} : vector<7x48xf32> to vector<3x48xf32>
    %17 = arith.negf %16 : vector<3x48xf32>
    %18 = math.exp %17 : vector<3x48xf32>
    %cst_4 = arith.constant 1.000000e+00 : f32
    %19 = vector.broadcast %cst_4 : f32 to vector<3x48xf32>
    %20 = arith.addf %19, %18 : vector<3x48xf32>
    %21 = arith.divf %19, %20 : vector<3x48xf32>
    %22 = tpu.concatenate %11, %15 in 0 : vector<2x48xf32>, vector<2x48xf32> -> vector<4x48xf32>
    %cst_5 = arith.constant 4.000000e+00 : f32
    %23 = vector.broadcast %cst_5 : f32 to vector<4x48xf32>
    %24 = arith.mulf %22, %23 : vector<4x48xf32>
    %25 = tpu.concatenate %24, %21 in 0 : vector<4x48xf32>, vector<3x48xf32> -> vector<7x48xf32>
    %c0_6 = arith.constant 0 : index
    %c0_7 = arith.constant 0 : index
    %c0_8 = arith.constant 0 : index
    %26 = vector.load %arg3[%c0_6, %c0_7, %c0_8] : memref<1x7x48xf32, #tpu.memory_space<vmem>>, vector<1x7x48xf32>
    %27 = vector.shape_cast %26 : vector<1x7x48xf32> to vector<7x48xf32>
    %28 = vector.shape_cast %25 : vector<7x48xf32> to vector<1x7x48xf32>
    tpu.vector_store %arg3[%c0_6, %c0_7, %c0_8], %28 {strides = array<i32>} : memref<1x7x48xf32, #tpu.memory_space<vmem>>, vector<1x7x48xf32>,
    return
  }
  func.func @transform_0(%arg0: i32) -> (i32, i32, i32) {
    %c0_i32 = arith.constant 0 : i32
    %c0_i32_0 = arith.constant 0 : i32
    %c0_i32_1 = arith.constant 0 : i32
    return %arg0, %c0_i32, %c0_i32_0 : i32, i32, i32
  }
  func.func @transform_1(%arg0: i32) -> (i32, i32) {
    %c0_i32 = arith.constant 0 : i32
    %c0_i32_0 = arith.constant 0 : i32
    %c0_i32_1 = arith.constant 0 : i32
    return %c0_i32, %c0_i32_0 : i32, i32
  }
  func.func @transform_2(%arg0: i32) -> (i32, i32, i32) {
    %c0_i32 = arith.constant 0 : i32
    %c0_i32_0 = arith.constant 0 : i32
    %c0_i32_1 = arith.constant 0 : i32
    return %arg0, %c0_i32, %c0_i32_0 : i32, i32, i32
  }
}

</mosaic_0001>

<llo_original>
// kernel: _lambda_.11
$region0: #{_lambda_.11}
  #allocation0 [shape = 'u32[]', space=smem, size = 0x4, offset = 0x4, fixed_abs, tag = 'smem constant byte address 0x4 - core index']
  #allocation1 [shape = 'u32[72,128]{1,0:T(1,128)}', space=vmem, size = 0x9000, scoped, tag = 'internal scratch']
  #allocation2 [shape = 'f32[256,128]{1,0:T(8,128)}', space=vmem, size = 0x20000, scoped, tag = 'scratch operand']
  %s0 = inlined_call_operand.vmem [shape: bf16[512,128], index: 0, kind: input, shape index: {}]
  %s1 = inlined_call_operand.vmem [shape: bf16[128,128], index: 1, kind: input, shape index: {}]
  %s2 = inlined_call_operand.vmem [shape: f32[1,128], index: 2, kind: input, shape index: {}]
  %s3 = inlined_call_operand.vmem [shape: bf16[512,128], index: 3, kind: output, shape index: {}]
  %s4 = sld [smem:[#allocation0]]
  $region53: #{_lambda_.11} parent=0
    _
  %s6 = ssub.s32 1, %s4
  %s7 = scalar_select 0, %s6, %s4
  loop: start=0, step=1, limit=4
  $region2: #{_lambda_.11} parent=0 // loop_pre_header
    _
  $region3: #{_lambda_.11} parent=0 // loop_header
    %s9 = sphi 0, %s13
    %p10 = scmp.ge.s32.totalorder %s9, 4
    %s16 = sphi 0, %s35
    %s17 = sphi 0, %s31
    %s18 = sphi 0, %s27
    %s19 = sphi 0, %s16
    %s20 = sphi 0, %s17
    %s21 = sphi 0, %s18
    %s22 = sphi 0, %s19
    %s23 = sphi 0, %s20
    %s24 = sphi 0, %s21
    %s40 = sphi 0, %s42
    %s43 = sphi 0, %s40
    %s44 = sphi 0, %s43
    %s60 = sphi 0, %s44
    %s68 = sphi 0, %s70
    %s71 = sphi 0, %s68
    %s72 = sphi 0, %s71
    %s88 = sphi 0, %s72
    %s94 = sphi 0, %s96
    %s97 = sphi 0, %s94
    %s98 = sphi 0, %s97
    %s114 = sphi 0, %s98
    %s122 = sphi 0, %s124
    %s125 = sphi 0, %s122
    %s126 = sphi 0, %s125
    %s142 = sphi 0, %s126
  $region4: #{_lambda_.11} parent=0 // loop_header_branch
    %12 = sbr.rel (%p10) target = $region8
  $region5: #{_lambda_.11} parent=0 // loop_body
    %s14 = ssub.s32 %s9, 1
    %s15 = ssub.s32 %s9, 2
    %s25 = sadd.s32 1, %s18
    %p26 = scmp.ge.s32.totalorder %s25, 1
    %s27 = scalar_select %p26, 0, %s25
    %s28 = sadd.s32 1, %s17
    %s29 = scalar_select %p26, %s28, %s17
    %p30 = scmp.ge.s32.totalorder %s29, 1
    %s31 = scalar_select %p30, 0, %s29
    %s32 = sadd.s32 1, %s16
    %s33 = scalar_select %p30, %s32, %s16
    %p34 = scmp.ge.s32.totalorder %s33, 2
    %s35 = scalar_select %p34, 0, %s33
    %s36 = ssub.s32 %s16, %s35
    %s37 = ssub.s32 %s18, %s27
    %s38 = sor.u32 %s36, %s37
    %p39 = scmp.eq.s32.totalorder %s38, 0
    %s41 = sadd.s32 %s40, 1
    %s42 = scalar_select %p39, %s40, %s41
    %p45 = pneg %p39
    %p46 = scmp.eq.s32.totalorder %s9, 1
    %p47 = por %p45, %p46
    %p48 = scmp.ne.s32.totalorder %s40, %s43
    %p49 = scmp.eq.s32.totalorder %s9, 0
    %p50 = por %p48, %p49
    %p51 = scmp.ne.s32.totalorder %s40, %s43
    %p52 = scmp.eq.s32.totalorder %s14, 1
    %p53 = por %p51, %p52
    %p54 = scmp.ne.s32.totalorder %s43, %s44
    %p55 = scmp.eq.s32.totalorder %s14, 0
    %p56 = por %p54, %p55
    %p57 = scmp.ne.s32.totalorder %s43, %s44
    %p58 = scmp.eq.s32.totalorder %s15, 1
    %p59 = por %p57, %p58
    %p61 = scmp.ne.s32.totalorder %s44, %s60
    %p62 = scmp.eq.s32.totalorder %s15, 0
    %p63 = por %p61, %p62
    %s64 = ssub.s32 %s18, %s27
    %s65 = ssub.s32 %s17, %s31
    %s66 = sor.u32 %s64, %s65
    %p67 = scmp.eq.s32.totalorder %s66, 0
    %s69 = sadd.s32 %s68, 1
    %s70 = scalar_select %p67, %s68, %s69
    %p73 = pneg %p67
    %p74 = scmp.eq.s32.totalorder %s9, 1
    %p75 = por %p73, %p74
    %p76 = scmp.ne.s32.totalorder %s68, %s71
    %p77 = scmp.eq.s32.totalorder %s9, 0
    %p78 = por %p76, %p77
    %p79 = scmp.ne.s32.totalorder %s68, %s71
    %p80 = scmp.eq.s32.totalorder %s14, 1
    %p81 = por %p79, %p80
    %p82 = scmp.ne.s32.totalorder %s71, %s72
    %p83 = scmp.eq.s32.totalorder %s14, 0
    %p84 = por %p82, %p83
    %p85 = scmp.ne.s32.totalorder %s71, %s72
    %p86 = scmp.eq.s32.totalorder %s15, 1
    %p87 = por %p85, %p86
    %p89 = scmp.ne.s32.totalorder %s72, %s88
    %p90 = scmp.eq.s32.totalorder %s15, 0
    %p91 = por %p89, %p90
    %s92 = ssub.s32 %s17, %s31
    %p93 = scmp.eq.s32.totalorder %s92, 0
    %s95 = sadd.s32 %s94, 1
    %s96 = scalar_select %p93, %s94, %s95
    %p99 = pneg %p93
    %p100 = scmp.eq.s32.totalorder %s9, 1
    %p101 = por %p99, %p100
    %p102 = scmp.ne.s32.totalorder %s94, %s97
    %p103 = scmp.eq.s32.totalorder %s9, 0
    %p104 = por %p102, %p103
    %p105 = scmp.ne.s32.totalorder %s94, %s97
    %p106 = scmp.eq.s32.totalorder %s14, 1
    %p107 = por %p105, %p106
    %p108 = scmp.ne.s32.totalorder %s97, %s98
    %p109 = scmp.eq.s32.totalorder %s14, 0
    %p110 = por %p108, %p109
    %p111 = scmp.ne.s32.totalorder %s97, %s98
    %p112 = scmp.eq.s32.totalorder %s15, 1
    %p113 = por %p111, %p112
    %p115 = scmp.ne.s32.totalorder %s98, %s114
    %p116 = scmp.eq.s32.totalorder %s15, 0
    %p117 = por %p115, %p116
    %s118 = ssub.s32 %s16, %s35
    %s119 = ssub.s32 %s17, %s31
    %s120 = sor.u32 %s118, %s119
    %p121 = scmp.eq.s32.totalorder %s120, 0
    %s123 = sadd.s32 %s122, 1
    %s124 = scalar_select %p121, %s122, %s123
    %p127 = pneg %p121
    %p128 = scmp.eq.s32.totalorder %s9, 1
    %p129 = por %p127, %p128
    %p130 = scmp.ne.s32.totalorder %s122, %s125
    %p131 = scmp.eq.s32.totalorder %s9, 0
    %p132 = por %p130, %p131
    %p133 = scmp.ne.s32.totalorder %s122, %s125
    %p134 = scmp.eq.s32.totalorder %s14, 1
    %p135 = por %p133, %p134
    %p136 = scmp.ne.s32.totalorder %s125, %s126
    %p137 = scmp.eq.s32.totalorder %s14, 0
    %p138 = por %p136, %p137
    %p139 = scmp.ne.s32.totalorder %s125, %s126
    %p140 = scmp.eq.s32.totalorder %s15, 1
    %p141 = por %p139, %p140
    %p143 = scmp.ne.s32.totalorder %s126, %s142
    %p144 = scmp.eq.s32.totalorder %s15, 0
    %p145 = por %p143, %p144
    %p146 = scmp.le.s32.totalorder 1, %s9
    %p147 = scmp.lt.s32.totalorder %s9, 3
    %p148 = pnand %p146, %p147
    %p149 = pneg %p148
    // Predicated region
    $region9: #{_lambda_.11} parent=5 // pred_check
      _
    $region10: #{_lambda_.11} parent=5 // pred_check_branch
      %151 = sbr.rel (%p148) target = $region12
    $region11: #{_lambda_.11} parent=5 // pred_region
      %s152 = ssub.s32 %s9, 1
      // Predicated region
      $region13: #{_lambda_.11} parent=11 // pred_check
        %p153 = pneg %p84
      $region14: #{_lambda_.11} parent=11 // pred_check_branch
        %155 = sbr.rel (%p153) target = $region16
      $region15: #{_lambda_.11} parent=11 // pred_region
        %s156 = smul.u32 16, %s21
        %p157 = scmp.lt.s32.totalorder %s156, 15
        %s158 = scalar_select %p157, %s156, 15
        %p159 = scmp.lt.s32.totalorder %s20, 0
        %s160 = scalar_select %p159, %s20, 0
        %s161 = sadd.s32 %s160, %s158
        %s162 = smul.addr %s161, 4
        %s163 = scalar_lea.vmem %s1, %s162
        %s164 = smul.u32 16, %s21
      $region16: #{_lambda_.11} parent=11 // pred_fallthru
        _
      // Predicated region
      $region17: #{_lambda_.11} parent=11 // pred_check
        %p165 = pneg %p110
      $region18: #{_lambda_.11} parent=11 // pred_check_branch
        %167 = sbr.rel (%p165) target = $region20
      $region19: #{_lambda_.11} parent=11 // pred_region
        %p168 = scmp.lt.s32.totalorder %s20, 0
        %s169 = scalar_select %p168, %s20, 0
        %s170 = scalar_lea.vmem %s2, %s169
      $region20: #{_lambda_.11} parent=11 // pred_fallthru
        _
    $region12: #{_lambda_.11} parent=5 // pred_fallthru
      _
    %p171 = scmp.lt.s32.totalorder %s9, 2
    // Predicated region
    $region21: #{_lambda_.11} parent=5 // pred_check
      %p172 = pneg %p171
    $region22: #{_lambda_.11} parent=5 // pred_check_branch
      %174 = sbr.rel (%p172) target = $region24
    $region23: #{_lambda_.11} parent=5 // pred_region
      // Predicated region
      $region25: #{_lambda_.11} parent=23 // pred_check
        %p175 = pneg %p50
      $region26: #{_lambda_.11} parent=23 // pred_check_branch
        %177 = sbr.rel (%p175) target = $region28
      $region27: #{_lambda_.11} parent=23 // pred_region
        %s178 = smul.u32 32, %s16
        %p179 = scmp.lt.s32.totalorder %s178, 63
        %s180 = scalar_select %p179, %s178, 63
        %p181 = scmp.lt.s32.totalorder %s18, 0
        %s182 = scalar_select %p181, %s18, 0
        %s183 = sadd.s32 %s182, %s180
        %s184 = smul.addr %s183, 4
        %s185 = scalar_lea.vmem %s0, %s184
        %s186 = smul.u32 32, %s16
      $region28: #{_lambda_.11} parent=23 // pred_fallthru
        _
    $region24: #{_lambda_.11} parent=5 // pred_fallthru
      _
    %p187 = scmp.le.s32.totalorder 1, %s9
    %p188 = scmp.lt.s32.totalorder %s9, 3
    %p189 = pnand %p187, %p188
    %p190 = pneg %p189
    // Predicated region
    $region29: #{_lambda_.11} parent=5 // pred_check
      _
    $region30: #{_lambda_.11} parent=5 // pred_check_branch
      %192 = sbr.rel (%p189) target = $region32
    $region31: #{_lambda_.11} parent=5 // pred_region
      %s193 = ssub.s32 %s9, 1
      %s194 = smul.u32 32, %s19
      %p195 = scmp.lt.s32.totalorder %s194, 63
      %s196 = scalar_select %p195, %s194, 63
      %p197 = scmp.lt.s32.totalorder %s21, 0
      %s198 = scalar_select %p197, %s21, 0
      %s199 = sadd.s32 %s198, %s196
      %s200 = smul.addr %s199, 4
      %s201 = scalar_lea.vmem %s0, %s200
      %p202 = pneg %p56
      %p203 = pneg %p53
      %s204 = smul.u32 16, %s21
      %p205 = scmp.lt.s32.totalorder %s204, 15
      %s206 = scalar_select %p205, %s204, 15
      %p207 = scmp.lt.s32.totalorder %s20, 0
      %s208 = scalar_select %p207, %s20, 0
      %s209 = sadd.s32 %s208, %s206
      %s210 = smul.addr %s209, 4
      %s211 = scalar_lea.vmem %s1, %s210
      %p212 = pneg %p84
      %p213 = pneg %p81
      %p214 = scmp.lt.s32.totalorder %s20, 0
      %s215 = scalar_select %p214, %s20, 0
      %s216 = scalar_lea.vmem %s2, %s215
      %p217 = pneg %p110
      %p218 = pneg %p107
      %p219 = pneg %p138
      %p220 = pneg %p135
      %s221 = smul.u32 32, %s19
      %p222 = scmp.lt.s32.totalorder %s221, 63
      %s223 = scalar_select %p222, %s221, 63
      %p224 = scmp.lt.s32.totalorder %s20, 0
      %s225 = scalar_select %p224, %s20, 0
      %s226 = sadd.s32 %s225, %s223
      %s227 = smul.addr %s226, 4
      %s228 = scalar_lea.vmem %s3, %s227
      %s229 = smul.u32 32, %s19
      %p230 = scmp.lt.s32.totalorder %s229, 63
      %s231 = scalar_select %p230, %s229, 63
      %p232 = scmp.lt.s32.totalorder %s21, 0
      %s233 = scalar_select %p232, %s21, 0
      %s234 = sadd.s32 %s233, %s231
      %s235 = smul.addr %s234, 4
      %s236 = scalar_lea.vmem %s0, %s235
      %s237 = smul.u32 32, %s19
      %s238 = smul.u32 16, %s21
      %p239 = scmp.lt.s32.totalorder %s238, 15
      %s240 = scalar_select %p239, %s238, 15
      %p241 = scmp.lt.s32.totalorder %s20, 0
      %s242 = scalar_select %p241, %s20, 0
      %s243 = sadd.s32 %s242, %s240
      %s244 = smul.addr %s243, 4
      %s245 = scalar_lea.vmem %s1, %s244
      %s246 = smul.u32 16, %s21
      %p247 = scmp.lt.s32.totalorder %s20, 0
      %s248 = scalar_select %p247, %s20, 0
      %s249 = scalar_lea.vmem %s2, %s248
      %s250 = smul.u32 32, %s19
      %p251 = scmp.lt.s32.totalorder %s250, 63
      %s252 = scalar_select %p251, %s250, 63
      %p253 = scmp.lt.s32.totalorder %s20, 0
      %s254 = scalar_select %p253, %s20, 0
      %s255 = sadd.s32 %s254, %s252
      %s256 = smul.addr %s255, 4
      %s257 = scalar_lea.vmem %s3, %s256
      %s258 = smul.u32 32, %s19
      %p259 = scmp.eq.s32.totalorder %s21, 0
      // Predicated region
      $region33: #{_lambda_.11} parent=31 // pred_check
        %p260 = pneg %p259
      $region34: #{_lambda_.11} parent=31 // pred_check_branch
        %262 = sbr.rel (%p260) target = $region36
      $region35: #{_lambda_.11} parent=31 // pred_region
        %263 = vst [vmem:[#allocation2] sm:$0xff] 0.0
        %264 = vst [vmem:[#allocation2 + $0x8] sm:$0xff] 0.0
        %265 = vst [vmem:[#allocation2 + $0x10] sm:$0xff] 0.0
        %266 = vst [vmem:[#allocation2 + $0x18] sm:$0xff] 0.0
        %267 = vst [vmem:[#allocation2 + $0x20] sm:$0xff] 0.0
        %268 = vst [vmem:[#allocation2 + $0x28] sm:$0xff] 0.0
        %269 = vst [vmem:[#allocation2 + $0x30] sm:$0xff] 0.0
        %270 = vst [vmem:[#allocation2 + $0x38] sm:$0xff] 0.0
        %271 = vst [vmem:[#allocation2 + $0x40] sm:$0xff] 0.0
        %272 = vst [vmem:[#allocation2 + $0x48] sm:$0xff] 0.0
        %273 = vst [vmem:[#allocation2 + $0x50] sm:$0xff] 0.0
        %274 = vst [vmem:[#allocation2 + $0x58] sm:$0xff] 0.0
        %275 = vst [vmem:[#allocation2 + $0x60] sm:$0xff] 0.0
        %276 = vst [vmem:[#allocation2 + $0x68] sm:$0xff] 0.0
        %277 = vst [vmem:[#allocation2 + $0x70] sm:$0xff] 0.0
        %278 = vst [vmem:[#allocation2 + $0x78] sm:$0xff] 0.0
        %279 = vst [vmem:[#allocation2 + $0x80] sm:$0xff] 0.0
        %280 = vst [vmem:[#allocation2 + $0x88] sm:$0xff] 0.0
        %281 = vst [vmem:[#allocation2 + $0x90] sm:$0xff] 0.0
        %282 = vst [vmem:[#allocation2 + $0x98] sm:$0xff] 0.0
        %283 = vst [vmem:[#allocation2 + $0xa0] sm:$0xff] 0.0
        %284 = vst [vmem:[#allocation2 + $0xa8] sm:$0xff] 0.0
        %285 = vst [vmem:[#allocation2 + $0xb0] sm:$0xff] 0.0
        %286 = vst [vmem:[#allocation2 + $0xb8] sm:$0xff] 0.0
        %287 = vst [vmem:[#allocation2 + $0xc0] sm:$0xff] 0.0
        %288 = vst [vmem:[#allocation2 + $0xc8] sm:$0xff] 0.0
        %289 = vst [vmem:[#allocation2 + $0xd0] sm:$0xff] 0.0
        %290 = vst [vmem:[#allocation2 + $0xd8] sm:$0xff] 0.0
        %291 = vst [vmem:[#allocation2 + $0xe0] sm:$0xff] 0.0
        %292 = vst [vmem:[#allocation2 + $0xe8] sm:$0xff] 0.0
        %293 = vst [vmem:[#allocation2 + $0xf0] sm:$0xff] 0.0
        %294 = vst [vmem:[#allocation2 + $0xf8] sm:$0xff] 0.0
      $region36: #{_lambda_.11} parent=31 // pred_fallthru
        _
      %v295 = vld [vmem:[#allocation2] sm:$0xff]
      %v296 = vld [vmem:[#allocation2 + $0x8] sm:$0xff]
      %v297 = vld [vmem:[#allocation2 + $0x10] sm:$0xff]
      %v298 = vld [vmem:[#allocation2 + $0x18] sm:$0xff]
      %v299 = vld [vmem:[#allocation2 + $0x20] sm:$0xff]
      %v300 = vld [vmem:[#allocation2 + $0x28] sm:$0xff]
      %v301 = vld [vmem:[#allocation2 + $0x30] sm:$0xff]
      %v302 = vld [vmem:[#allocation2 + $0x38] sm:$0xff]
      %v303 = vld [vmem:[#allocation2 + $0x40] sm:$0xff]
      %v304 = vld [vmem:[#allocation2 + $0x48] sm:$0xff]
      %v305 = vld [vmem:[#allocation2 + $0x50] sm:$0xff]
      %v306 = vld [vmem:[#allocation2 + $0x58] sm:$0xff]
      %v307 = vld [vmem:[#allocation2 + $0x60] sm:$0xff]
      %v308 = vld [vmem:[#allocation2 + $0x68] sm:$0xff]
      %v309 = vld [vmem:[#allocation2 + $0x70] sm:$0xff]
      %v310 = vld [vmem:[#allocation2 + $0x78] sm:$0xff]
      %v311 = vld [vmem:[#allocation2 + $0x80] sm:$0xff]
      %v312 = vld [vmem:[#allocation2 + $0x88] sm:$0xff]
      %v313 = vld [vmem:[#allocation2 + $0x90] sm:$0xff]
      %v314 = vld [vmem:[#allocation2 + $0x98] sm:$0xff]
      %v315 = vld [vmem:[#allocation2 + $0xa0] sm:$0xff]
      %v316 = vld [vmem:[#allocation2 + $0xa8] sm:$0xff]
      %v317 = vld [vmem:[#allocation2 + $0xb0] sm:$0xff]
      %v318 = vld [vmem:[#allocation2 + $0xb8] sm:$0xff]
      %v319 = vld [vmem:[#allocation2 + $0xc0] sm:$0xff]
      %v320 = vld [vmem:[#allocation2 + $0xc8] sm:$0xff]
      %v321 = vld [vmem:[#allocation2 + $0xd0] sm:$0xff]
      %v322 = vld [vmem:[#allocation2 + $0xd8] sm:$0xff]
      %v323 = vld [vmem:[#allocation2 + $0xe0] sm:$0xff]
      %v324 = vld [vmem:[#allocation2 + $0xe8] sm:$0xff]
      %v325 = vld [vmem:[#allocation2 + $0xf0] sm:$0xff]
      %v326 = vld [vmem:[#allocation2 + $0xf8] sm:$0xff]
      %v327 = vld [vmem:[%s236] sm:$0xf]
      %v328 = vld [vmem:[%s236 + $0x4] sm:$0xf]
      %v329 = vld [vmem:[%s236 + $0x8] sm:$0xf]
      %v330 = vld [vmem:[%s236 + $0xc] sm:$0xf]
      %v331 = vld [vmem:[%s236 + $0x10] sm:$0xf]
      %v332 = vld [vmem:[%s236 + $0x14] sm:$0xf]
      %v333 = vld [vmem:[%s236 + $0x18] sm:$0xf]
      %v334 = vld [vmem:[%s236 + $0x1c] sm:$0xf]
      %v335 = vld [vmem:[%s236 + $0x20] sm:$0xf]
      %v336 = vld [vmem:[%s236 + $0x24] sm:$0xf]
      %v337 = vld [vmem:[%s236 + $0x28] sm:$0xf]
      %v338 = vld [vmem:[%s236 + $0x2c] sm:$0xf]
      %v339 = vld [vmem:[%s236 + $0x30] sm:$0xf]
      %v340 = vld [vmem:[%s236 + $0x34] sm:$0xf]
      %v341 = vld [vmem:[%s236 + $0x38] sm:$0xf]
      %v342 = vld [vmem:[%s236 + $0x3c] sm:$0xf]
      %v343 = vld [vmem:[%s236 + $0x40] sm:$0xf]
      %v344 = vld [vmem:[%s236 + $0x44] sm:$0xf]
      %v345 = vld [vmem:[%s236 + $0x48] sm:$0xf]
      %v346 = vld [vmem:[%s236 + $0x4c] sm:$0xf]
      %v347 = vld [vmem:[%s236 + $0x50] sm:$0xf]
      %v348 = vld [vmem:[%s236 + $0x54] sm:$0xf]
      %v349 = vld [vmem:[%s236 + $0x58] sm:$0xf]
      %v350 = vld [vmem:[%s236 + $0x5c] sm:$0xf]
      %v351 = vld [vmem:[%s236 + $0x60] sm:$0xf]
      %v352 = vld [vmem:[%s236 + $0x64] sm:$0xf]
      %v353 = vld [vmem:[%s236 + $0x68] sm:$0xf]
      %v354 = vld [vmem:[%s236 + $0x6c] sm:$0xf]
      %v355 = vld [vmem:[%s236 + $0x70] sm:$0xf]
      %v356 = vld [vmem:[%s236 + $0x74] sm:$0xf]
      %v357 = vld [vmem:[%s236 + $0x78] sm:$0xf]
      %v358 = vld [vmem:[%s236 + $0x7c] sm:$0xf]
      %v359 = vld [vmem:[%s245] sm:$0xf]
      %v360 = vld [vmem:[%s245 + $0x4] sm:$0xf]
      %v361 = vld [vmem:[%s245 + $0x8] sm:$0xf]
      %v362 = vld [vmem:[%s245 + $0xc] sm:$0xf]
      %v363 = vld [vmem:[%s245 + $0x10] sm:$0xf]
      %v364 = vld [vmem:[%s245 + $0x14] sm:$0xf]
      %v365 = vld [vmem:[%s245 + $0x18] sm:$0xf]
      %v366 = vld [vmem:[%s245 + $0x1c] sm:$0xf]
      %v367 = vld [vmem:[%s245 + $0x20] sm:$0xf]
      %v368 = vld [vmem:[%s245 + $0x24] sm:$0xf]
      %v369 = vld [vmem:[%s245 + $0x28] sm:$0xf]
      %v370 = vld [vmem:[%s245 + $0x2c] sm:$0xf]
      %v371 = vld [vmem:[%s245 + $0x30] sm:$0xf]
      %v372 = vld [vmem:[%s245 + $0x34] sm:$0xf]
      %v373 = vld [vmem:[%s245 + $0x38] sm:$0xf]
      %v374 = vld [vmem:[%s245 + $0x3c] sm:$0xf]
      %v407 = vunpack.c.l.b16 %v327
      %v408 = vunpack.c.l.b16 %v328
      %v409 = vunpack.c.l.b16 %v329
      %v410 = vunpack.c.l.b16 %v330
      %v411 = vunpack.c.l.b16 %v331
      %v412 = vunpack.c.l.b16 %v332
      %v413 = vunpack.c.l.b16 %v333
      %v414 = vunpack.c.l.b16 %v334
      %v415 = vunpack.c.l.b16 %v335
      %v416 = vunpack.c.l.b16 %v336
      %v417 = vunpack.c.l.b16 %v337
      %v418 = vunpack.c.l.b16 %v338
      %v419 = vunpack.c.l.b16 %v339
      %v420 = vunpack.c.l.b16 %v340
      %v421 = vunpack.c.l.b16 %v341
      %v422 = vunpack.c.l.b16 %v342
      %v423 = vunpack.c.l.b16 %v343
      %v424 = vunpack.c.l.b16 %v344
      %v425 = vunpack.c.l.b16 %v345
      %v426 = vunpack.c.l.b16 %v346
      %v427 = vunpack.c.l.b16 %v347
      %v428 = vunpack.c.l.b16 %v348
      %v429 = vunpack.c.l.b16 %v349
      %v430 = vunpack.c.l.b16 %v350
      %v431 = vunpack.c.l.b16 %v351
      %v432 = vunpack.c.l.b16 %v352
      %v433 = vunpack.c.l.b16 %v353
      %v434 = vunpack.c.l.b16 %v354
      %v435 = vunpack.c.l.b16 %v355
      %v436 = vunpack.c.l.b16 %v356
      %v437 = vunpack.c.l.b16 %v357
      %v438 = vunpack.c.l.b16 %v358
      %v439 = vpack.c.b16 %v408, %v407
      %v440 = vpack.c.b16 %v410, %v409
      %v441 = vpack.c.b16 %v412, %v411
      %v442 = vpack.c.b16 %v414, %v413
      %v443 = vpack.c.b16 %v416, %v415
      %v444 = vpack.c.b16 %v418, %v417
      %v445 = vpack.c.b16 %v420, %v419
      %v446 = vpack.c.b16 %v422, %v421
      %v447 = vpack.c.b16 %v424, %v423
      %v448 = vpack.c.b16 %v426, %v425
      %v449 = vpack.c.b16 %v428, %v427
      %v450 = vpack.c.b16 %v430, %v429
      %v451 = vpack.c.b16 %v432, %v431
      %v452 = vpack.c.b16 %v434, %v433
      %v453 = vpack.c.b16 %v436, %v435
      %v454 = vpack.c.b16 %v438, %v437
      %v487 = vunpack.c.l.b16 %v359
      %v488 = vunpack.c.l.b16 %v360
      %v489 = vunpack.c.l.b16 %v361
      %v490 = vunpack.c.l.b16 %v362
      %v491 = vunpack.c.l.b16 %v363
      %v492 = vunpack.c.l.b16 %v364
      %v493 = vunpack.c.l.b16 %v365
      %v494 = vunpack.c.l.b16 %v366
      %v495 = vunpack.c.l.b16 %v367
      %v496 = vunpack.c.l.b16 %v368
      %v497 = vunpack.c.l.b16 %v369
      %v498 = vunpack.c.l.b16 %v370
      %v499 = vunpack.c.l.b16 %v371
      %v500 = vunpack.c.l.b16 %v372
      %v501 = vunpack.c.l.b16 %v373
      %v502 = vunpack.c.l.b16 %v374
      %v503 = vpack.c.b16 %v488, %v487
      %v504 = vpack.c.b16 %v490, %v489
      %v505 = vpack.c.b16 %v492, %v491
      %v506 = vpack.c.b16 %v494, %v493
      %v507 = vpack.c.b16 %v496, %v495
      %v508 = vpack.c.b16 %v498, %v497
      %v509 = vpack.c.b16 %v500, %v499
      %v510 = vpack.c.b16 %v502, %v501
      %519 = vmatpush.bf16.msra.mxu0 %v510
      %520 = vmatpush.bf16.msra.mxu0 %v509
      %521 = vmatpush.bf16.msra.mxu0 %v508
      %522 = vmatpush.bf16.msra.mxu0 %v507
      %523 = vmatpush.bf16.msra.mxu0 %v506
      %524 = vmatpush.bf16.msra.mxu0 %v505
      %525 = vmatpush.bf16.msra.mxu0 %v504
      %526 = vmatpush.bf16.msra.mxu0 %v503
      %527 = vmatmul.bf16.gmra.mxu0 %v439
      %v528 = vpop.f32.mrf.mxu0
      %v529 = vadd.f32 0.0, %v528
      %v530 = vpop.f32.mrf.mxu0
      %v531 = vadd.f32 0.0, %v530
      %532 = vmatmul.bf16.gmra.mxu0 %v440
      %v533 = vpop.f32.mrf.mxu0
      %v534 = vadd.f32 0.0, %v533
      %v535 = vpop.f32.mrf.mxu0
      %v536 = vadd.f32 0.0, %v535
      %537 = vmatmul.bf16.gmra.mxu0 %v441
      %v538 = vpop.f32.mrf.mxu0
      %v539 = vadd.f32 0.0, %v538
      %v540 = vpop.f32.mrf.mxu0
      %v541 = vadd.f32 0.0, %v540
      %542 = vmatmul.bf16.gmra.mxu0 %v442
      %v543 = vpop.f32.mrf.mxu0
      %v544 = vadd.f32 0.0, %v543
      %v545 = vpop.f32.mrf.mxu0
      %v546 = vadd.f32 0.0, %v545
      %547 = vmatmul.bf16.gmra.mxu0 %v443
      %v548 = vpop.f32.mrf.mxu0
      %v549 = vadd.f32 0.0, %v548
      %v550 = vpop.f32.mrf.mxu0
      %v551 = vadd.f32 0.0, %v550
      %552 = vmatmul.bf16.gmra.mxu0 %v444
      %v553 = vpop.f32.mrf.mxu0
      %v554 = vadd.f32 0.0, %v553
      %v555 = vpop.f32.mrf.mxu0
      %v556 = vadd.f32 0.0, %v555
      %557 = vmatmul.bf16.gmra.mxu0 %v445
      %v558 = vpop.f32.mrf.mxu0
      %v559 = vadd.f32 0.0, %v558
      %v560 = vpop.f32.mrf.mxu0
      %v561 = vadd.f32 0.0, %v560
      %562 = vmatmul.bf16.gmra.mxu0 %v446
      %v563 = vpop.f32.mrf.mxu0
      %v564 = vadd.f32 0.0, %v563
      %v565 = vpop.f32.mrf.mxu0
      %v566 = vadd.f32 0.0, %v565
      %567 = vmatmul.bf16.gmra.mxu0 %v447
      %v568 = vpop.f32.mrf.mxu0
      %v569 = vadd.f32 0.0, %v568
      %v570 = vpop.f32.mrf.mxu0
      %v571 = vadd.f32 0.0, %v570
      %572 = vmatmul.bf16.gmra.mxu0 %v448
      %v573 = vpop.f32.mrf.mxu0
      %v574 = vadd.f32 0.0, %v573
      %v575 = vpop.f32.mrf.mxu0
      %v576 = vadd.f32 0.0, %v575
      %577 = vmatmul.bf16.gmra.mxu0 %v449
      %v578 = vpop.f32.mrf.mxu0
      %v579 = vadd.f32 0.0, %v578
      %v580 = vpop.f32.mrf.mxu0
      %v581 = vadd.f32 0.0, %v580
      %582 = vmatmul.bf16.gmra.mxu0 %v450
      %v583 = vpop.f32.mrf.mxu0
      %v584 = vadd.f32 0.0, %v583
      %v585 = vpop.f32.mrf.mxu0
      %v586 = vadd.f32 0.0, %v585
      %587 = vmatmul.bf16.gmra.mxu0 %v451
      %v588 = vpop.f32.mrf.mxu0
      %v589 = vadd.f32 0.0, %v588
      %v590 = vpop.f32.mrf.mxu0
      %v591 = vadd.f32 0.0, %v590
      %592 = vmatmul.bf16.gmra.mxu0 %v452
      %v593 = vpop.f32.mrf.mxu0
      %v594 = vadd.f32 0.0, %v593
      %v595 = vpop.f32.mrf.mxu0
      %v596 = vadd.f32 0.0, %v595
      %597 = vmatmul.bf16.gmra.mxu0 %v453
      %v598 = vpop.f32.mrf.mxu0
      %v599 = vadd.f32 0.0, %v598
      %v600 = vpop.f32.mrf.mxu0
      %v601 = vadd.f32 0.0, %v600
      %602 = vmatmul.bf16.gmra.mxu0 %v454
      %v603 = vpop.f32.mrf.mxu0
      %v604 = vadd.f32 0.0, %v603
      %v605 = vpop.f32.mrf.mxu0
      %v606 = vadd.f32 0.0, %v605
      %607 = vdwg.mxu0
      %v608 = vadd.f32 %v295, %v529
      %v609 = vadd.f32 %v296, %v531
      %v610 = vadd.f32 %v297, %v534
      %v611 = vadd.f32 %v298, %v536
      %v612 = vadd.f32 %v299, %v539
      %v613 = vadd.f32 %v300, %v541
      %v614 = vadd.f32 %v301, %v544
      %v615 = vadd.f32 %v302, %v546
      %v616 = vadd.f32 %v303, %v549
      %v617 = vadd.f32 %v304, %v551
      %v618 = vadd.f32 %v305, %v554
      %v619 = vadd.f32 %v306, %v556
      %v620 = vadd.f32 %v307, %v559
      %v621 = vadd.f32 %v308, %v561
      %v622 = vadd.f32 %v309, %v564
      %v623 = vadd.f32 %v310, %v566
      %v624 = vadd.f32 %v311, %v569
      %v625 = vadd.f32 %v312, %v571
      %v626 = vadd.f32 %v313, %v574
      %v627 = vadd.f32 %v314, %v576
      %v628 = vadd.f32 %v315, %v579
      %v629 = vadd.f32 %v316, %v581
      %v630 = vadd.f32 %v317, %v584
      %v631 = vadd.f32 %v318, %v586
      %v632 = vadd.f32 %v319, %v589
      %v633 = vadd.f32 %v320, %v591
      %v634 = vadd.f32 %v321, %v594
      %v635 = vadd.f32 %v322, %v596
      %v636 = vadd.f32 %v323, %v599
      %v637 = vadd.f32 %v324, %v601
      %v638 = vadd.f32 %v325, %v604
      %v639 = vadd.f32 %v326, %v606
      %640 = vst [vmem:[#allocation2] sm:$0xff] %v608
      %641 = vst [vmem:[#allocation2 + $0x8] sm:$0xff] %v609
      %642 = vst [vmem:[#allocation2 + $0x10] sm:$0xff] %v610
      %643 = vst [vmem:[#allocation2 + $0x18] sm:$0xff] %v611
      %644 = vst [vmem:[#allocation2 + $0x20] sm:$0xff] %v612
      %645 = vst [vmem:[#allocation2 + $0x28] sm:$0xff] %v613
      %646 = vst [vmem:[#allocation2 + $0x30] sm:$0xff] %v614
      %647 = vst [vmem:[#allocation2 + $0x38] sm:$0xff] %v615
      %648 = vst [vmem:[#allocation2 + $0x40] sm:$0xff] %v616
      %649 = vst [vmem:[#allocation2 + $0x48] sm:$0xff] %v617
      %650 = vst [vmem:[#allocation2 + $0x50] sm:$0xff] %v618
      %651 = vst [vmem:[#allocation2 + $0x58] sm:$0xff] %v619
      %652 = vst [vmem:[#allocation2 + $0x60] sm:$0xff] %v620
      %653 = vst [vmem:[#allocation2 + $0x68] sm:$0xff] %v621
      %654 = vst [vmem:[#allocation2 + $0x70] sm:$0xff] %v622
      %655 = vst [vmem:[#allocation2 + $0x78] sm:$0xff] %v623
      %656 = vst [vmem:[#allocation2 + $0x80] sm:$0xff] %v624
      %657 = vst [vmem:[#allocation2 + $0x88] sm:$0xff] %v625
      %658 = vst [vmem:[#allocation2 + $0x90] sm:$0xff] %v626
      %659 = vst [vmem:[#allocation2 + $0x98] sm:$0xff] %v627
      %660 = vst [vmem:[#allocation2 + $0xa0] sm:$0xff] %v628
      %661 = vst [vmem:[#allocation2 + $0xa8] sm:$0xff] %v629
      %662 = vst [vmem:[#allocation2 + $0xb0] sm:$0xff] %v630
      %663 = vst [vmem:[#allocation2 + $0xb8] sm:$0xff] %v631
      %664 = vst [vmem:[#allocation2 + $0xc0] sm:$0xff] %v632
      %665 = vst [vmem:[#allocation2 + $0xc8] sm:$0xff] %v633
      %666 = vst [vmem:[#allocation2 + $0xd0] sm:$0xff] %v634
      %667 = vst [vmem:[#allocation2 + $0xd8] sm:$0xff] %v635
      %668 = vst [vmem:[#allocation2 + $0xe0] sm:$0xff] %v636
      %669 = vst [vmem:[#allocation2 + $0xe8] sm:$0xff] %v637
      %670 = vst [vmem:[#allocation2 + $0xf0] sm:$0xff] %v638
      %671 = vst [vmem:[#allocation2 + $0xf8] sm:$0xff] %v639
      // Predicated region
      $region37: #{_lambda_.11} parent=31 // pred_check
        %p672 = pneg %p259
      $region38: #{_lambda_.11} parent=31 // pred_check_branch
        %674 = sbr.rel (%p672) target = $region40
      $region39: #{_lambda_.11} parent=31 // pred_region
        %v675 = vld [vmem:[#allocation2] sm:$0xff]
        %v676 = vld [vmem:[#allocation2 + $0x8] sm:$0xff]
        %v677 = vld [vmem:[#allocation2 + $0x10] sm:$0xff]
        %v678 = vld [vmem:[#allocation2 + $0x18] sm:$0xff]
        %v679 = vld [vmem:[#allocation2 + $0x20] sm:$0xff]
        %v680 = vld [vmem:[#allocation2 + $0x28] sm:$0xff]
        %v681 = vld [vmem:[#allocation2 + $0x30] sm:$0xff]
        %v682 = vld [vmem:[#allocation2 + $0x38] sm:$0xff]
        %v683 = vld [vmem:[#allocation2 + $0x40] sm:$0xff]
        %v684 = vld [vmem:[#allocation2 + $0x48] sm:$0xff]
        %v685 = vld [vmem:[#allocation2 + $0x50] sm:$0xff]
        %v686 = vld [vmem:[#allocation2 + $0x58] sm:$0xff]
        %v687 = vld [vmem:[#allocation2 + $0x60] sm:$0xff]
        %v688 = vld [vmem:[#allocation2 + $0x68] sm:$0xff]
        %v689 = vld [vmem:[#allocation2 + $0x70] sm:$0xff]
        %v690 = vld [vmem:[#allocation2 + $0x78] sm:$0xff]
        %v691 = vld [vmem:[#allocation2 + $0x80] sm:$0xff]
        %v692 = vld [vmem:[#allocation2 + $0x88] sm:$0xff]
        %v693 = vld [vmem:[#allocation2 + $0x90] sm:$0xff]
        %v694 = vld [vmem:[#allocation2 + $0x98] sm:$0xff]
        %v695 = vld [vmem:[#allocation2 + $0xa0] sm:$0xff]
        %v696 = vld [vmem:[#allocation2 + $0xa8] sm:$0xff]
        %v697 = vld [vmem:[#allocation2 + $0xb0] sm:$0xff]
        %v698 = vld [vmem:[#allocation2 + $0xb8] sm:$0xff]
        %v699 = vld [vmem:[#allocation2 + $0xc0] sm:$0xff]
        %v700 = vld [vmem:[#allocation2 + $0xc8] sm:$0xff]
        %v701 = vld [vmem:[#allocation2 + $0xd0] sm:$0xff]
        %v702 = vld [vmem:[#allocation2 + $0xd8] sm:$0xff]
        %v703 = vld [vmem:[#allocation2 + $0xe0] sm:$0xff]
        %v704 = vld [vmem:[#allocation2 + $0xe8] sm:$0xff]
        %v705 = vld [vmem:[#allocation2 + $0xf0] sm:$0xff]
        %v706 = vld [vmem:[#allocation2 + $0xf8] sm:$0xff]
        %v707 = vld [vmem:[%s249] sm:$0x1]
        %v709 = vperm.slane %v707, 0
        %v711 = vadd.f32 %v675, %v709
        %v712 = vadd.f32 %v676, %v709
        %v713 = vadd.f32 %v677, %v709
        %v714 = vadd.f32 %v678, %v709
        %v715 = vadd.f32 %v679, %v709
        %v716 = vadd.f32 %v680, %v709
        %v717 = vadd.f32 %v681, %v709
        %v718 = vadd.f32 %v682, %v709
        %v719 = vadd.f32 %v683, %v709
        %v720 = vadd.f32 %v684, %v709
        %v721 = vadd.f32 %v685, %v709
        %v722 = vadd.f32 %v686, %v709
        %v723 = vadd.f32 %v687, %v709
        %v724 = vadd.f32 %v688, %v709
        %v725 = vadd.f32 %v689, %v709
        %v726 = vadd.f32 %v690, %v709
        %v727 = vadd.f32 %v691, %v709
        %v728 = vadd.f32 %v692, %v709
        %v729 = vadd.f32 %v693, %v709
        %v730 = vadd.f32 %v694, %v709
        %v731 = vadd.f32 %v695, %v709
        %v732 = vadd.f32 %v696, %v709
        %v733 = vadd.f32 %v697, %v709
        %v734 = vadd.f32 %v698, %v709
        %v735 = vadd.f32 %v699, %v709
        %v736 = vadd.f32 %v700, %v709
        %v737 = vadd.f32 %v701, %v709
        %v738 = vadd.f32 %v702, %v709
        %v739 = vadd.f32 %v703, %v709
        %v740 = vadd.f32 %v704, %v709
        %v741 = vadd.f32 %v705, %v709
        %v742 = vadd.f32 %v706, %v709
        %vm743 = vcmp.gt.f32.partialorder %v711, 0.0
        %vm744 = vcmp.gt.f32.partialorder %v712, 0.0
        %vm745 = vcmp.gt.f32.partialorder %v713, 0.0
        %vm746 = vcmp.gt.f32.partialorder %v714, 0.0
        %vm747 = vcmp.gt.f32.partialorder %v715, 0.0
        %vm748 = vcmp.gt.f32.partialorder %v716, 0.0
        %vm749 = vcmp.gt.f32.partialorder %v717, 0.0
        %vm750 = vcmp.gt.f32.partialorder %v718, 0.0
        %vm751 = vcmp.gt.f32.partialorder %v719, 0.0
        %vm752 = vcmp.gt.f32.partialorder %v720, 0.0
        %vm753 = vcmp.gt.f32.partialorder %v721, 0.0
        %vm754 = vcmp.gt.f32.partialorder %v722, 0.0
        %vm755 = vcmp.gt.f32.partialorder %v723, 0.0
        %vm756 = vcmp.gt.f32.partialorder %v724, 0.0
        %vm757 = vcmp.gt.f32.partialorder %v725, 0.0
        %vm758 = vcmp.gt.f32.partialorder %v726, 0.0
        %vm759 = vcmp.gt.f32.partialorder %v727, 0.0
        %vm760 = vcmp.gt.f32.partialorder %v728, 0.0
        %vm761 = vcmp.gt.f32.partialorder %v729, 0.0
        %vm762 = vcmp.gt.f32.partialorder %v730, 0.0
        %vm763 = vcmp.gt.f32.partialorder %v731, 0.0
        %vm764 = vcmp.gt.f32.partialorder %v732, 0.0
        %vm765 = vcmp.gt.f32.partialorder %v733, 0.0
        %vm766 = vcmp.gt.f32.partialorder %v734, 0.0
        %vm767 = vcmp.gt.f32.partialorder %v735, 0.0
        %vm768 = vcmp.gt.f32.partialorder %v736, 0.0
        %vm769 = vcmp.gt.f32.partialorder %v737, 0.0
        %vm770 = vcmp.gt.f32.partialorder %v738, 0.0
        %vm771 = vcmp.gt.f32.partialorder %v739, 0.0
        %vm772 = vcmp.gt.f32.partialorder %v740, 0.0
        %vm773 = vcmp.gt.f32.partialorder %v741, 0.0
        %vm774 = vcmp.gt.f32.partialorder %v742, 0.0
        %v775 = vmul.f32 %v711, 0.1
        %v776 = vmul.f32 %v712, 0.1
        %v777 = vmul.f32 %v713, 0.1
        %v778 = vmul.f32 %v714, 0.1
        %v779 = vmul.f32 %v715, 0.1
        %v780 = vmul.f32 %v716, 0.1
        %v781 = vmul.f32 %v717, 0.1
        %v782 = vmul.f32 %v718, 0.1
        %v783 = vmul.f32 %v719, 0.1
        %v784 = vmul.f32 %v720, 0.1
        %v785 = vmul.f32 %v721, 0.1
        %v786 = vmul.f32 %v722, 0.1
        %v787 = vmul.f32 %v723, 0.1
        %v788 = vmul.f32 %v724, 0.1
        %v789 = vmul.f32 %v725, 0.1
        %v790 = vmul.f32 %v726, 0.1
        %v791 = vmul.f32 %v727, 0.1
        %v792 = vmul.f32 %v728, 0.1
        %v793 = vmul.f32 %v729, 0.1
        %v794 = vmul.f32 %v730, 0.1
        %v795 = vmul.f32 %v731, 0.1
        %v796 = vmul.f32 %v732, 0.1
        %v797 = vmul.f32 %v733, 0.1
        %v798 = vmul.f32 %v734, 0.1
        %v799 = vmul.f32 %v735, 0.1
        %v800 = vmul.f32 %v736, 0.1
        %v801 = vmul.f32 %v737, 0.1
        %v802 = vmul.f32 %v738, 0.1
        %v803 = vmul.f32 %v739, 0.1
        %v804 = vmul.f32 %v740, 0.1
        %v805 = vmul.f32 %v741, 0.1
        %v806 = vmul.f32 %v742, 0.1
        %v807 = vsel %vm743, %v711, %v775
        %v808 = vsel %vm744, %v712, %v776
        %v809 = vsel %vm745, %v713, %v777
        %v810 = vsel %vm746, %v714, %v778
        %v811 = vsel %vm747, %v715, %v779
        %v812 = vsel %vm748, %v716, %v780
        %v813 = vsel %vm749, %v717, %v781
        %v814 = vsel %vm750, %v718, %v782
        %v815 = vsel %vm751, %v719, %v783
        %v816 = vsel %vm752, %v720, %v784
        %v817 = vsel %vm753, %v721, %v785
        %v818 = vsel %vm754, %v722, %v786
        %v819 = vsel %vm755, %v723, %v787
        %v820 = vsel %vm756, %v724, %v788
        %v821 = vsel %vm757, %v725, %v789
        %v822 = vsel %vm758, %v726, %v790
        %v823 = vsel %vm759, %v727, %v791
        %v824 = vsel %vm760, %v728, %v792
        %v825 = vsel %vm761, %v729, %v793
        %v826 = vsel %vm762, %v730, %v794
        %v827 = vsel %vm763, %v731, %v795
        %v828 = vsel %vm764, %v732, %v796
        %v829 = vsel %vm765, %v733, %v797
        %v830 = vsel %vm766, %v734, %v798
        %v831 = vsel %vm767, %v735, %v799
        %v832 = vsel %vm768, %v736, %v800
        %v833 = vsel %vm769, %v737, %v801
        %v834 = vsel %vm770, %v738, %v802
        %v835 = vsel %vm771, %v739, %v803
        %v836 = vsel %vm772, %v740, %v804
        %v837 = vsel %vm773, %v741, %v805
        %v838 = vsel %vm774, %v742, %v806
        %v839 = vpack.c.bf16 %v807, %v807
        %v840 = vpack.c.bf16 %v808, %v808
        %v841 = vpack.c.bf16 %v809, %v809
        %v842 = vpack.c.bf16 %v810, %v810
        %v843 = vpack.c.bf16 %v811, %v811
        %v844 = vpack.c.bf16 %v812, %v812
        %v845 = vpack.c.bf16 %v813, %v813
        %v846 = vpack.c.bf16 %v814, %v814
        %v847 = vpack.c.bf16 %v815, %v815
        %v848 = vpack.c.bf16 %v816, %v816
        %v849 = vpack.c.bf16 %v817, %v817
        %v850 = vpack.c.bf16 %v818, %v818
        %v851 = vpack.c.bf16 %v819, %v819
        %v852 = vpack.c.bf16 %v820, %v820
        %v853 = vpack.c.bf16 %v821, %v821
        %v854 = vpack.c.bf16 %v822, %v822
        %v855 = vpack.c.bf16 %v823, %v823
        %v856 = vpack.c.bf16 %v824, %v824
        %v857 = vpack.c.bf16 %v825, %v825
        %v858 = vpack.c.bf16 %v826, %v826
        %v859 = vpack.c.bf16 %v827, %v827
        %v860 = vpack.c.bf16 %v828, %v828
        %v861 = vpack.c.bf16 %v829, %v829
        %v862 = vpack.c.bf16 %v830, %v830
        %v863 = vpack.c.bf16 %v831, %v831
        %v864 = vpack.c.bf16 %v832, %v832
        %v865 = vpack.c.bf16 %v833, %v833
        %v866 = vpack.c.bf16 %v834, %v834
        %v867 = vpack.c.bf16 %v835, %v835
        %v868 = vpack.c.bf16 %v836, %v836
        %v869 = vpack.c.bf16 %v837, %v837
        %v870 = vpack.c.bf16 %v838, %v838
        %871 = vst [vmem:[%s257] sm:$0xf] %v839
        %872 = vst [vmem:[%s257 + $0x4] sm:$0xf] %v840
        %873 = vst [vmem:[%s257 + $0x8] sm:$0xf] %v841
        %874 = vst [vmem:[%s257 + $0xc] sm:$0xf] %v842
        %875 = vst [vmem:[%s257 + $0x10] sm:$0xf] %v843
        %876 = vst [vmem:[%s257 + $0x14] sm:$0xf] %v844
        %877 = vst [vmem:[%s257 + $0x18] sm:$0xf] %v845
        %878 = vst [vmem:[%s257 + $0x1c] sm:$0xf] %v846
        %879 = vst [vmem:[%s257 + $0x20] sm:$0xf] %v847
        %880 = vst [vmem:[%s257 + $0x24] sm:$0xf] %v848
        %881 = vst [vmem:[%s257 + $0x28] sm:$0xf] %v849
        %882 = vst [vmem:[%s257 + $0x2c] sm:$0xf] %v850
        %883 = vst [vmem:[%s257 + $0x30] sm:$0xf] %v851
        %884 = vst [vmem:[%s257 + $0x34] sm:$0xf] %v852
        %885 = vst [vmem:[%s257 + $0x38] sm:$0xf] %v853
        %886 = vst [vmem:[%s257 + $0x3c] sm:$0xf] %v854
        %887 = vst [vmem:[%s257 + $0x40] sm:$0xf] %v855
        %888 = vst [vmem:[%s257 + $0x44] sm:$0xf] %v856
        %889 = vst [vmem:[%s257 + $0x48] sm:$0xf] %v857
        %890 = vst [vmem:[%s257 + $0x4c] sm:$0xf] %v858
        %891 = vst [vmem:[%s257 + $0x50] sm:$0xf] %v859
        %892 = vst [vmem:[%s257 + $0x54] sm:$0xf] %v860
        %893 = vst [vmem:[%s257 + $0x58] sm:$0xf] %v861
        %894 = vst [vmem:[%s257 + $0x5c] sm:$0xf] %v862
        %895 = vst [vmem:[%s257 + $0x60] sm:$0xf] %v863
        %896 = vst [vmem:[%s257 + $0x64] sm:$0xf] %v864
        %897 = vst [vmem:[%s257 + $0x68] sm:$0xf] %v865
        %898 = vst [vmem:[%s257 + $0x6c] sm:$0xf] %v866
        %899 = vst [vmem:[%s257 + $0x70] sm:$0xf] %v867
        %900 = vst [vmem:[%s257 + $0x74] sm:$0xf] %v868
        %901 = vst [vmem:[%s257 + $0x78] sm:$0xf] %v869
        %902 = vst [vmem:[%s257 + $0x7c] sm:$0xf] %v870
      $region40: #{_lambda_.11} parent=31 // pred_fallthru
        _
      %s903 = smul.u32 32, %s19
      %p904 = scmp.lt.s32.totalorder %s903, 63
      %s905 = scalar_select %p904, %s903, 63
      %p906 = scmp.lt.s32.totalorder %s20, 0
      %s907 = scalar_select %p906, %s20, 0
      %s908 = sadd.s32 %s907, %s905
      %s909 = smul.addr %s908, 4
      %s910 = scalar_lea.vmem %s3, %s909
      // Predicated region
      $region41: #{_lambda_.11} parent=31 // pred_check
        %p911 = pneg %p135
      $region42: #{_lambda_.11} parent=31 // pred_check_branch
        %913 = sbr.rel (%p911) target = $region44
      $region43: #{_lambda_.11} parent=31 // pred_region
        %s914 = smul.u32 32, %s19
      $region44: #{_lambda_.11} parent=31 // pred_fallthru
        _
    $region32: #{_lambda_.11} parent=5 // pred_fallthru
      _
    %p915 = scmp.le.s32.totalorder 2, %s9
    // Predicated region
    $region45: #{_lambda_.11} parent=5 // pred_check
      %p916 = pneg %p915
    $region46: #{_lambda_.11} parent=5 // pred_check_branch
      %918 = sbr.rel (%p916) target = $region48
    $region47: #{_lambda_.11} parent=5 // pred_region
      %s919 = ssub.s32 %s9, 2
      // Predicated region
      $region49: #{_lambda_.11} parent=47 // pred_check
        %p920 = pneg %p141
      $region50: #{_lambda_.11} parent=47 // pred_check_branch
        %922 = sbr.rel (%p920) target = $region52
      $region51: #{_lambda_.11} parent=47 // pred_region
        %s923 = smul.u32 32, %s22
        %p924 = scmp.lt.s32.totalorder %s923, 63
        %s925 = scalar_select %p924, %s923, 63
        %p926 = scmp.lt.s32.totalorder %s23, 0
        %s927 = scalar_select %p926, %s23, 0
        %s928 = sadd.s32 %s927, %s925
        %s929 = smul.addr %s928, 4
        %s930 = scalar_lea.vmem %s3, %s929
      $region52: #{_lambda_.11} parent=47 // pred_fallthru
        _
    $region48: #{_lambda_.11} parent=5 // pred_fallthru
      _
  $region6: #{_lambda_.11} parent=0 // loop_footer
    %s13 = sadd.s32 1, %s9
  $region7: #{_lambda_.11} parent=0 // loop_footer_branch
    %8 = sbr.rel target = $region3
  $region8: #{_lambda_.11} parent=0 // loop_exit
    _

// kernel: _lambda_.12
$region0: #{_lambda_.12}
  #allocation0 [shape = 'u32[]', space=smem, size = 0x4, offset = 0x4, fixed_abs, tag = 'smem constant byte address 0x4 - core index']
  #allocation1 [shape = 'u32[72,128]{1,0:T(1,128)}', space=vmem, size = 0x9000, scoped, tag = 'internal scratch']
  #allocation2 [shape = 'f32[64,128]{1,0:T(8,128)}', space=vmem, size = 0x8000, scoped, tag = 'scratch operand']
  %s0 = inlined_call_operand.vmem [shape: bf16[128,128], index: 0, kind: input, shape index: {}]
  %s1 = inlined_call_operand.vmem [shape: bf16[128,128], index: 1, kind: input, shape index: {}]
  %s2 = inlined_call_operand.vmem [shape: f32[1,128], index: 2, kind: input, shape index: {}]
  %s3 = inlined_call_operand.vmem [shape: bf16[128,128], index: 3, kind: output, shape index: {}]
  %s4 = sld [smem:[#allocation0]]
  $region53: #{_lambda_.12} parent=0
    _
  %s6 = ssub.s32 1, %s4
  %s7 = scalar_select 0, %s6, %s4
  loop: start=0, step=1, limit=4
  $region2: #{_lambda_.12} parent=0 // loop_pre_header
    _
  $region3: #{_lambda_.12} parent=0 // loop_header
    %s9 = sphi 0, %s13
    %p10 = scmp.ge.s32.totalorder %s9, 4
    %s16 = sphi 0, %s35
    %s17 = sphi 0, %s31
    %s18 = sphi 0, %s27
    %s19 = sphi 0, %s16
    %s20 = sphi 0, %s17
    %s21 = sphi 0, %s18
    %s22 = sphi 0, %s19
    %s23 = sphi 0, %s20
    %s24 = sphi 0, %s21
    %s40 = sphi 0, %s42
    %s43 = sphi 0, %s40
    %s44 = sphi 0, %s43
    %s60 = sphi 0, %s44
    %s68 = sphi 0, %s70
    %s71 = sphi 0, %s68
    %s72 = sphi 0, %s71
    %s88 = sphi 0, %s72
    %s94 = sphi 0, %s96
    %s97 = sphi 0, %s94
    %s98 = sphi 0, %s97
    %s114 = sphi 0, %s98
    %s122 = sphi 0, %s124
    %s125 = sphi 0, %s122
    %s126 = sphi 0, %s125
    %s142 = sphi 0, %s126
  $region4: #{_lambda_.12} parent=0 // loop_header_branch
    %12 = sbr.rel (%p10) target = $region8
  $region5: #{_lambda_.12} parent=0 // loop_body
    %s14 = ssub.s32 %s9, 1
    %s15 = ssub.s32 %s9, 2
    %s25 = sadd.s32 1, %s18
    %p26 = scmp.ge.s32.totalorder %s25, 1
    %s27 = scalar_select %p26, 0, %s25
    %s28 = sadd.s32 1, %s17
    %s29 = scalar_select %p26, %s28, %s17
    %p30 = scmp.ge.s32.totalorder %s29, 1
    %s31 = scalar_select %p30, 0, %s29
    %s32 = sadd.s32 1, %s16
    %s33 = scalar_select %p30, %s32, %s16
    %p34 = scmp.ge.s32.totalorder %s33, 2
    %s35 = scalar_select %p34, 0, %s33
    %s36 = ssub.s32 %s16, %s35
    %s37 = ssub.s32 %s18, %s27
    %s38 = sor.u32 %s36, %s37
    %p39 = scmp.eq.s32.totalorder %s38, 0
    %s41 = sadd.s32 %s40, 1
    %s42 = scalar_select %p39, %s40, %s41
    %p45 = pneg %p39
    %p46 = scmp.eq.s32.totalorder %s9, 1
    %p47 = por %p45, %p46
    %p48 = scmp.ne.s32.totalorder %s40, %s43
    %p49 = scmp.eq.s32.totalorder %s9, 0
    %p50 = por %p48, %p49
    %p51 = scmp.ne.s32.totalorder %s40, %s43
    %p52 = scmp.eq.s32.totalorder %s14, 1
    %p53 = por %p51, %p52
    %p54 = scmp.ne.s32.totalorder %s43, %s44
    %p55 = scmp.eq.s32.totalorder %s14, 0
    %p56 = por %p54, %p55
    %p57 = scmp.ne.s32.totalorder %s43, %s44
    %p58 = scmp.eq.s32.totalorder %s15, 1
    %p59 = por %p57, %p58
    %p61 = scmp.ne.s32.totalorder %s44, %s60
    %p62 = scmp.eq.s32.totalorder %s15, 0
    %p63 = por %p61, %p62
    %s64 = ssub.s32 %s18, %s27
    %s65 = ssub.s32 %s17, %s31
    %s66 = sor.u32 %s64, %s65
    %p67 = scmp.eq.s32.totalorder %s66, 0
    %s69 = sadd.s32 %s68, 1
    %s70 = scalar_select %p67, %s68, %s69
    %p73 = pneg %p67
    %p74 = scmp.eq.s32.totalorder %s9, 1
    %p75 = por %p73, %p74
    %p76 = scmp.ne.s32.totalorder %s68, %s71
    %p77 = scmp.eq.s32.totalorder %s9, 0
    %p78 = por %p76, %p77
    %p79 = scmp.ne.s32.totalorder %s68, %s71
    %p80 = scmp.eq.s32.totalorder %s14, 1
    %p81 = por %p79, %p80
    %p82 = scmp.ne.s32.totalorder %s71, %s72
    %p83 = scmp.eq.s32.totalorder %s14, 0
    %p84 = por %p82, %p83
    %p85 = scmp.ne.s32.totalorder %s71, %s72
    %p86 = scmp.eq.s32.totalorder %s15, 1
    %p87 = por %p85, %p86
    %p89 = scmp.ne.s32.totalorder %s72, %s88
    %p90 = scmp.eq.s32.totalorder %s15, 0
    %p91 = por %p89, %p90
    %s92 = ssub.s32 %s17, %s31
    %p93 = scmp.eq.s32.totalorder %s92, 0
    %s95 = sadd.s32 %s94, 1
    %s96 = scalar_select %p93, %s94, %s95
    %p99 = pneg %p93
    %p100 = scmp.eq.s32.totalorder %s9, 1
    %p101 = por %p99, %p100
    %p102 = scmp.ne.s32.totalorder %s94, %s97
    %p103 = scmp.eq.s32.totalorder %s9, 0
    %p104 = por %p102, %p103
    %p105 = scmp.ne.s32.totalorder %s94, %s97
    %p106 = scmp.eq.s32.totalorder %s14, 1
    %p107 = por %p105, %p106
    %p108 = scmp.ne.s32.totalorder %s97, %s98
    %p109 = scmp.eq.s32.totalorder %s14, 0
    %p110 = por %p108, %p109
    %p111 = scmp.ne.s32.totalorder %s97, %s98
    %p112 = scmp.eq.s32.totalorder %s15, 1
    %p113 = por %p111, %p112
    %p115 = scmp.ne.s32.totalorder %s98, %s114
    %p116 = scmp.eq.s32.totalorder %s15, 0
    %p117 = por %p115, %p116
    %s118 = ssub.s32 %s16, %s35
    %s119 = ssub.s32 %s17, %s31
    %s120 = sor.u32 %s118, %s119
    %p121 = scmp.eq.s32.totalorder %s120, 0
    %s123 = sadd.s32 %s122, 1
    %s124 = scalar_select %p121, %s122, %s123
    %p127 = pneg %p121
    %p128 = scmp.eq.s32.totalorder %s9, 1
    %p129 = por %p127, %p128
    %p130 = scmp.ne.s32.totalorder %s122, %s125
    %p131 = scmp.eq.s32.totalorder %s9, 0
    %p132 = por %p130, %p131
    %p133 = scmp.ne.s32.totalorder %s122, %s125
    %p134 = scmp.eq.s32.totalorder %s14, 1
    %p135 = por %p133, %p134
    %p136 = scmp.ne.s32.totalorder %s125, %s126
    %p137 = scmp.eq.s32.totalorder %s14, 0
    %p138 = por %p136, %p137
    %p139 = scmp.ne.s32.totalorder %s125, %s126
    %p140 = scmp.eq.s32.totalorder %s15, 1
    %p141 = por %p139, %p140
    %p143 = scmp.ne.s32.totalorder %s126, %s142
    %p144 = scmp.eq.s32.totalorder %s15, 0
    %p145 = por %p143, %p144
    %p146 = scmp.le.s32.totalorder 1, %s9
    %p147 = scmp.lt.s32.totalorder %s9, 3
    %p148 = pnand %p146, %p147
    %p149 = pneg %p148
    // Predicated region
    $region9: #{_lambda_.12} parent=5 // pred_check
      _
    $region10: #{_lambda_.12} parent=5 // pred_check_branch
      %151 = sbr.rel (%p148) target = $region12
    $region11: #{_lambda_.12} parent=5 // pred_region
      %s152 = ssub.s32 %s9, 1
      // Predicated region
      $region13: #{_lambda_.12} parent=11 // pred_check
        %p153 = pneg %p84
      $region14: #{_lambda_.12} parent=11 // pred_check_branch
        %155 = sbr.rel (%p153) target = $region16
      $region15: #{_lambda_.12} parent=11 // pred_region
        %s156 = smul.u32 16, %s21
        %p157 = scmp.lt.s32.totalorder %s156, 15
        %s158 = scalar_select %p157, %s156, 15
        %p159 = scmp.lt.s32.totalorder %s20, 0
        %s160 = scalar_select %p159, %s20, 0
        %s161 = sadd.s32 %s160, %s158
        %s162 = smul.addr %s161, 4
        %s163 = scalar_lea.vmem %s1, %s162
        %s164 = smul.u32 16, %s21
      $region16: #{_lambda_.12} parent=11 // pred_fallthru
        _
      // Predicated region
      $region17: #{_lambda_.12} parent=11 // pred_check
        %p165 = pneg %p110
      $region18: #{_lambda_.12} parent=11 // pred_check_branch
        %167 = sbr.rel (%p165) target = $region20
      $region19: #{_lambda_.12} parent=11 // pred_region
        %p168 = scmp.lt.s32.totalorder %s20, 0
        %s169 = scalar_select %p168, %s20, 0
        %s170 = scalar_lea.vmem %s2, %s169
      $region20: #{_lambda_.12} parent=11 // pred_fallthru
        _
    $region12: #{_lambda_.12} parent=5 // pred_fallthru
      _
    %p171 = scmp.lt.s32.totalorder %s9, 2
    // Predicated region
    $region21: #{_lambda_.12} parent=5 // pred_check
      %p172 = pneg %p171
    $region22: #{_lambda_.12} parent=5 // pred_check_branch
      %174 = sbr.rel (%p172) target = $region24
    $region23: #{_lambda_.12} parent=5 // pred_region
      // Predicated region
      $region25: #{_lambda_.12} parent=23 // pred_check
        %p175 = pneg %p50
      $region26: #{_lambda_.12} parent=23 // pred_check_branch
        %177 = sbr.rel (%p175) target = $region28
      $region27: #{_lambda_.12} parent=23 // pred_region
        %s178 = smul.u32 8, %s16
        %p179 = scmp.lt.s32.totalorder %s178, 15
        %s180 = scalar_select %p179, %s178, 15
        %p181 = scmp.lt.s32.totalorder %s18, 0
        %s182 = scalar_select %p181, %s18, 0
        %s183 = sadd.s32 %s182, %s180
        %s184 = smul.addr %s183, 4
        %s185 = scalar_lea.vmem %s0, %s184
        %s186 = smul.u32 8, %s16
      $region28: #{_lambda_.12} parent=23 // pred_fallthru
        _
    $region24: #{_lambda_.12} parent=5 // pred_fallthru
      _
    %p187 = scmp.le.s32.totalorder 1, %s9
    %p188 = scmp.lt.s32.totalorder %s9, 3
    %p189 = pnand %p187, %p188
    %p190 = pneg %p189
    // Predicated region
    $region29: #{_lambda_.12} parent=5 // pred_check
      _
    $region30: #{_lambda_.12} parent=5 // pred_check_branch
      %192 = sbr.rel (%p189) target = $region32
    $region31: #{_lambda_.12} parent=5 // pred_region
      %s193 = ssub.s32 %s9, 1
      %s194 = smul.u32 8, %s19
      %p195 = scmp.lt.s32.totalorder %s194, 15
      %s196 = scalar_select %p195, %s194, 15
      %p197 = scmp.lt.s32.totalorder %s21, 0
      %s198 = scalar_select %p197, %s21, 0
      %s199 = sadd.s32 %s198, %s196
      %s200 = smul.addr %s199, 4
      %s201 = scalar_lea.vmem %s0, %s200
      %p202 = pneg %p56
      %p203 = pneg %p53
      %s204 = smul.u32 16, %s21
      %p205 = scmp.lt.s32.totalorder %s204, 15
      %s206 = scalar_select %p205, %s204, 15
      %p207 = scmp.lt.s32.totalorder %s20, 0
      %s208 = scalar_select %p207, %s20, 0
      %s209 = sadd.s32 %s208, %s206
      %s210 = smul.addr %s209, 4
      %s211 = scalar_lea.vmem %s1, %s210
      %p212 = pneg %p84
      %p213 = pneg %p81
      %p214 = scmp.lt.s32.totalorder %s20, 0
      %s215 = scalar_select %p214, %s20, 0
      %s216 = scalar_lea.vmem %s2, %s215
      %p217 = pneg %p110
      %p218 = pneg %p107
      %p219 = pneg %p138
      %p220 = pneg %p135
      %s221 = smul.u32 8, %s19
      %p222 = scmp.lt.s32.totalorder %s221, 15
      %s223 = scalar_select %p222, %s221, 15
      %p224 = scmp.lt.s32.totalorder %s20, 0
      %s225 = scalar_select %p224, %s20, 0
      %s226 = sadd.s32 %s225, %s223
      %s227 = smul.addr %s226, 4
      %s228 = scalar_lea.vmem %s3, %s227
      %s229 = smul.u32 8, %s19
      %p230 = scmp.lt.s32.totalorder %s229, 15
      %s231 = scalar_select %p230, %s229, 15
      %p232 = scmp.lt.s32.totalorder %s21, 0
      %s233 = scalar_select %p232, %s21, 0
      %s234 = sadd.s32 %s233, %s231
      %s235 = smul.addr %s234, 4
      %s236 = scalar_lea.vmem %s0, %s235
      %s237 = smul.u32 8, %s19
      %s238 = smul.u32 16, %s21
      %p239 = scmp.lt.s32.totalorder %s238, 15
      %s240 = scalar_select %p239, %s238, 15
      %p241 = scmp.lt.s32.totalorder %s20, 0
      %s242 = scalar_select %p241, %s20, 0
      %s243 = sadd.s32 %s242, %s240
      %s244 = smul.addr %s243, 4
      %s245 = scalar_lea.vmem %s1, %s244
      %s246 = smul.u32 16, %s21
      %p247 = scmp.lt.s32.totalorder %s20, 0
      %s248 = scalar_select %p247, %s20, 0
      %s249 = scalar_lea.vmem %s2, %s248
      %s250 = smul.u32 8, %s19
      %p251 = scmp.lt.s32.totalorder %s250, 15
      %s252 = scalar_select %p251, %s250, 15
      %p253 = scmp.lt.s32.totalorder %s20, 0
      %s254 = scalar_select %p253, %s20, 0
      %s255 = sadd.s32 %s254, %s252
      %s256 = smul.addr %s255, 4
      %s257 = scalar_lea.vmem %s3, %s256
      %s258 = smul.u32 8, %s19
      %p259 = scmp.eq.s32.totalorder %s21, 0
      // Predicated region
      $region33: #{_lambda_.12} parent=31 // pred_check
        %p260 = pneg %p259
      $region34: #{_lambda_.12} parent=31 // pred_check_branch
        %262 = sbr.rel (%p260) target = $region36
      $region35: #{_lambda_.12} parent=31 // pred_region
        %263 = vst [vmem:[#allocation2] sm:$0xff] 0.0
        %264 = vst [vmem:[#allocation2 + $0x8] sm:$0xff] 0.0
        %265 = vst [vmem:[#allocation2 + $0x10] sm:$0xff] 0.0
        %266 = vst [vmem:[#allocation2 + $0x18] sm:$0xff] 0.0
        %267 = vst [vmem:[#allocation2 + $0x20] sm:$0xff] 0.0
        %268 = vst [vmem:[#allocation2 + $0x28] sm:$0xff] 0.0
        %269 = vst [vmem:[#allocation2 + $0x30] sm:$0xff] 0.0
        %270 = vst [vmem:[#allocation2 + $0x38] sm:$0xff] 0.0
      $region36: #{_lambda_.12} parent=31 // pred_fallthru
        _
      %v271 = vld [vmem:[#allocation2] sm:$0xff]
      %v272 = vld [vmem:[#allocation2 + $0x8] sm:$0xff]
      %v273 = vld [vmem:[#allocation2 + $0x10] sm:$0xff]
      %v274 = vld [vmem:[#allocation2 + $0x18] sm:$0xff]
      %v275 = vld [vmem:[#allocation2 + $0x20] sm:$0xff]
      %v276 = vld [vmem:[#allocation2 + $0x28] sm:$0xff]
      %v277 = vld [vmem:[#allocation2 + $0x30] sm:$0xff]
      %v278 = vld [vmem:[#allocation2 + $0x38] sm:$0xff]
      %v279 = vld [vmem:[%s236] sm:$0xf]
      %v280 = vld [vmem:[%s236 + $0x4] sm:$0xf]
      %v281 = vld [vmem:[%s236 + $0x8] sm:$0xf]
      %v282 = vld [vmem:[%s236 + $0xc] sm:$0xf]
      %v283 = vld [vmem:[%s236 + $0x10] sm:$0xf]
      %v284 = vld [vmem:[%s236 + $0x14] sm:$0xf]
      %v285 = vld [vmem:[%s236 + $0x18] sm:$0xf]
      %v286 = vld [vmem:[%s236 + $0x1c] sm:$0xf]
      %v287 = vld [vmem:[%s245] sm:$0xf]
      %v288 = vld [vmem:[%s245 + $0x4] sm:$0xf]
      %v289 = vld [vmem:[%s245 + $0x8] sm:$0xf]
      %v290 = vld [vmem:[%s245 + $0xc] sm:$0xf]
      %v291 = vld [vmem:[%s245 + $0x10] sm:$0xf]
      %v292 = vld [vmem:[%s245 + $0x14] sm:$0xf]
      %v293 = vld [vmem:[%s245 + $0x18] sm:$0xf]
      %v294 = vld [vmem:[%s245 + $0x1c] sm:$0xf]
      %v295 = vld [vmem:[%s245 + $0x20] sm:$0xf]
      %v296 = vld [vmem:[%s245 + $0x24] sm:$0xf]
      %v297 = vld [vmem:[%s245 + $0x28] sm:$0xf]
      %v298 = vld [vmem:[%s245 + $0x2c] sm:$0xf]
      %v299 = vld [vmem:[%s245 + $0x30] sm:$0xf]
      %v300 = vld [vmem:[%s245 + $0x34] sm:$0xf]
      %v301 = vld [vmem:[%s245 + $0x38] sm:$0xf]
      %v302 = vld [vmem:[%s245 + $0x3c] sm:$0xf]
      %v311 = vunpack.c.l.b16 %v279
      %v312 = vunpack.c.l.b16 %v280
      %v313 = vunpack.c.l.b16 %v281
      %v314 = vunpack.c.l.b16 %v282
      %v315 = vunpack.c.l.b16 %v283
      %v316 = vunpack.c.l.b16 %v284
      %v317 = vunpack.c.l.b16 %v285
      %v318 = vunpack.c.l.b16 %v286
      %v319 = vpack.c.b16 %v312, %v311
      %v320 = vpack.c.b16 %v314, %v313
      %v321 = vpack.c.b16 %v316, %v315
      %v322 = vpack.c.b16 %v318, %v317
      %v343 = vunpack.c.l.b16 %v287
      %v344 = vunpack.c.l.b16 %v288
      %v345 = vunpack.c.l.b16 %v289
      %v346 = vunpack.c.l.b16 %v290
      %v347 = vunpack.c.l.b16 %v291
      %v348 = vunpack.c.l.b16 %v292
      %v349 = vunpack.c.l.b16 %v293
      %v350 = vunpack.c.l.b16 %v294
      %v351 = vunpack.c.l.b16 %v295
      %v352 = vunpack.c.l.b16 %v296
      %v353 = vunpack.c.l.b16 %v297
      %v354 = vunpack.c.l.b16 %v298
      %v355 = vunpack.c.l.b16 %v299
      %v356 = vunpack.c.l.b16 %v300
      %v357 = vunpack.c.l.b16 %v301
      %v358 = vunpack.c.l.b16 %v302
      %v359 = vpack.c.b16 %v344, %v343
      %v360 = vpack.c.b16 %v346, %v345
      %v361 = vpack.c.b16 %v348, %v347
      %v362 = vpack.c.b16 %v350, %v349
      %v363 = vpack.c.b16 %v352, %v351
      %v364 = vpack.c.b16 %v354, %v353
      %v365 = vpack.c.b16 %v356, %v355
      %v366 = vpack.c.b16 %v358, %v357
      %375 = vmatpush.bf16.msra.mxu0 %v366
      %376 = vmatpush.bf16.msra.mxu0 %v365
      %377 = vmatpush.bf16.msra.mxu0 %v364
      %378 = vmatpush.bf16.msra.mxu0 %v363
      %379 = vmatpush.bf16.msra.mxu0 %v362
      %380 = vmatpush.bf16.msra.mxu0 %v361
      %381 = vmatpush.bf16.msra.mxu0 %v360
      %382 = vmatpush.bf16.msra.mxu0 %v359
      %383 = vmatmul.bf16.gmra.mxu0 %v319
      %v384 = vpop.f32.mrf.mxu0
      %v385 = vadd.f32 0.0, %v384
      %v386 = vpop.f32.mrf.mxu0
      %v387 = vadd.f32 0.0, %v386
      %388 = vmatmul.bf16.gmra.mxu0 %v320
      %v389 = vpop.f32.mrf.mxu0
      %v390 = vadd.f32 0.0, %v389
      %v391 = vpop.f32.mrf.mxu0
      %v392 = vadd.f32 0.0, %v391
      %393 = vmatmul.bf16.gmra.mxu0 %v321
      %v394 = vpop.f32.mrf.mxu0
      %v395 = vadd.f32 0.0, %v394
      %v396 = vpop.f32.mrf.mxu0
      %v397 = vadd.f32 0.0, %v396
      %398 = vmatmul.bf16.gmra.mxu0 %v322
      %v399 = vpop.f32.mrf.mxu0
      %v400 = vadd.f32 0.0, %v399
      %v401 = vpop.f32.mrf.mxu0
      %v402 = vadd.f32 0.0, %v401
      %403 = vdwg.mxu0
      %v404 = vadd.f32 %v271, %v385
      %v405 = vadd.f32 %v272, %v387
      %v406 = vadd.f32 %v273, %v390
      %v407 = vadd.f32 %v274, %v392
      %v408 = vadd.f32 %v275, %v395
      %v409 = vadd.f32 %v276, %v397
      %v410 = vadd.f32 %v277, %v400
      %v411 = vadd.f32 %v278, %v402
      %412 = vst [vmem:[#allocation2] sm:$0xff] %v404
      %413 = vst [vmem:[#allocation2 + $0x8] sm:$0xff] %v405
      %414 = vst [vmem:[#allocation2 + $0x10] sm:$0xff] %v406
      %415 = vst [vmem:[#allocation2 + $0x18] sm:$0xff] %v407
      %416 = vst [vmem:[#allocation2 + $0x20] sm:$0xff] %v408
      %417 = vst [vmem:[#allocation2 + $0x28] sm:$0xff] %v409
      %418 = vst [vmem:[#allocation2 + $0x30] sm:$0xff] %v410
      %419 = vst [vmem:[#allocation2 + $0x38] sm:$0xff] %v411
      // Predicated region
      $region37: #{_lambda_.12} parent=31 // pred_check
        %p420 = pneg %p259
      $region38: #{_lambda_.12} parent=31 // pred_check_branch
        %422 = sbr.rel (%p420) target = $region40
      $region39: #{_lambda_.12} parent=31 // pred_region
        %v423 = vld [vmem:[#allocation2] sm:$0xff]
        %v424 = vld [vmem:[#allocation2 + $0x8] sm:$0xff]
        %v425 = vld [vmem:[#allocation2 + $0x10] sm:$0xff]
        %v426 = vld [vmem:[#allocation2 + $0x18] sm:$0xff]
        %v427 = vld [vmem:[#allocation2 + $0x20] sm:$0xff]
        %v428 = vld [vmem:[#allocation2 + $0x28] sm:$0xff]
        %v429 = vld [vmem:[#allocation2 + $0x30] sm:$0xff]
        %v430 = vld [vmem:[#allocation2 + $0x38] sm:$0xff]
        %v431 = vld [vmem:[%s249] sm:$0x1]
        %v433 = vperm.slane %v431, 0
        %v435 = vadd.f32 %v423, %v433
        %v436 = vadd.f32 %v424, %v433
        %v437 = vadd.f32 %v425, %v433
        %v438 = vadd.f32 %v426, %v433
        %v439 = vadd.f32 %v427, %v433
        %v440 = vadd.f32 %v428, %v433
        %v441 = vadd.f32 %v429, %v433
        %v442 = vadd.f32 %v430, %v433
        %vm443 = vcmp.gt.f32.partialorder %v435, 0.0
        %vm444 = vcmp.gt.f32.partialorder %v436, 0.0
        %vm445 = vcmp.gt.f32.partialorder %v437, 0.0
        %vm446 = vcmp.gt.f32.partialorder %v438, 0.0
        %vm447 = vcmp.gt.f32.partialorder %v439, 0.0
        %vm448 = vcmp.gt.f32.partialorder %v440, 0.0
        %vm449 = vcmp.gt.f32.partialorder %v441, 0.0
        %vm450 = vcmp.gt.f32.partialorder %v442, 0.0
        %v451 = vmul.f32 %v435, 0.1
        %v452 = vmul.f32 %v436, 0.1
        %v453 = vmul.f32 %v437, 0.1
        %v454 = vmul.f32 %v438, 0.1
        %v455 = vmul.f32 %v439, 0.1
        %v456 = vmul.f32 %v440, 0.1
        %v457 = vmul.f32 %v441, 0.1
        %v458 = vmul.f32 %v442, 0.1
        %v459 = vsel %vm443, %v435, %v451
        %v460 = vsel %vm444, %v436, %v452
        %v461 = vsel %vm445, %v437, %v453
        %v462 = vsel %vm446, %v438, %v454
        %v463 = vsel %vm447, %v439, %v455
        %v464 = vsel %vm448, %v440, %v456
        %v465 = vsel %vm449, %v441, %v457
        %v466 = vsel %vm450, %v442, %v458
        %v467 = vpack.c.bf16 %v459, %v459
        %v468 = vpack.c.bf16 %v460, %v460
        %v469 = vpack.c.bf16 %v461, %v461
        %v470 = vpack.c.bf16 %v462, %v462
        %v471 = vpack.c.bf16 %v463, %v463
        %v472 = vpack.c.bf16 %v464, %v464
        %v473 = vpack.c.bf16 %v465, %v465
        %v474 = vpack.c.bf16 %v466, %v466
        %475 = vst [vmem:[%s257] sm:$0xf] %v467
        %476 = vst [vmem:[%s257 + $0x4] sm:$0xf] %v468
        %477 = vst [vmem:[%s257 + $0x8] sm:$0xf] %v469
        %478 = vst [vmem:[%s257 + $0xc] sm:$0xf] %v470
        %479 = vst [vmem:[%s257 + $0x10] sm:$0xf] %v471
        %480 = vst [vmem:[%s257 + $0x14] sm:$0xf] %v472
        %481 = vst [vmem:[%s257 + $0x18] sm:$0xf] %v473
        %482 = vst [vmem:[%s257 + $0x1c] sm:$0xf] %v474
      $region40: #{_lambda_.12} parent=31 // pred_fallthru
        _
      %s483 = smul.u32 8, %s19
      %p484 = scmp.lt.s32.totalorder %s483, 15
      %s485 = scalar_select %p484, %s483, 15
      %p486 = scmp.lt.s32.totalorder %s20, 0
      %s487 = scalar_select %p486, %s20, 0
      %s488 = sadd.s32 %s487, %s485
      %s489 = smul.addr %s488, 4
      %s490 = scalar_lea.vmem %s3, %s489
      // Predicated region
      $region41: #{_lambda_.12} parent=31 // pred_check
        %p491 = pneg %p135
      $region42: #{_lambda_.12} parent=31 // pred_check_branch
        %493 = sbr.rel (%p491) target = $region44
      $region43: #{_lambda_.12} parent=31 // pred_region
        %s494 = smul.u32 8, %s19
      $region44: #{_lambda_.12} parent=31 // pred_fallthru
        _
    $region32: #{_lambda_.12} parent=5 // pred_fallthru
      _
    %p495 = scmp.le.s32.totalorder 2, %s9
    // Predicated region
    $region45: #{_lambda_.12} parent=5 // pred_check
      %p496 = pneg %p495
    $region46: #{_lambda_.12} parent=5 // pred_check_branch
      %498 = sbr.rel (%p496) target = $region48
    $region47: #{_lambda_.12} parent=5 // pred_region
      %s499 = ssub.s32 %s9, 2
      // Predicated region
      $region49: #{_lambda_.12} parent=47 // pred_check
        %p500 = pneg %p141
      $region50: #{_lambda_.12} parent=47 // pred_check_branch
        %502 = sbr.rel (%p500) target = $region52
      $region51: #{_lambda_.12} parent=47 // pred_region
        %s503 = smul.u32 8, %s22
        %p504 = scmp.lt.s32.totalorder %s503, 15
        %s505 = scalar_select %p504, %s503, 15
        %p506 = scmp.lt.s32.totalorder %s23, 0
        %s507 = scalar_select %p506, %s23, 0
        %s508 = sadd.s32 %s507, %s505
        %s509 = smul.addr %s508, 4
        %s510 = scalar_lea.vmem %s3, %s509
      $region52: #{_lambda_.12} parent=47 // pred_fallthru
        _
    $region48: #{_lambda_.12} parent=5 // pred_fallthru
      _
  $region6: #{_lambda_.12} parent=0 // loop_footer
    %s13 = sadd.s32 1, %s9
  $region7: #{_lambda_.12} parent=0 // loop_footer_branch
    %8 = sbr.rel target = $region3
  $region8: #{_lambda_.12} parent=0 // loop_exit
    _

// kernel: _lambda_.14
$region0: #{_lambda_.14}
  #allocation0 [shape = 'u32[]', space=smem, size = 0x4, offset = 0x4, fixed_abs, tag = 'smem constant byte address 0x4 - core index']
  #allocation1 [shape = 'u32[72,128]{1,0:T(1,128)}', space=vmem, size = 0x9000, scoped, tag = 'internal scratch']
  #allocation2 [shape = 'f32[64,128]{1,0:T(8,128)}', space=vmem, size = 0x8000, scoped, tag = 'scratch operand']
  %s0 = inlined_call_operand.vmem [shape: bf16[128,128], index: 0, kind: input, shape index: {}]
  %s1 = inlined_call_operand.vmem [shape: bf16[128,128], index: 1, kind: input, shape index: {}]
  %s2 = inlined_call_operand.vmem [shape: f32[1,128], index: 2, kind: input, shape index: {}]
  %s3 = inlined_call_operand.vmem [shape: bf16[128,128], index: 3, kind: input, shape index: {}]
  %s4 = inlined_call_operand.vmem [shape: bf16[128,128], index: 4, kind: output, shape index: {}]
  %s5 = sld [smem:[#allocation0]]
  $region57: #{_lambda_.14} parent=0
    _
  %s7 = ssub.s32 1, %s5
  %s8 = scalar_select 0, %s7, %s5
  loop: start=0, step=1, limit=4
  $region2: #{_lambda_.14} parent=0 // loop_pre_header
    _
  $region3: #{_lambda_.14} parent=0 // loop_header
    %s10 = sphi 0, %s14
    %p11 = scmp.ge.s32.totalorder %s10, 4
    %s17 = sphi 0, %s36
    %s18 = sphi 0, %s32
    %s19 = sphi 0, %s28
    %s20 = sphi 0, %s17
    %s21 = sphi 0, %s18
    %s22 = sphi 0, %s19
    %s23 = sphi 0, %s20
    %s24 = sphi 0, %s21
    %s25 = sphi 0, %s22
    %s41 = sphi 0, %s43
    %s44 = sphi 0, %s41
    %s45 = sphi 0, %s44
    %s61 = sphi 0, %s45
    %s69 = sphi 0, %s71
    %s72 = sphi 0, %s69
    %s73 = sphi 0, %s72
    %s89 = sphi 0, %s73
    %s95 = sphi 0, %s97
    %s98 = sphi 0, %s95
    %s99 = sphi 0, %s98
    %s115 = sphi 0, %s99
    %s123 = sphi 0, %s125
    %s126 = sphi 0, %s123
    %s127 = sphi 0, %s126
    %s143 = sphi 0, %s127
    %s151 = sphi 0, %s153
    %s154 = sphi 0, %s151
    %s155 = sphi 0, %s154
    %s171 = sphi 0, %s155
  $region4: #{_lambda_.14} parent=0 // loop_header_branch
    %13 = sbr.rel (%p11) target = $region8
  $region5: #{_lambda_.14} parent=0 // loop_body
    %s15 = ssub.s32 %s10, 1
    %s16 = ssub.s32 %s10, 2
    %s26 = sadd.s32 1, %s19
    %p27 = scmp.ge.s32.totalorder %s26, 1
    %s28 = scalar_select %p27, 0, %s26
    %s29 = sadd.s32 1, %s18
    %s30 = scalar_select %p27, %s29, %s18
    %p31 = scmp.ge.s32.totalorder %s30, 1
    %s32 = scalar_select %p31, 0, %s30
    %s33 = sadd.s32 1, %s17
    %s34 = scalar_select %p31, %s33, %s17
    %p35 = scmp.ge.s32.totalorder %s34, 2
    %s36 = scalar_select %p35, 0, %s34
    %s37 = ssub.s32 %s17, %s36
    %s38 = ssub.s32 %s19, %s28
    %s39 = sor.u32 %s37, %s38
    %p40 = scmp.eq.s32.totalorder %s39, 0
    %s42 = sadd.s32 %s41, 1
    %s43 = scalar_select %p40, %s41, %s42
    %p46 = pneg %p40
    %p47 = scmp.eq.s32.totalorder %s10, 1
    %p48 = por %p46, %p47
    %p49 = scmp.ne.s32.totalorder %s41, %s44
    %p50 = scmp.eq.s32.totalorder %s10, 0
    %p51 = por %p49, %p50
    %p52 = scmp.ne.s32.totalorder %s41, %s44
    %p53 = scmp.eq.s32.totalorder %s15, 1
    %p54 = por %p52, %p53
    %p55 = scmp.ne.s32.totalorder %s44, %s45
    %p56 = scmp.eq.s32.totalorder %s15, 0
    %p57 = por %p55, %p56
    %p58 = scmp.ne.s32.totalorder %s44, %s45
    %p59 = scmp.eq.s32.totalorder %s16, 1
    %p60 = por %p58, %p59
    %p62 = scmp.ne.s32.totalorder %s45, %s61
    %p63 = scmp.eq.s32.totalorder %s16, 0
    %p64 = por %p62, %p63
    %s65 = ssub.s32 %s19, %s28
    %s66 = ssub.s32 %s18, %s32
    %s67 = sor.u32 %s65, %s66
    %p68 = scmp.eq.s32.totalorder %s67, 0
    %s70 = sadd.s32 %s69, 1
    %s71 = scalar_select %p68, %s69, %s70
    %p74 = pneg %p68
    %p75 = scmp.eq.s32.totalorder %s10, 1
    %p76 = por %p74, %p75
    %p77 = scmp.ne.s32.totalorder %s69, %s72
    %p78 = scmp.eq.s32.totalorder %s10, 0
    %p79 = por %p77, %p78
    %p80 = scmp.ne.s32.totalorder %s69, %s72
    %p81 = scmp.eq.s32.totalorder %s15, 1
    %p82 = por %p80, %p81
    %p83 = scmp.ne.s32.totalorder %s72, %s73
    %p84 = scmp.eq.s32.totalorder %s15, 0
    %p85 = por %p83, %p84
    %p86 = scmp.ne.s32.totalorder %s72, %s73
    %p87 = scmp.eq.s32.totalorder %s16, 1
    %p88 = por %p86, %p87
    %p90 = scmp.ne.s32.totalorder %s73, %s89
    %p91 = scmp.eq.s32.totalorder %s16, 0
    %p92 = por %p90, %p91
    %s93 = ssub.s32 %s18, %s32
    %p94 = scmp.eq.s32.totalorder %s93, 0
    %s96 = sadd.s32 %s95, 1
    %s97 = scalar_select %p94, %s95, %s96
    %p100 = pneg %p94
    %p101 = scmp.eq.s32.totalorder %s10, 1
    %p102 = por %p100, %p101
    %p103 = scmp.ne.s32.totalorder %s95, %s98
    %p104 = scmp.eq.s32.totalorder %s10, 0
    %p105 = por %p103, %p104
    %p106 = scmp.ne.s32.totalorder %s95, %s98
    %p107 = scmp.eq.s32.totalorder %s15, 1
    %p108 = por %p106, %p107
    %p109 = scmp.ne.s32.totalorder %s98, %s99
    %p110 = scmp.eq.s32.totalorder %s15, 0
    %p111 = por %p109, %p110
    %p112 = scmp.ne.s32.totalorder %s98, %s99
    %p113 = scmp.eq.s32.totalorder %s16, 1
    %p114 = por %p112, %p113
    %p116 = scmp.ne.s32.totalorder %s99, %s115
    %p117 = scmp.eq.s32.totalorder %s16, 0
    %p118 = por %p116, %p117
    %s119 = ssub.s32 %s17, %s36
    %s120 = ssub.s32 %s18, %s32
    %s121 = sor.u32 %s119, %s120
    %p122 = scmp.eq.s32.totalorder %s121, 0
    %s124 = sadd.s32 %s123, 1
    %s125 = scalar_select %p122, %s123, %s124
    %p128 = pneg %p122
    %p129 = scmp.eq.s32.totalorder %s10, 1
    %p130 = por %p128, %p129
    %p131 = scmp.ne.s32.totalorder %s123, %s126
    %p132 = scmp.eq.s32.totalorder %s10, 0
    %p133 = por %p131, %p132
    %p134 = scmp.ne.s32.totalorder %s123, %s126
    %p135 = scmp.eq.s32.totalorder %s15, 1
    %p136 = por %p134, %p135
    %p137 = scmp.ne.s32.totalorder %s126, %s127
    %p138 = scmp.eq.s32.totalorder %s15, 0
    %p139 = por %p137, %p138
    %p140 = scmp.ne.s32.totalorder %s126, %s127
    %p141 = scmp.eq.s32.totalorder %s16, 1
    %p142 = por %p140, %p141
    %p144 = scmp.ne.s32.totalorder %s127, %s143
    %p145 = scmp.eq.s32.totalorder %s16, 0
    %p146 = por %p144, %p145
    %s147 = ssub.s32 %s17, %s36
    %s148 = ssub.s32 %s18, %s32
    %s149 = sor.u32 %s147, %s148
    %p150 = scmp.eq.s32.totalorder %s149, 0
    %s152 = sadd.s32 %s151, 1
    %s153 = scalar_select %p150, %s151, %s152
    %p156 = pneg %p150
    %p157 = scmp.eq.s32.totalorder %s10, 1
    %p158 = por %p156, %p157
    %p159 = scmp.ne.s32.totalorder %s151, %s154
    %p160 = scmp.eq.s32.totalorder %s10, 0
    %p161 = por %p159, %p160
    %p162 = scmp.ne.s32.totalorder %s151, %s154
    %p163 = scmp.eq.s32.totalorder %s15, 1
    %p164 = por %p162, %p163
    %p165 = scmp.ne.s32.totalorder %s154, %s155
    %p166 = scmp.eq.s32.totalorder %s15, 0
    %p167 = por %p165, %p166
    %p168 = scmp.ne.s32.totalorder %s154, %s155
    %p169 = scmp.eq.s32.totalorder %s16, 1
    %p170 = por %p168, %p169
    %p172 = scmp.ne.s32.totalorder %s155, %s171
    %p173 = scmp.eq.s32.totalorder %s16, 0
    %p174 = por %p172, %p173
    %p175 = scmp.le.s32.totalorder 1, %s10
    %p176 = scmp.lt.s32.totalorder %s10, 3
    %p177 = pnand %p175, %p176
    %p178 = pneg %p177
    // Predicated region
    $region9: #{_lambda_.14} parent=5 // pred_check
      _
    $region10: #{_lambda_.14} parent=5 // pred_check_branch
      %180 = sbr.rel (%p177) target = $region12
    $region11: #{_lambda_.14} parent=5 // pred_region
      %s181 = ssub.s32 %s10, 1
      // Predicated region
      $region13: #{_lambda_.14} parent=11 // pred_check
        %p182 = pneg %p85
      $region14: #{_lambda_.14} parent=11 // pred_check_branch
        %184 = sbr.rel (%p182) target = $region16
      $region15: #{_lambda_.14} parent=11 // pred_region
        %s185 = smul.u32 16, %s22
        %p186 = scmp.lt.s32.totalorder %s185, 15
        %s187 = scalar_select %p186, %s185, 15
        %p188 = scmp.lt.s32.totalorder %s21, 0
        %s189 = scalar_select %p188, %s21, 0
        %s190 = sadd.s32 %s189, %s187
        %s191 = smul.addr %s190, 4
        %s192 = scalar_lea.vmem %s1, %s191
        %s193 = smul.u32 16, %s22
      $region16: #{_lambda_.14} parent=11 // pred_fallthru
        _
      // Predicated region
      $region17: #{_lambda_.14} parent=11 // pred_check
        %p194 = pneg %p111
      $region18: #{_lambda_.14} parent=11 // pred_check_branch
        %196 = sbr.rel (%p194) target = $region20
      $region19: #{_lambda_.14} parent=11 // pred_region
        %p197 = scmp.lt.s32.totalorder %s21, 0
        %s198 = scalar_select %p197, %s21, 0
        %s199 = scalar_lea.vmem %s2, %s198
      $region20: #{_lambda_.14} parent=11 // pred_fallthru
        _
    $region12: #{_lambda_.14} parent=5 // pred_fallthru
      _
    %p200 = scmp.lt.s32.totalorder %s10, 2
    // Predicated region
    $region21: #{_lambda_.14} parent=5 // pred_check
      %p201 = pneg %p200
    $region22: #{_lambda_.14} parent=5 // pred_check_branch
      %203 = sbr.rel (%p201) target = $region24
    $region23: #{_lambda_.14} parent=5 // pred_region
      // Predicated region
      $region25: #{_lambda_.14} parent=23 // pred_check
        %p204 = pneg %p51
      $region26: #{_lambda_.14} parent=23 // pred_check_branch
        %206 = sbr.rel (%p204) target = $region28
      $region27: #{_lambda_.14} parent=23 // pred_region
        %s207 = smul.u32 8, %s17
        %p208 = scmp.lt.s32.totalorder %s207, 15
        %s209 = scalar_select %p208, %s207, 15
        %p210 = scmp.lt.s32.totalorder %s19, 0
        %s211 = scalar_select %p210, %s19, 0
        %s212 = sadd.s32 %s211, %s209
        %s213 = smul.addr %s212, 4
        %s214 = scalar_lea.vmem %s0, %s213
        %s215 = smul.u32 8, %s17
      $region28: #{_lambda_.14} parent=23 // pred_fallthru
        _
      // Predicated region
      $region29: #{_lambda_.14} parent=23 // pred_check
        %p216 = pneg %p133
      $region30: #{_lambda_.14} parent=23 // pred_check_branch
        %218 = sbr.rel (%p216) target = $region32
      $region31: #{_lambda_.14} parent=23 // pred_region
        %s219 = smul.u32 8, %s17
        %p220 = scmp.lt.s32.totalorder %s219, 15
        %s221 = scalar_select %p220, %s219, 15
        %p222 = scmp.lt.s32.totalorder %s18, 0
        %s223 = scalar_select %p222, %s18, 0
        %s224 = sadd.s32 %s223, %s221
        %s225 = smul.addr %s224, 4
        %s226 = scalar_lea.vmem %s3, %s225
        %s227 = smul.u32 8, %s17
      $region32: #{_lambda_.14} parent=23 // pred_fallthru
        _
    $region24: #{_lambda_.14} parent=5 // pred_fallthru
      _
    %p228 = scmp.le.s32.totalorder 1, %s10
    %p229 = scmp.lt.s32.totalorder %s10, 3
    %p230 = pnand %p228, %p229
    %p231 = pneg %p230
    // Predicated region
    $region33: #{_lambda_.14} parent=5 // pred_check
      _
    $region34: #{_lambda_.14} parent=5 // pred_check_branch
      %233 = sbr.rel (%p230) target = $region36
    $region35: #{_lambda_.14} parent=5 // pred_region
      %s234 = ssub.s32 %s10, 1
      %s235 = smul.u32 8, %s20
      %p236 = scmp.lt.s32.totalorder %s235, 15
      %s237 = scalar_select %p236, %s235, 15
      %p238 = scmp.lt.s32.totalorder %s22, 0
      %s239 = scalar_select %p238, %s22, 0
      %s240 = sadd.s32 %s239, %s237
      %s241 = smul.addr %s240, 4
      %s242 = scalar_lea.vmem %s0, %s241
      %p243 = pneg %p57
      %p244 = pneg %p54
      %s245 = smul.u32 16, %s22
      %p246 = scmp.lt.s32.totalorder %s245, 15
      %s247 = scalar_select %p246, %s245, 15
      %p248 = scmp.lt.s32.totalorder %s21, 0
      %s249 = scalar_select %p248, %s21, 0
      %s250 = sadd.s32 %s249, %s247
      %s251 = smul.addr %s250, 4
      %s252 = scalar_lea.vmem %s1, %s251
      %p253 = pneg %p85
      %p254 = pneg %p82
      %p255 = scmp.lt.s32.totalorder %s21, 0
      %s256 = scalar_select %p255, %s21, 0
      %s257 = scalar_lea.vmem %s2, %s256
      %p258 = pneg %p111
      %p259 = pneg %p108
      %s260 = smul.u32 8, %s20
      %p261 = scmp.lt.s32.totalorder %s260, 15
      %s262 = scalar_select %p261, %s260, 15
      %p263 = scmp.lt.s32.totalorder %s21, 0
      %s264 = scalar_select %p263, %s21, 0
      %s265 = sadd.s32 %s264, %s262
      %s266 = smul.addr %s265, 4
      %s267 = scalar_lea.vmem %s3, %s266
      %p268 = pneg %p139
      %p269 = pneg %p136
      %p270 = pneg %p167
      %p271 = pneg %p164
      %s272 = smul.u32 8, %s20
      %p273 = scmp.lt.s32.totalorder %s272, 15
      %s274 = scalar_select %p273, %s272, 15
      %p275 = scmp.lt.s32.totalorder %s21, 0
      %s276 = scalar_select %p275, %s21, 0
      %s277 = sadd.s32 %s276, %s274
      %s278 = smul.addr %s277, 4
      %s279 = scalar_lea.vmem %s4, %s278
      %s280 = smul.u32 8, %s20
      %p281 = scmp.lt.s32.totalorder %s280, 15
      %s282 = scalar_select %p281, %s280, 15
      %p283 = scmp.lt.s32.totalorder %s22, 0
      %s284 = scalar_select %p283, %s22, 0
      %s285 = sadd.s32 %s284, %s282
      %s286 = smul.addr %s285, 4
      %s287 = scalar_lea.vmem %s0, %s286
      %s288 = smul.u32 8, %s20
      %s289 = smul.u32 16, %s22
      %p290 = scmp.lt.s32.totalorder %s289, 15
      %s291 = scalar_select %p290, %s289, 15
      %p292 = scmp.lt.s32.totalorder %s21, 0
      %s293 = scalar_select %p292, %s21, 0
      %s294 = sadd.s32 %s293, %s291
      %s295 = smul.addr %s294, 4
      %s296 = scalar_lea.vmem %s1, %s295
      %s297 = smul.u32 16, %s22
      %p298 = scmp.lt.s32.totalorder %s21, 0
      %s299 = scalar_select %p298, %s21, 0
      %s300 = scalar_lea.vmem %s2, %s299
      %s301 = smul.u32 8, %s20
      %p302 = scmp.lt.s32.totalorder %s301, 15
      %s303 = scalar_select %p302, %s301, 15
      %p304 = scmp.lt.s32.totalorder %s21, 0
      %s305 = scalar_select %p304, %s21, 0
      %s306 = sadd.s32 %s305, %s303
      %s307 = smul.addr %s306, 4
      %s308 = scalar_lea.vmem %s3, %s307
      %s309 = smul.u32 8, %s20
      %s310 = smul.u32 8, %s20
      %p311 = scmp.lt.s32.totalorder %s310, 15
      %s312 = scalar_select %p311, %s310, 15
      %p313 = scmp.lt.s32.totalorder %s21, 0
      %s314 = scalar_select %p313, %s21, 0
      %s315 = sadd.s32 %s314, %s312
      %s316 = smul.addr %s315, 4
      %s317 = scalar_lea.vmem %s4, %s316
      %s318 = smul.u32 8, %s20
      %p319 = scmp.eq.s32.totalorder %s22, 0
      // Predicated region
      $region37: #{_lambda_.14} parent=35 // pred_check
        %p320 = pneg %p319
      $region38: #{_lambda_.14} parent=35 // pred_check_branch
        %322 = sbr.rel (%p320) target = $region40
      $region39: #{_lambda_.14} parent=35 // pred_region
        %323 = vst [vmem:[#allocation2] sm:$0xff] 0.0
        %324 = vst [vmem:[#allocation2 + $0x8] sm:$0xff] 0.0
        %325 = vst [vmem:[#allocation2 + $0x10] sm:$0xff] 0.0
        %326 = vst [vmem:[#allocation2 + $0x18] sm:$0xff] 0.0
        %327 = vst [vmem:[#allocation2 + $0x20] sm:$0xff] 0.0
        %328 = vst [vmem:[#allocation2 + $0x28] sm:$0xff] 0.0
        %329 = vst [vmem:[#allocation2 + $0x30] sm:$0xff] 0.0
        %330 = vst [vmem:[#allocation2 + $0x38] sm:$0xff] 0.0
      $region40: #{_lambda_.14} parent=35 // pred_fallthru
        _
      %v331 = vld [vmem:[#allocation2] sm:$0xff]
      %v332 = vld [vmem:[#allocation2 + $0x8] sm:$0xff]
      %v333 = vld [vmem:[#allocation2 + $0x10] sm:$0xff]
      %v334 = vld [vmem:[#allocation2 + $0x18] sm:$0xff]
      %v335 = vld [vmem:[#allocation2 + $0x20] sm:$0xff]
      %v336 = vld [vmem:[#allocation2 + $0x28] sm:$0xff]
      %v337 = vld [vmem:[#allocation2 + $0x30] sm:$0xff]
      %v338 = vld [vmem:[#allocation2 + $0x38] sm:$0xff]
      %v339 = vld [vmem:[%s287] sm:$0xf]
      %v340 = vld [vmem:[%s287 + $0x4] sm:$0xf]
      %v341 = vld [vmem:[%s287 + $0x8] sm:$0xf]
      %v342 = vld [vmem:[%s287 + $0xc] sm:$0xf]
      %v343 = vld [vmem:[%s287 + $0x10] sm:$0xf]
      %v344 = vld [vmem:[%s287 + $0x14] sm:$0xf]
      %v345 = vld [vmem:[%s287 + $0x18] sm:$0xf]
      %v346 = vld [vmem:[%s287 + $0x1c] sm:$0xf]
      %v347 = vld [vmem:[%s296] sm:$0xf]
      %v348 = vld [vmem:[%s296 + $0x4] sm:$0xf]
      %v349 = vld [vmem:[%s296 + $0x8] sm:$0xf]
      %v350 = vld [vmem:[%s296 + $0xc] sm:$0xf]
      %v351 = vld [vmem:[%s296 + $0x10] sm:$0xf]
      %v352 = vld [vmem:[%s296 + $0x14] sm:$0xf]
      %v353 = vld [vmem:[%s296 + $0x18] sm:$0xf]
      %v354 = vld [vmem:[%s296 + $0x1c] sm:$0xf]
      %v355 = vld [vmem:[%s296 + $0x20] sm:$0xf]
      %v356 = vld [vmem:[%s296 + $0x24] sm:$0xf]
      %v357 = vld [vmem:[%s296 + $0x28] sm:$0xf]
      %v358 = vld [vmem:[%s296 + $0x2c] sm:$0xf]
      %v359 = vld [vmem:[%s296 + $0x30] sm:$0xf]
      %v360 = vld [vmem:[%s296 + $0x34] sm:$0xf]
      %v361 = vld [vmem:[%s296 + $0x38] sm:$0xf]
      %v362 = vld [vmem:[%s296 + $0x3c] sm:$0xf]
      %v371 = vunpack.c.l.b16 %v339
      %v372 = vunpack.c.l.b16 %v340
      %v373 = vunpack.c.l.b16 %v341
      %v374 = vunpack.c.l.b16 %v342
      %v375 = vunpack.c.l.b16 %v343
      %v376 = vunpack.c.l.b16 %v344
      %v377 = vunpack.c.l.b16 %v345
      %v378 = vunpack.c.l.b16 %v346
      %v379 = vpack.c.b16 %v372, %v371
      %v380 = vpack.c.b16 %v374, %v373
      %v381 = vpack.c.b16 %v376, %v375
      %v382 = vpack.c.b16 %v378, %v377
      %v403 = vunpack.c.l.b16 %v347
      %v404 = vunpack.c.l.b16 %v348
      %v405 = vunpack.c.l.b16 %v349
      %v406 = vunpack.c.l.b16 %v350
      %v407 = vunpack.c.l.b16 %v351
      %v408 = vunpack.c.l.b16 %v352
      %v409 = vunpack.c.l.b16 %v353
      %v410 = vunpack.c.l.b16 %v354
      %v411 = vunpack.c.l.b16 %v355
      %v412 = vunpack.c.l.b16 %v356
      %v413 = vunpack.c.l.b16 %v357
      %v414 = vunpack.c.l.b16 %v358
      %v415 = vunpack.c.l.b16 %v359
      %v416 = vunpack.c.l.b16 %v360
      %v417 = vunpack.c.l.b16 %v361
      %v418 = vunpack.c.l.b16 %v362
      %v419 = vpack.c.b16 %v404, %v403
      %v420 = vpack.c.b16 %v406, %v405
      %v421 = vpack.c.b16 %v408, %v407
      %v422 = vpack.c.b16 %v410, %v409
      %v423 = vpack.c.b16 %v412, %v411
      %v424 = vpack.c.b16 %v414, %v413
      %v425 = vpack.c.b16 %v416, %v415
      %v426 = vpack.c.b16 %v418, %v417
      %435 = vmatpush.bf16.msra.mxu0 %v426
      %436 = vmatpush.bf16.msra.mxu0 %v425
      %437 = vmatpush.bf16.msra.mxu0 %v424
      %438 = vmatpush.bf16.msra.mxu0 %v423
      %439 = vmatpush.bf16.msra.mxu0 %v422
      %440 = vmatpush.bf16.msra.mxu0 %v421
      %441 = vmatpush.bf16.msra.mxu0 %v420
      %442 = vmatpush.bf16.msra.mxu0 %v419
      %443 = vmatmul.bf16.gmra.mxu0 %v379
      %v444 = vpop.f32.mrf.mxu0
      %v445 = vadd.f32 0.0, %v444
      %v446 = vpop.f32.mrf.mxu0
      %v447 = vadd.f32 0.0, %v446
      %448 = vmatmul.bf16.gmra.mxu0 %v380
      %v449 = vpop.f32.mrf.mxu0
      %v450 = vadd.f32 0.0, %v449
      %v451 = vpop.f32.mrf.mxu0
      %v452 = vadd.f32 0.0, %v451
      %453 = vmatmul.bf16.gmra.mxu0 %v381
      %v454 = vpop.f32.mrf.mxu0
      %v455 = vadd.f32 0.0, %v454
      %v456 = vpop.f32.mrf.mxu0
      %v457 = vadd.f32 0.0, %v456
      %458 = vmatmul.bf16.gmra.mxu0 %v382
      %v459 = vpop.f32.mrf.mxu0
      %v460 = vadd.f32 0.0, %v459
      %v461 = vpop.f32.mrf.mxu0
      %v462 = vadd.f32 0.0, %v461
      %463 = vdwg.mxu0
      %v464 = vadd.f32 %v331, %v445
      %v465 = vadd.f32 %v332, %v447
      %v466 = vadd.f32 %v333, %v450
      %v467 = vadd.f32 %v334, %v452
      %v468 = vadd.f32 %v335, %v455
      %v469 = vadd.f32 %v336, %v457
      %v470 = vadd.f32 %v337, %v460
      %v471 = vadd.f32 %v338, %v462
      %472 = vst [vmem:[#allocation2] sm:$0xff] %v464
      %473 = vst [vmem:[#allocation2 + $0x8] sm:$0xff] %v465
      %474 = vst [vmem:[#allocation2 + $0x10] sm:$0xff] %v466
      %475 = vst [vmem:[#allocation2 + $0x18] sm:$0xff] %v467
      %476 = vst [vmem:[#allocation2 + $0x20] sm:$0xff] %v468
      %477 = vst [vmem:[#allocation2 + $0x28] sm:$0xff] %v469
      %478 = vst [vmem:[#allocation2 + $0x30] sm:$0xff] %v470
      %479 = vst [vmem:[#allocation2 + $0x38] sm:$0xff] %v471
      // Predicated region
      $region41: #{_lambda_.14} parent=35 // pred_check
        %p480 = pneg %p319
      $region42: #{_lambda_.14} parent=35 // pred_check_branch
        %482 = sbr.rel (%p480) target = $region44
      $region43: #{_lambda_.14} parent=35 // pred_region
        %v483 = vld [vmem:[#allocation2] sm:$0xff]
        %v484 = vld [vmem:[#allocation2 + $0x8] sm:$0xff]
        %v485 = vld [vmem:[#allocation2 + $0x10] sm:$0xff]
        %v486 = vld [vmem:[#allocation2 + $0x18] sm:$0xff]
        %v487 = vld [vmem:[#allocation2 + $0x20] sm:$0xff]
        %v488 = vld [vmem:[#allocation2 + $0x28] sm:$0xff]
        %v489 = vld [vmem:[#allocation2 + $0x30] sm:$0xff]
        %v490 = vld [vmem:[#allocation2 + $0x38] sm:$0xff]
        %v491 = vld [vmem:[%s300] sm:$0x1]
        %v493 = vperm.slane %v491, 0
        %v495 = vadd.f32 %v483, %v493
        %v496 = vadd.f32 %v484, %v493
        %v497 = vadd.f32 %v485, %v493
        %v498 = vadd.f32 %v486, %v493
        %v499 = vadd.f32 %v487, %v493
        %v500 = vadd.f32 %v488, %v493
        %v501 = vadd.f32 %v489, %v493
        %v502 = vadd.f32 %v490, %v493
        %vm503 = vcmp.gt.f32.partialorder %v495, 0.0
        %vm504 = vcmp.gt.f32.partialorder %v496, 0.0
        %vm505 = vcmp.gt.f32.partialorder %v497, 0.0
        %vm506 = vcmp.gt.f32.partialorder %v498, 0.0
        %vm507 = vcmp.gt.f32.partialorder %v499, 0.0
        %vm508 = vcmp.gt.f32.partialorder %v500, 0.0
        %vm509 = vcmp.gt.f32.partialorder %v501, 0.0
        %vm510 = vcmp.gt.f32.partialorder %v502, 0.0
        %v511 = vmul.f32 %v495, 0.1
        %v512 = vmul.f32 %v496, 0.1
        %v513 = vmul.f32 %v497, 0.1
        %v514 = vmul.f32 %v498, 0.1
        %v515 = vmul.f32 %v499, 0.1
        %v516 = vmul.f32 %v500, 0.1
        %v517 = vmul.f32 %v501, 0.1
        %v518 = vmul.f32 %v502, 0.1
        %v519 = vsel %vm503, %v495, %v511
        %v520 = vsel %vm504, %v496, %v512
        %v521 = vsel %vm505, %v497, %v513
        %v522 = vsel %vm506, %v498, %v514
        %v523 = vsel %vm507, %v499, %v515
        %v524 = vsel %vm508, %v500, %v516
        %v525 = vsel %vm509, %v501, %v517
        %v526 = vsel %vm510, %v502, %v518
        %v527 = vld [vmem:[%s308] sm:$0xf]
        %v528 = vld [vmem:[%s308 + $0x4] sm:$0xf]
        %v529 = vld [vmem:[%s308 + $0x8] sm:$0xf]
        %v530 = vld [vmem:[%s308 + $0xc] sm:$0xf]
        %v531 = vld [vmem:[%s308 + $0x10] sm:$0xf]
        %v532 = vld [vmem:[%s308 + $0x14] sm:$0xf]
        %v533 = vld [vmem:[%s308 + $0x18] sm:$0xf]
        %v534 = vld [vmem:[%s308 + $0x1c] sm:$0xf]
        %v535 = vunpack.c.l.bf16 %v527
        %v536 = vunpack.c.l.bf16 %v528
        %v537 = vunpack.c.l.bf16 %v529
        %v538 = vunpack.c.l.bf16 %v530
        %v539 = vunpack.c.l.bf16 %v531
        %v540 = vunpack.c.l.bf16 %v532
        %v541 = vunpack.c.l.bf16 %v533
        %v542 = vunpack.c.l.bf16 %v534
        %v543 = vadd.f32 %v519, %v535
        %v544 = vadd.f32 %v520, %v536
        %v545 = vadd.f32 %v521, %v537
        %v546 = vadd.f32 %v522, %v538
        %v547 = vadd.f32 %v523, %v539
        %v548 = vadd.f32 %v524, %v540
        %v549 = vadd.f32 %v525, %v541
        %v550 = vadd.f32 %v526, %v542
        %v551 = vpack.c.bf16 %v543, %v543
        %v552 = vpack.c.bf16 %v544, %v544
        %v553 = vpack.c.bf16 %v545, %v545
        %v554 = vpack.c.bf16 %v546, %v546
        %v555 = vpack.c.bf16 %v547, %v547
        %v556 = vpack.c.bf16 %v548, %v548
        %v557 = vpack.c.bf16 %v549, %v549
        %v558 = vpack.c.bf16 %v550, %v550
        %559 = vst [vmem:[%s317] sm:$0xf] %v551
        %560 = vst [vmem:[%s317 + $0x4] sm:$0xf] %v552
        %561 = vst [vmem:[%s317 + $0x8] sm:$0xf] %v553
        %562 = vst [vmem:[%s317 + $0xc] sm:$0xf] %v554
        %563 = vst [vmem:[%s317 + $0x10] sm:$0xf] %v555
        %564 = vst [vmem:[%s317 + $0x14] sm:$0xf] %v556
        %565 = vst [vmem:[%s317 + $0x18] sm:$0xf] %v557
        %566 = vst [vmem:[%s317 + $0x1c] sm:$0xf] %v558
      $region44: #{_lambda_.14} parent=35 // pred_fallthru
        _
      %s567 = smul.u32 8, %s20
      %p568 = scmp.lt.s32.totalorder %s567, 15
      %s569 = scalar_select %p568, %s567, 15
      %p570 = scmp.lt.s32.totalorder %s21, 0
      %s571 = scalar_select %p570, %s21, 0
      %s572 = sadd.s32 %s571, %s569
      %s573 = smul.addr %s572, 4
      %s574 = scalar_lea.vmem %s4, %s573
      // Predicated region
      $region45: #{_lambda_.14} parent=35 // pred_check
        %p575 = pneg %p164
      $region46: #{_lambda_.14} parent=35 // pred_check_branch
        %577 = sbr.rel (%p575) target = $region48
      $region47: #{_lambda_.14} parent=35 // pred_region
        %s578 = smul.u32 8, %s20
      $region48: #{_lambda_.14} parent=35 // pred_fallthru
        _
    $region36: #{_lambda_.14} parent=5 // pred_fallthru
      _
    %p579 = scmp.le.s32.totalorder 2, %s10
    // Predicated region
    $region49: #{_lambda_.14} parent=5 // pred_check
      %p580 = pneg %p579
    $region50: #{_lambda_.14} parent=5 // pred_check_branch
      %582 = sbr.rel (%p580) target = $region52
    $region51: #{_lambda_.14} parent=5 // pred_region
      %s583 = ssub.s32 %s10, 2
      // Predicated region
      $region53: #{_lambda_.14} parent=51 // pred_check
        %p584 = pneg %p170
      $region54: #{_lambda_.14} parent=51 // pred_check_branch
        %586 = sbr.rel (%p584) target = $region56
      $region55: #{_lambda_.14} parent=51 // pred_region
        %s587 = smul.u32 8, %s23
        %p588 = scmp.lt.s32.totalorder %s587, 15
        %s589 = scalar_select %p588, %s587, 15
        %p590 = scmp.lt.s32.totalorder %s24, 0
        %s591 = scalar_select %p590, %s24, 0
        %s592 = sadd.s32 %s591, %s589
        %s593 = smul.addr %s592, 4
        %s594 = scalar_lea.vmem %s4, %s593
      $region56: #{_lambda_.14} parent=51 // pred_fallthru
        _
    $region52: #{_lambda_.14} parent=5 // pred_fallthru
      _
  $region6: #{_lambda_.14} parent=0 // loop_footer
    %s14 = sadd.s32 1, %s10
  $region7: #{_lambda_.14} parent=0 // loop_footer_branch
    %9 = sbr.rel target = $region3
  $region8: #{_lambda_.14} parent=0 // loop_exit
    _

// kernel: _lambda_.15
$region0: #{_lambda_.15}
  #allocation0 [shape = 'u32[]', space=smem, size = 0x4, offset = 0x4, fixed_abs, tag = 'smem constant byte address 0x4 - core index']
  #allocation1 [shape = 'u32[72,128]{1,0:T(1,128)}', space=vmem, size = 0x9000, scoped, tag = 'internal scratch']
  #allocation2 [shape = 'f32[16,128]{1,0:T(8,128)}', space=vmem, size = 0x2000, scoped, tag = 'scratch operand']
  %s0 = inlined_call_operand.vmem [shape: bf16[32,256], index: 0, kind: input, shape index: {}]
  %s1 = inlined_call_operand.vmem [shape: bf16[256,128], index: 1, kind: input, shape index: {}]
  %s2 = inlined_call_operand.vmem [shape: f32[1,128], index: 2, kind: input, shape index: {}]
  %s3 = inlined_call_operand.vmem [shape: bf16[32,128], index: 3, kind: output, shape index: {}]
  %s4 = sld [smem:[#allocation0]]
  $region53: #{_lambda_.15} parent=0
    _
  %s6 = ssub.s32 1, %s4
  %s7 = scalar_select 0, %s6, %s4
  loop: start=0, step=1, limit=4
  $region2: #{_lambda_.15} parent=0 // loop_pre_header
    _
  $region3: #{_lambda_.15} parent=0 // loop_header
    %s9 = sphi 0, %s13
    %p10 = scmp.ge.s32.totalorder %s9, 4
    %s16 = sphi 0, %s35
    %s17 = sphi 0, %s31
    %s18 = sphi 0, %s27
    %s19 = sphi 0, %s16
    %s20 = sphi 0, %s17
    %s21 = sphi 0, %s18
    %s22 = sphi 0, %s19
    %s23 = sphi 0, %s20
    %s24 = sphi 0, %s21
    %s40 = sphi 0, %s42
    %s43 = sphi 0, %s40
    %s44 = sphi 0, %s43
    %s60 = sphi 0, %s44
    %s68 = sphi 0, %s70
    %s71 = sphi 0, %s68
    %s72 = sphi 0, %s71
    %s88 = sphi 0, %s72
    %s94 = sphi 0, %s96
    %s97 = sphi 0, %s94
    %s98 = sphi 0, %s97
    %s114 = sphi 0, %s98
    %s122 = sphi 0, %s124
    %s125 = sphi 0, %s122
    %s126 = sphi 0, %s125
    %s142 = sphi 0, %s126
  $region4: #{_lambda_.15} parent=0 // loop_header_branch
    %12 = sbr.rel (%p10) target = $region8
  $region5: #{_lambda_.15} parent=0 // loop_body
    %s14 = ssub.s32 %s9, 1
    %s15 = ssub.s32 %s9, 2
    %s25 = sadd.s32 1, %s18
    %p26 = scmp.ge.s32.totalorder %s25, 1
    %s27 = scalar_select %p26, 0, %s25
    %s28 = sadd.s32 1, %s17
    %s29 = scalar_select %p26, %s28, %s17
    %p30 = scmp.ge.s32.totalorder %s29, 1
    %s31 = scalar_select %p30, 0, %s29
    %s32 = sadd.s32 1, %s16
    %s33 = scalar_select %p30, %s32, %s16
    %p34 = scmp.ge.s32.totalorder %s33, 2
    %s35 = scalar_select %p34, 0, %s33
    %s36 = ssub.s32 %s16, %s35
    %s37 = ssub.s32 %s18, %s27
    %s38 = sor.u32 %s36, %s37
    %p39 = scmp.eq.s32.totalorder %s38, 0
    %s41 = sadd.s32 %s40, 1
    %s42 = scalar_select %p39, %s40, %s41
    %p45 = pneg %p39
    %p46 = scmp.eq.s32.totalorder %s9, 1
    %p47 = por %p45, %p46
    %p48 = scmp.ne.s32.totalorder %s40, %s43
    %p49 = scmp.eq.s32.totalorder %s9, 0
    %p50 = por %p48, %p49
    %p51 = scmp.ne.s32.totalorder %s40, %s43
    %p52 = scmp.eq.s32.totalorder %s14, 1
    %p53 = por %p51, %p52
    %p54 = scmp.ne.s32.totalorder %s43, %s44
    %p55 = scmp.eq.s32.totalorder %s14, 0
    %p56 = por %p54, %p55
    %p57 = scmp.ne.s32.totalorder %s43, %s44
    %p58 = scmp.eq.s32.totalorder %s15, 1
    %p59 = por %p57, %p58
    %p61 = scmp.ne.s32.totalorder %s44, %s60
    %p62 = scmp.eq.s32.totalorder %s15, 0
    %p63 = por %p61, %p62
    %s64 = ssub.s32 %s18, %s27
    %s65 = ssub.s32 %s17, %s31
    %s66 = sor.u32 %s64, %s65
    %p67 = scmp.eq.s32.totalorder %s66, 0
    %s69 = sadd.s32 %s68, 1
    %s70 = scalar_select %p67, %s68, %s69
    %p73 = pneg %p67
    %p74 = scmp.eq.s32.totalorder %s9, 1
    %p75 = por %p73, %p74
    %p76 = scmp.ne.s32.totalorder %s68, %s71
    %p77 = scmp.eq.s32.totalorder %s9, 0
    %p78 = por %p76, %p77
    %p79 = scmp.ne.s32.totalorder %s68, %s71
    %p80 = scmp.eq.s32.totalorder %s14, 1
    %p81 = por %p79, %p80
    %p82 = scmp.ne.s32.totalorder %s71, %s72
    %p83 = scmp.eq.s32.totalorder %s14, 0
    %p84 = por %p82, %p83
    %p85 = scmp.ne.s32.totalorder %s71, %s72
    %p86 = scmp.eq.s32.totalorder %s15, 1
    %p87 = por %p85, %p86
    %p89 = scmp.ne.s32.totalorder %s72, %s88
    %p90 = scmp.eq.s32.totalorder %s15, 0
    %p91 = por %p89, %p90
    %s92 = ssub.s32 %s17, %s31
    %p93 = scmp.eq.s32.totalorder %s92, 0
    %s95 = sadd.s32 %s94, 1
    %s96 = scalar_select %p93, %s94, %s95
    %p99 = pneg %p93
    %p100 = scmp.eq.s32.totalorder %s9, 1
    %p101 = por %p99, %p100
    %p102 = scmp.ne.s32.totalorder %s94, %s97
    %p103 = scmp.eq.s32.totalorder %s9, 0
    %p104 = por %p102, %p103
    %p105 = scmp.ne.s32.totalorder %s94, %s97
    %p106 = scmp.eq.s32.totalorder %s14, 1
    %p107 = por %p105, %p106
    %p108 = scmp.ne.s32.totalorder %s97, %s98
    %p109 = scmp.eq.s32.totalorder %s14, 0
    %p110 = por %p108, %p109
    %p111 = scmp.ne.s32.totalorder %s97, %s98
    %p112 = scmp.eq.s32.totalorder %s15, 1
    %p113 = por %p111, %p112
    %p115 = scmp.ne.s32.totalorder %s98, %s114
    %p116 = scmp.eq.s32.totalorder %s15, 0
    %p117 = por %p115, %p116
    %s118 = ssub.s32 %s16, %s35
    %s119 = ssub.s32 %s17, %s31
    %s120 = sor.u32 %s118, %s119
    %p121 = scmp.eq.s32.totalorder %s120, 0
    %s123 = sadd.s32 %s122, 1
    %s124 = scalar_select %p121, %s122, %s123
    %p127 = pneg %p121
    %p128 = scmp.eq.s32.totalorder %s9, 1
    %p129 = por %p127, %p128
    %p130 = scmp.ne.s32.totalorder %s122, %s125
    %p131 = scmp.eq.s32.totalorder %s9, 0
    %p132 = por %p130, %p131
    %p133 = scmp.ne.s32.totalorder %s122, %s125
    %p134 = scmp.eq.s32.totalorder %s14, 1
    %p135 = por %p133, %p134
    %p136 = scmp.ne.s32.totalorder %s125, %s126
    %p137 = scmp.eq.s32.totalorder %s14, 0
    %p138 = por %p136, %p137
    %p139 = scmp.ne.s32.totalorder %s125, %s126
    %p140 = scmp.eq.s32.totalorder %s15, 1
    %p141 = por %p139, %p140
    %p143 = scmp.ne.s32.totalorder %s126, %s142
    %p144 = scmp.eq.s32.totalorder %s15, 0
    %p145 = por %p143, %p144
    %p146 = scmp.le.s32.totalorder 1, %s9
    %p147 = scmp.lt.s32.totalorder %s9, 3
    %p148 = pnand %p146, %p147
    %p149 = pneg %p148
    // Predicated region
    $region9: #{_lambda_.15} parent=5 // pred_check
      _
    $region10: #{_lambda_.15} parent=5 // pred_check_branch
      %151 = sbr.rel (%p148) target = $region12
    $region11: #{_lambda_.15} parent=5 // pred_region
      %s152 = ssub.s32 %s9, 1
      // Predicated region
      $region13: #{_lambda_.15} parent=11 // pred_check
        %p153 = pneg %p84
      $region14: #{_lambda_.15} parent=11 // pred_check_branch
        %155 = sbr.rel (%p153) target = $region16
      $region15: #{_lambda_.15} parent=11 // pred_region
        %s156 = smul.u32 32, %s21
        %p157 = scmp.lt.s32.totalorder %s156, 31
        %s158 = scalar_select %p157, %s156, 31
        %p159 = scmp.lt.s32.totalorder %s20, 0
        %s160 = scalar_select %p159, %s20, 0
        %s161 = sadd.s32 %s160, %s158
        %s162 = smul.addr %s161, 4
        %s163 = scalar_lea.vmem %s1, %s162
        %s164 = smul.u32 32, %s21
      $region16: #{_lambda_.15} parent=11 // pred_fallthru
        _
      // Predicated region
      $region17: #{_lambda_.15} parent=11 // pred_check
        %p165 = pneg %p110
      $region18: #{_lambda_.15} parent=11 // pred_check_branch
        %167 = sbr.rel (%p165) target = $region20
      $region19: #{_lambda_.15} parent=11 // pred_region
        %p168 = scmp.lt.s32.totalorder %s20, 0
        %s169 = scalar_select %p168, %s20, 0
        %s170 = scalar_lea.vmem %s2, %s169
      $region20: #{_lambda_.15} parent=11 // pred_fallthru
        _
    $region12: #{_lambda_.15} parent=5 // pred_fallthru
      _
    %p171 = scmp.lt.s32.totalorder %s9, 2
    // Predicated region
    $region21: #{_lambda_.15} parent=5 // pred_check
      %p172 = pneg %p171
    $region22: #{_lambda_.15} parent=5 // pred_check_branch
      %174 = sbr.rel (%p172) target = $region24
    $region23: #{_lambda_.15} parent=5 // pred_region
      // Predicated region
      $region25: #{_lambda_.15} parent=23 // pred_check
        %p175 = pneg %p50
      $region26: #{_lambda_.15} parent=23 // pred_check_branch
        %177 = sbr.rel (%p175) target = $region28
      $region27: #{_lambda_.15} parent=23 // pred_region
        %s178 = smul.u32 2, %s16
        %s179 = smul.u32 2, %s18
        %p180 = scmp.lt.s32.totalorder %s178, 3
        %s181 = scalar_select %p180, %s178, 3
        %p182 = scmp.lt.s32.totalorder %s179, 1
        %s183 = scalar_select %p182, %s179, 1
        %s184 = smul.addr %s181, 2
        %s185 = sadd.s32 %s183, %s184
        %s186 = smul.addr %s185, 4
        %s187 = scalar_lea.vmem %s0, %s186
        %s188 = smul.u32 2, %s16
        %s189 = smul.u32 2, %s18
      $region28: #{_lambda_.15} parent=23 // pred_fallthru
        _
    $region24: #{_lambda_.15} parent=5 // pred_fallthru
      _
    %p190 = scmp.le.s32.totalorder 1, %s9
    %p191 = scmp.lt.s32.totalorder %s9, 3
    %p192 = pnand %p190, %p191
    %p193 = pneg %p192
    // Predicated region
    $region29: #{_lambda_.15} parent=5 // pred_check
      _
    $region30: #{_lambda_.15} parent=5 // pred_check_branch
      %195 = sbr.rel (%p192) target = $region32
    $region31: #{_lambda_.15} parent=5 // pred_region
      %s196 = ssub.s32 %s9, 1
      %s197 = smul.u32 2, %s19
      %s198 = smul.u32 2, %s21
      %p199 = scmp.lt.s32.totalorder %s197, 3
      %s200 = scalar_select %p199, %s197, 3
      %p201 = scmp.lt.s32.totalorder %s198, 1
      %s202 = scalar_select %p201, %s198, 1
      %s203 = smul.addr %s200, 2
      %s204 = sadd.s32 %s202, %s203
      %s205 = smul.addr %s204, 4
      %s206 = scalar_lea.vmem %s0, %s205
      %p207 = pneg %p56
      %p208 = pneg %p53
      %s209 = smul.u32 32, %s21
      %p210 = scmp.lt.s32.totalorder %s209, 31
      %s211 = scalar_select %p210, %s209, 31
      %p212 = scmp.lt.s32.totalorder %s20, 0
      %s213 = scalar_select %p212, %s20, 0
      %s214 = sadd.s32 %s213, %s211
      %s215 = smul.addr %s214, 4
      %s216 = scalar_lea.vmem %s1, %s215
      %p217 = pneg %p84
      %p218 = pneg %p81
      %p219 = scmp.lt.s32.totalorder %s20, 0
      %s220 = scalar_select %p219, %s20, 0
      %s221 = scalar_lea.vmem %s2, %s220
      %p222 = pneg %p110
      %p223 = pneg %p107
      %p224 = pneg %p138
      %p225 = pneg %p135
      %s226 = smul.u32 2, %s19
      %p227 = scmp.lt.s32.totalorder %s226, 3
      %s228 = scalar_select %p227, %s226, 3
      %p229 = scmp.lt.s32.totalorder %s20, 0
      %s230 = scalar_select %p229, %s20, 0
      %s231 = sadd.s32 %s230, %s228
      %s232 = smul.addr %s231, 4
      %s233 = scalar_lea.vmem %s3, %s232
      %s234 = smul.u32 2, %s19
      %s235 = smul.u32 2, %s21
      %p236 = scmp.lt.s32.totalorder %s234, 3
      %s237 = scalar_select %p236, %s234, 3
      %p238 = scmp.lt.s32.totalorder %s235, 1
      %s239 = scalar_select %p238, %s235, 1
      %s240 = smul.addr %s237, 2
      %s241 = sadd.s32 %s239, %s240
      %s242 = smul.addr %s241, 4
      %s243 = scalar_lea.vmem %s0, %s242
      %s244 = smul.u32 2, %s19
      %s245 = smul.u32 2, %s21
      %s246 = smul.u32 32, %s21
      %p247 = scmp.lt.s32.totalorder %s246, 31
      %s248 = scalar_select %p247, %s246, 31
      %p249 = scmp.lt.s32.totalorder %s20, 0
      %s250 = scalar_select %p249, %s20, 0
      %s251 = sadd.s32 %s250, %s248
      %s252 = smul.addr %s251, 4
      %s253 = scalar_lea.vmem %s1, %s252
      %s254 = smul.u32 32, %s21
      %p255 = scmp.lt.s32.totalorder %s20, 0
      %s256 = scalar_select %p255, %s20, 0
      %s257 = scalar_lea.vmem %s2, %s256
      %s258 = smul.u32 2, %s19
      %p259 = scmp.lt.s32.totalorder %s258, 3
      %s260 = scalar_select %p259, %s258, 3
      %p261 = scmp.lt.s32.totalorder %s20, 0
      %s262 = scalar_select %p261, %s20, 0
      %s263 = sadd.s32 %s262, %s260
      %s264 = smul.addr %s263, 4
      %s265 = scalar_lea.vmem %s3, %s264
      %s266 = smul.u32 2, %s19
      %p267 = scmp.eq.s32.totalorder %s21, 0
      // Predicated region
      $region33: #{_lambda_.15} parent=31 // pred_check
        %p268 = pneg %p267
      $region34: #{_lambda_.15} parent=31 // pred_check_branch
        %270 = sbr.rel (%p268) target = $region36
      $region35: #{_lambda_.15} parent=31 // pred_region
        %271 = vst [vmem:[#allocation2] sm:$0xff] 0.0
        %272 = vst [vmem:[#allocation2 + $0x8] sm:$0xff] 0.0
      $region36: #{_lambda_.15} parent=31 // pred_fallthru
        _
      %v273 = vld [vmem:[#allocation2] sm:$0xff]
      %v274 = vld [vmem:[#allocation2 + $0x8] sm:$0xff]
      %v275 = vld [vmem:[%s243] sm:$0xff]
      %v276 = vld [vmem:[%s243 + $0x8] sm:$0xff]
      %v277 = vld [vmem:[%s253] sm:$0xf]
      %v278 = vld [vmem:[%s253 + $0x4] sm:$0xf]
      %v279 = vld [vmem:[%s253 + $0x8] sm:$0xf]
      %v280 = vld [vmem:[%s253 + $0xc] sm:$0xf]
      %v281 = vld [vmem:[%s253 + $0x10] sm:$0xf]
      %v282 = vld [vmem:[%s253 + $0x14] sm:$0xf]
      %v283 = vld [vmem:[%s253 + $0x18] sm:$0xf]
      %v284 = vld [vmem:[%s253 + $0x1c] sm:$0xf]
      %v285 = vld [vmem:[%s253 + $0x20] sm:$0xf]
      %v286 = vld [vmem:[%s253 + $0x24] sm:$0xf]
      %v287 = vld [vmem:[%s253 + $0x28] sm:$0xf]
      %v288 = vld [vmem:[%s253 + $0x2c] sm:$0xf]
      %v289 = vld [vmem:[%s253 + $0x30] sm:$0xf]
      %v290 = vld [vmem:[%s253 + $0x34] sm:$0xf]
      %v291 = vld [vmem:[%s253 + $0x38] sm:$0xf]
      %v292 = vld [vmem:[%s253 + $0x3c] sm:$0xf]
      %v293 = vld [vmem:[%s253 + $0x40] sm:$0xf]
      %v294 = vld [vmem:[%s253 + $0x44] sm:$0xf]
      %v295 = vld [vmem:[%s253 + $0x48] sm:$0xf]
      %v296 = vld [vmem:[%s253 + $0x4c] sm:$0xf]
      %v297 = vld [vmem:[%s253 + $0x50] sm:$0xf]
      %v298 = vld [vmem:[%s253 + $0x54] sm:$0xf]
      %v299 = vld [vmem:[%s253 + $0x58] sm:$0xf]
      %v300 = vld [vmem:[%s253 + $0x5c] sm:$0xf]
      %v301 = vld [vmem:[%s253 + $0x60] sm:$0xf]
      %v302 = vld [vmem:[%s253 + $0x64] sm:$0xf]
      %v303 = vld [vmem:[%s253 + $0x68] sm:$0xf]
      %v304 = vld [vmem:[%s253 + $0x6c] sm:$0xf]
      %v305 = vld [vmem:[%s253 + $0x70] sm:$0xf]
      %v306 = vld [vmem:[%s253 + $0x74] sm:$0xf]
      %v307 = vld [vmem:[%s253 + $0x78] sm:$0xf]
      %v308 = vld [vmem:[%s253 + $0x7c] sm:$0xf]
      %v311 = vunpack.c.l.b16 %v275
      %v312 = vunpack.c.h.b16 %v275
      %v313 = vunpack.c.l.b16 %v276
      %v314 = vunpack.c.h.b16 %v276
      %v315 = vpack.c.b16 %v313, %v311
      %v316 = vpack.c.b16 %v314, %v312
      %v351 = vunpack.c.l.b16 %v277
      %v352 = vunpack.c.l.b16 %v278
      %v353 = vunpack.c.l.b16 %v279
      %v354 = vunpack.c.l.b16 %v280
      %v355 = vunpack.c.l.b16 %v281
      %v356 = vunpack.c.l.b16 %v282
      %v357 = vunpack.c.l.b16 %v283
      %v358 = vunpack.c.l.b16 %v284
      %v359 = vunpack.c.l.b16 %v285
      %v360 = vunpack.c.l.b16 %v286
      %v361 = vunpack.c.l.b16 %v287
      %v362 = vunpack.c.l.b16 %v288
      %v363 = vunpack.c.l.b16 %v289
      %v364 = vunpack.c.l.b16 %v290
      %v365 = vunpack.c.l.b16 %v291
      %v366 = vunpack.c.l.b16 %v292
      %v367 = vunpack.c.l.b16 %v293
      %v368 = vunpack.c.l.b16 %v294
      %v369 = vunpack.c.l.b16 %v295
      %v370 = vunpack.c.l.b16 %v296
      %v371 = vunpack.c.l.b16 %v297
      %v372 = vunpack.c.l.b16 %v298
      %v373 = vunpack.c.l.b16 %v299
      %v374 = vunpack.c.l.b16 %v300
      %v375 = vunpack.c.l.b16 %v301
      %v376 = vunpack.c.l.b16 %v302
      %v377 = vunpack.c.l.b16 %v303
      %v378 = vunpack.c.l.b16 %v304
      %v379 = vunpack.c.l.b16 %v305
      %v380 = vunpack.c.l.b16 %v306
      %v381 = vunpack.c.l.b16 %v307
      %v382 = vunpack.c.l.b16 %v308
      %v383 = vpack.c.b16 %v352, %v351
      %v384 = vpack.c.b16 %v354, %v353
      %v385 = vpack.c.b16 %v356, %v355
      %v386 = vpack.c.b16 %v358, %v357
      %v387 = vpack.c.b16 %v360, %v359
      %v388 = vpack.c.b16 %v362, %v361
      %v389 = vpack.c.b16 %v364, %v363
      %v390 = vpack.c.b16 %v366, %v365
      %v391 = vpack.c.b16 %v368, %v367
      %v392 = vpack.c.b16 %v370, %v369
      %v393 = vpack.c.b16 %v372, %v371
      %v394 = vpack.c.b16 %v374, %v373
      %v395 = vpack.c.b16 %v376, %v375
      %v396 = vpack.c.b16 %v378, %v377
      %v397 = vpack.c.b16 %v380, %v379
      %v398 = vpack.c.b16 %v382, %v381
      %415 = vmatpush.bf16.msra.mxu0 %v390
      %416 = vmatpush.bf16.msra.mxu0 %v389
      %417 = vmatpush.bf16.msra.mxu0 %v388
      %418 = vmatpush.bf16.msra.mxu0 %v387
      %419 = vmatpush.bf16.msra.mxu0 %v386
      %420 = vmatpush.bf16.msra.mxu0 %v385
      %421 = vmatpush.bf16.msra.mxu0 %v384
      %422 = vmatpush.bf16.msra.mxu0 %v383
      %423 = vmatmul.bf16.gmra.mxu0 %v315
      %v424 = vpop.f32.mrf.mxu0
      %v425 = vadd.f32 0.0, %v424
      %v426 = vpop.f32.mrf.mxu0
      %v427 = vadd.f32 0.0, %v426
      %428 = vdwg.mxu0
      %429 = vmatpush.bf16.msra.mxu0 %v398
      %430 = vmatpush.bf16.msra.mxu0 %v397
      %431 = vmatpush.bf16.msra.mxu0 %v396
      %432 = vmatpush.bf16.msra.mxu0 %v395
      %433 = vmatpush.bf16.msra.mxu0 %v394
      %434 = vmatpush.bf16.msra.mxu0 %v393
      %435 = vmatpush.bf16.msra.mxu0 %v392
      %436 = vmatpush.bf16.msra.mxu0 %v391
      %437 = vmatmul.bf16.gmra.mxu0 %v316
      %v438 = vpop.f32.mrf.mxu0
      %v439 = vadd.f32 %v425, %v438
      %v440 = vpop.f32.mrf.mxu0
      %v441 = vadd.f32 %v427, %v440
      %442 = vdwg.mxu0
      %v443 = vadd.f32 %v273, %v439
      %v444 = vadd.f32 %v274, %v441
      %445 = vst [vmem:[#allocation2] sm:$0xff] %v443
      %446 = vst [vmem:[#allocation2 + $0x8] sm:$0xff] %v444
      // Predicated region
      $region37: #{_lambda_.15} parent=31 // pred_check
        %p447 = pneg %p267
      $region38: #{_lambda_.15} parent=31 // pred_check_branch
        %449 = sbr.rel (%p447) target = $region40
      $region39: #{_lambda_.15} parent=31 // pred_region
        %v450 = vld [vmem:[#allocation2] sm:$0xff]
        %v451 = vld [vmem:[#allocation2 + $0x8] sm:$0xff]
        %v452 = vld [vmem:[%s257] sm:$0x1]
        %v454 = vperm.slane %v452, 0
        %v456 = vadd.f32 %v450, %v454
        %v457 = vadd.f32 %v451, %v454
        %vm458 = vcmp.gt.f32.partialorder %v456, 0.0
        %vm459 = vcmp.gt.f32.partialorder %v457, 0.0
        %v460 = vmul.f32 %v456, 0.1
        %v461 = vmul.f32 %v457, 0.1
        %v462 = vsel %vm458, %v456, %v460
        %v463 = vsel %vm459, %v457, %v461
        %v464 = vpack.c.bf16 %v462, %v462
        %v465 = vpack.c.bf16 %v463, %v463
        %466 = vst [vmem:[%s265] sm:$0xf] %v464
        %467 = vst [vmem:[%s265 + $0x4] sm:$0xf] %v465
      $region40: #{_lambda_.15} parent=31 // pred_fallthru
        _
      %s468 = smul.u32 2, %s19
      %p469 = scmp.lt.s32.totalorder %s468, 3
      %s470 = scalar_select %p469, %s468, 3
      %p471 = scmp.lt.s32.totalorder %s20, 0
      %s472 = scalar_select %p471, %s20, 0
      %s473 = sadd.s32 %s472, %s470
      %s474 = smul.addr %s473, 4
      %s475 = scalar_lea.vmem %s3, %s474
      // Predicated region
      $region41: #{_lambda_.15} parent=31 // pred_check
        %p476 = pneg %p135
      $region42: #{_lambda_.15} parent=31 // pred_check_branch
        %478 = sbr.rel (%p476) target = $region44
      $region43: #{_lambda_.15} parent=31 // pred_region
        %s479 = smul.u32 2, %s19
      $region44: #{_lambda_.15} parent=31 // pred_fallthru
        _
    $region32: #{_lambda_.15} parent=5 // pred_fallthru
      _
    %p480 = scmp.le.s32.totalorder 2, %s9
    // Predicated region
    $region45: #{_lambda_.15} parent=5 // pred_check
      %p481 = pneg %p480
    $region46: #{_lambda_.15} parent=5 // pred_check_branch
      %483 = sbr.rel (%p481) target = $region48
    $region47: #{_lambda_.15} parent=5 // pred_region
      %s484 = ssub.s32 %s9, 2
      // Predicated region
      $region49: #{_lambda_.15} parent=47 // pred_check
        %p485 = pneg %p141
      $region50: #{_lambda_.15} parent=47 // pred_check_branch
        %487 = sbr.rel (%p485) target = $region52
      $region51: #{_lambda_.15} parent=47 // pred_region
        %s488 = smul.u32 2, %s22
        %p489 = scmp.lt.s32.totalorder %s488, 3
        %s490 = scalar_select %p489, %s488, 3
        %p491 = scmp.lt.s32.totalorder %s23, 0
        %s492 = scalar_select %p491, %s23, 0
        %s493 = sadd.s32 %s492, %s490
        %s494 = smul.addr %s493, 4
        %s495 = scalar_lea.vmem %s3, %s494
      $region52: #{_lambda_.15} parent=47 // pred_fallthru
        _
    $region48: #{_lambda_.15} parent=5 // pred_fallthru
      _
  $region6: #{_lambda_.15} parent=0 // loop_footer
    %s13 = sadd.s32 1, %s9
  $region7: #{_lambda_.15} parent=0 // loop_footer_branch
    %8 = sbr.rel target = $region3
  $region8: #{_lambda_.15} parent=0 // loop_exit
    _

// kernel: _lambda_.18
$region0: #{_lambda_.18}
  #allocation0 [shape = 'u32[]', space=smem, size = 0x4, offset = 0x4, fixed_abs, tag = 'smem constant byte address 0x4 - core index']
  #allocation1 [shape = 'u32[72,128]{1,0:T(1,128)}', space=vmem, size = 0x9000, scoped, tag = 'internal scratch']
  #allocation2 [shape = 'f32[16,128]{1,0:T(8,128)}', space=vmem, size = 0x2000, scoped, tag = 'scratch operand']
  %s0 = inlined_call_operand.vmem [shape: bf16[32,128], index: 0, kind: input, shape index: {}]
  %s1 = inlined_call_operand.vmem [shape: bf16[128,128], index: 1, kind: input, shape index: {}]
  %s2 = inlined_call_operand.vmem [shape: f32[1,128], index: 2, kind: input, shape index: {}]
  %s3 = inlined_call_operand.vmem [shape: bf16[32,128], index: 3, kind: output, shape index: {}]
  %s4 = sld [smem:[#allocation0]]
  $region53: #{_lambda_.18} parent=0
    _
  %s6 = ssub.s32 1, %s4
  %s7 = scalar_select 0, %s6, %s4
  loop: start=0, step=1, limit=4
  $region2: #{_lambda_.18} parent=0 // loop_pre_header
    _
  $region3: #{_lambda_.18} parent=0 // loop_header
    %s9 = sphi 0, %s13
    %p10 = scmp.ge.s32.totalorder %s9, 4
    %s16 = sphi 0, %s35
    %s17 = sphi 0, %s31
    %s18 = sphi 0, %s27
    %s19 = sphi 0, %s16
    %s20 = sphi 0, %s17
    %s21 = sphi 0, %s18
    %s22 = sphi 0, %s19
    %s23 = sphi 0, %s20
    %s24 = sphi 0, %s21
    %s40 = sphi 0, %s42
    %s43 = sphi 0, %s40
    %s44 = sphi 0, %s43
    %s60 = sphi 0, %s44
    %s68 = sphi 0, %s70
    %s71 = sphi 0, %s68
    %s72 = sphi 0, %s71
    %s88 = sphi 0, %s72
    %s94 = sphi 0, %s96
    %s97 = sphi 0, %s94
    %s98 = sphi 0, %s97
    %s114 = sphi 0, %s98
    %s122 = sphi 0, %s124
    %s125 = sphi 0, %s122
    %s126 = sphi 0, %s125
    %s142 = sphi 0, %s126
  $region4: #{_lambda_.18} parent=0 // loop_header_branch
    %12 = sbr.rel (%p10) target = $region8
  $region5: #{_lambda_.18} parent=0 // loop_body
    %s14 = ssub.s32 %s9, 1
    %s15 = ssub.s32 %s9, 2
    %s25 = sadd.s32 1, %s18
    %p26 = scmp.ge.s32.totalorder %s25, 1
    %s27 = scalar_select %p26, 0, %s25
    %s28 = sadd.s32 1, %s17
    %s29 = scalar_select %p26, %s28, %s17
    %p30 = scmp.ge.s32.totalorder %s29, 1
    %s31 = scalar_select %p30, 0, %s29
    %s32 = sadd.s32 1, %s16
    %s33 = scalar_select %p30, %s32, %s16
    %p34 = scmp.ge.s32.totalorder %s33, 2
    %s35 = scalar_select %p34, 0, %s33
    %s36 = ssub.s32 %s16, %s35
    %s37 = ssub.s32 %s18, %s27
    %s38 = sor.u32 %s36, %s37
    %p39 = scmp.eq.s32.totalorder %s38, 0
    %s41 = sadd.s32 %s40, 1
    %s42 = scalar_select %p39, %s40, %s41
    %p45 = pneg %p39
    %p46 = scmp.eq.s32.totalorder %s9, 1
    %p47 = por %p45, %p46
    %p48 = scmp.ne.s32.totalorder %s40, %s43
    %p49 = scmp.eq.s32.totalorder %s9, 0
    %p50 = por %p48, %p49
    %p51 = scmp.ne.s32.totalorder %s40, %s43
    %p52 = scmp.eq.s32.totalorder %s14, 1
    %p53 = por %p51, %p52
    %p54 = scmp.ne.s32.totalorder %s43, %s44
    %p55 = scmp.eq.s32.totalorder %s14, 0
    %p56 = por %p54, %p55
    %p57 = scmp.ne.s32.totalorder %s43, %s44
    %p58 = scmp.eq.s32.totalorder %s15, 1
    %p59 = por %p57, %p58
    %p61 = scmp.ne.s32.totalorder %s44, %s60
    %p62 = scmp.eq.s32.totalorder %s15, 0
    %p63 = por %p61, %p62
    %s64 = ssub.s32 %s18, %s27
    %s65 = ssub.s32 %s17, %s31
    %s66 = sor.u32 %s64, %s65
    %p67 = scmp.eq.s32.totalorder %s66, 0
    %s69 = sadd.s32 %s68, 1
    %s70 = scalar_select %p67, %s68, %s69
    %p73 = pneg %p67
    %p74 = scmp.eq.s32.totalorder %s9, 1
    %p75 = por %p73, %p74
    %p76 = scmp.ne.s32.totalorder %s68, %s71
    %p77 = scmp.eq.s32.totalorder %s9, 0
    %p78 = por %p76, %p77
    %p79 = scmp.ne.s32.totalorder %s68, %s71
    %p80 = scmp.eq.s32.totalorder %s14, 1
    %p81 = por %p79, %p80
    %p82 = scmp.ne.s32.totalorder %s71, %s72
    %p83 = scmp.eq.s32.totalorder %s14, 0
    %p84 = por %p82, %p83
    %p85 = scmp.ne.s32.totalorder %s71, %s72
    %p86 = scmp.eq.s32.totalorder %s15, 1
    %p87 = por %p85, %p86
    %p89 = scmp.ne.s32.totalorder %s72, %s88
    %p90 = scmp.eq.s32.totalorder %s15, 0
    %p91 = por %p89, %p90
    %s92 = ssub.s32 %s17, %s31
    %p93 = scmp.eq.s32.totalorder %s92, 0
    %s95 = sadd.s32 %s94, 1
    %s96 = scalar_select %p93, %s94, %s95
    %p99 = pneg %p93
    %p100 = scmp.eq.s32.totalorder %s9, 1
    %p101 = por %p99, %p100
    %p102 = scmp.ne.s32.totalorder %s94, %s97
    %p103 = scmp.eq.s32.totalorder %s9, 0
    %p104 = por %p102, %p103
    %p105 = scmp.ne.s32.totalorder %s94, %s97
    %p106 = scmp.eq.s32.totalorder %s14, 1
    %p107 = por %p105, %p106
    %p108 = scmp.ne.s32.totalorder %s97, %s98
    %p109 = scmp.eq.s32.totalorder %s14, 0
    %p110 = por %p108, %p109
    %p111 = scmp.ne.s32.totalorder %s97, %s98
    %p112 = scmp.eq.s32.totalorder %s15, 1
    %p113 = por %p111, %p112
    %p115 = scmp.ne.s32.totalorder %s98, %s114
    %p116 = scmp.eq.s32.totalorder %s15, 0
    %p117 = por %p115, %p116
    %s118 = ssub.s32 %s16, %s35
    %s119 = ssub.s32 %s17, %s31
    %s120 = sor.u32 %s118, %s119
    %p121 = scmp.eq.s32.totalorder %s120, 0
    %s123 = sadd.s32 %s122, 1
    %s124 = scalar_select %p121, %s122, %s123
    %p127 = pneg %p121
    %p128 = scmp.eq.s32.totalorder %s9, 1
    %p129 = por %p127, %p128
    %p130 = scmp.ne.s32.totalorder %s122, %s125
    %p131 = scmp.eq.s32.totalorder %s9, 0
    %p132 = por %p130, %p131
    %p133 = scmp.ne.s32.totalorder %s122, %s125
    %p134 = scmp.eq.s32.totalorder %s14, 1
    %p135 = por %p133, %p134
    %p136 = scmp.ne.s32.totalorder %s125, %s126
    %p137 = scmp.eq.s32.totalorder %s14, 0
    %p138 = por %p136, %p137
    %p139 = scmp.ne.s32.totalorder %s125, %s126
    %p140 = scmp.eq.s32.totalorder %s15, 1
    %p141 = por %p139, %p140
    %p143 = scmp.ne.s32.totalorder %s126, %s142
    %p144 = scmp.eq.s32.totalorder %s15, 0
    %p145 = por %p143, %p144
    %p146 = scmp.le.s32.totalorder 1, %s9
    %p147 = scmp.lt.s32.totalorder %s9, 3
    %p148 = pnand %p146, %p147
    %p149 = pneg %p148
    // Predicated region
    $region9: #{_lambda_.18} parent=5 // pred_check
      _
    $region10: #{_lambda_.18} parent=5 // pred_check_branch
      %151 = sbr.rel (%p148) target = $region12
    $region11: #{_lambda_.18} parent=5 // pred_region
      %s152 = ssub.s32 %s9, 1
      // Predicated region
      $region13: #{_lambda_.18} parent=11 // pred_check
        %p153 = pneg %p84
      $region14: #{_lambda_.18} parent=11 // pred_check_branch
        %155 = sbr.rel (%p153) target = $region16
      $region15: #{_lambda_.18} parent=11 // pred_region
        %s156 = smul.u32 16, %s21
        %p157 = scmp.lt.s32.totalorder %s156, 15
        %s158 = scalar_select %p157, %s156, 15
        %p159 = scmp.lt.s32.totalorder %s20, 0
        %s160 = scalar_select %p159, %s20, 0
        %s161 = sadd.s32 %s160, %s158
        %s162 = smul.addr %s161, 4
        %s163 = scalar_lea.vmem %s1, %s162
        %s164 = smul.u32 16, %s21
      $region16: #{_lambda_.18} parent=11 // pred_fallthru
        _
      // Predicated region
      $region17: #{_lambda_.18} parent=11 // pred_check
        %p165 = pneg %p110
      $region18: #{_lambda_.18} parent=11 // pred_check_branch
        %167 = sbr.rel (%p165) target = $region20
      $region19: #{_lambda_.18} parent=11 // pred_region
        %p168 = scmp.lt.s32.totalorder %s20, 0
        %s169 = scalar_select %p168, %s20, 0
        %s170 = scalar_lea.vmem %s2, %s169
      $region20: #{_lambda_.18} parent=11 // pred_fallthru
        _
    $region12: #{_lambda_.18} parent=5 // pred_fallthru
      _
    %p171 = scmp.lt.s32.totalorder %s9, 2
    // Predicated region
    $region21: #{_lambda_.18} parent=5 // pred_check
      %p172 = pneg %p171
    $region22: #{_lambda_.18} parent=5 // pred_check_branch
      %174 = sbr.rel (%p172) target = $region24
    $region23: #{_lambda_.18} parent=5 // pred_region
      // Predicated region
      $region25: #{_lambda_.18} parent=23 // pred_check
        %p175 = pneg %p50
      $region26: #{_lambda_.18} parent=23 // pred_check_branch
        %177 = sbr.rel (%p175) target = $region28
      $region27: #{_lambda_.18} parent=23 // pred_region
        %s178 = smul.u32 2, %s16
        %p179 = scmp.lt.s32.totalorder %s178, 3
        %s180 = scalar_select %p179, %s178, 3
        %p181 = scmp.lt.s32.totalorder %s18, 0
        %s182 = scalar_select %p181, %s18, 0
        %s183 = sadd.s32 %s182, %s180
        %s184 = smul.addr %s183, 4
        %s185 = scalar_lea.vmem %s0, %s184
        %s186 = smul.u32 2, %s16
      $region28: #{_lambda_.18} parent=23 // pred_fallthru
        _
    $region24: #{_lambda_.18} parent=5 // pred_fallthru
      _
    %p187 = scmp.le.s32.totalorder 1, %s9
    %p188 = scmp.lt.s32.totalorder %s9, 3
    %p189 = pnand %p187, %p188
    %p190 = pneg %p189
    // Predicated region
    $region29: #{_lambda_.18} parent=5 // pred_check
      _
    $region30: #{_lambda_.18} parent=5 // pred_check_branch
      %192 = sbr.rel (%p189) target = $region32
    $region31: #{_lambda_.18} parent=5 // pred_region
      %s193 = ssub.s32 %s9, 1
      %s194 = smul.u32 2, %s19
      %p195 = scmp.lt.s32.totalorder %s194, 3
      %s196 = scalar_select %p195, %s194, 3
      %p197 = scmp.lt.s32.totalorder %s21, 0
      %s198 = scalar_select %p197, %s21, 0
      %s199 = sadd.s32 %s198, %s196
      %s200 = smul.addr %s199, 4
      %s201 = scalar_lea.vmem %s0, %s200
      %p202 = pneg %p56
      %p203 = pneg %p53
      %s204 = smul.u32 16, %s21
      %p205 = scmp.lt.s32.totalorder %s204, 15
      %s206 = scalar_select %p205, %s204, 15
      %p207 = scmp.lt.s32.totalorder %s20, 0
      %s208 = scalar_select %p207, %s20, 0
      %s209 = sadd.s32 %s208, %s206
      %s210 = smul.addr %s209, 4
      %s211 = scalar_lea.vmem %s1, %s210
      %p212 = pneg %p84
      %p213 = pneg %p81
      %p214 = scmp.lt.s32.totalorder %s20, 0
      %s215 = scalar_select %p214, %s20, 0
      %s216 = scalar_lea.vmem %s2, %s215
      %p217 = pneg %p110
      %p218 = pneg %p107
      %p219 = pneg %p138
      %p220 = pneg %p135
      %s221 = smul.u32 2, %s19
      %p222 = scmp.lt.s32.totalorder %s221, 3
      %s223 = scalar_select %p222, %s221, 3
      %p224 = scmp.lt.s32.totalorder %s20, 0
      %s225 = scalar_select %p224, %s20, 0
      %s226 = sadd.s32 %s225, %s223
      %s227 = smul.addr %s226, 4
      %s228 = scalar_lea.vmem %s3, %s227
      %s229 = smul.u32 2, %s19
      %p230 = scmp.lt.s32.totalorder %s229, 3
      %s231 = scalar_select %p230, %s229, 3
      %p232 = scmp.lt.s32.totalorder %s21, 0
      %s233 = scalar_select %p232, %s21, 0
      %s234 = sadd.s32 %s233, %s231
      %s235 = smul.addr %s234, 4
      %s236 = scalar_lea.vmem %s0, %s235
      %s237 = smul.u32 2, %s19
      %s238 = smul.u32 16, %s21
      %p239 = scmp.lt.s32.totalorder %s238, 15
      %s240 = scalar_select %p239, %s238, 15
      %p241 = scmp.lt.s32.totalorder %s20, 0
      %s242 = scalar_select %p241, %s20, 0
      %s243 = sadd.s32 %s242, %s240
      %s244 = smul.addr %s243, 4
      %s245 = scalar_lea.vmem %s1, %s244
      %s246 = smul.u32 16, %s21
      %p247 = scmp.lt.s32.totalorder %s20, 0
      %s248 = scalar_select %p247, %s20, 0
      %s249 = scalar_lea.vmem %s2, %s248
      %s250 = smul.u32 2, %s19
      %p251 = scmp.lt.s32.totalorder %s250, 3
      %s252 = scalar_select %p251, %s250, 3
      %p253 = scmp.lt.s32.totalorder %s20, 0
      %s254 = scalar_select %p253, %s20, 0
      %s255 = sadd.s32 %s254, %s252
      %s256 = smul.addr %s255, 4
      %s257 = scalar_lea.vmem %s3, %s256
      %s258 = smul.u32 2, %s19
      %p259 = scmp.eq.s32.totalorder %s21, 0
      // Predicated region
      $region33: #{_lambda_.18} parent=31 // pred_check
        %p260 = pneg %p259
      $region34: #{_lambda_.18} parent=31 // pred_check_branch
        %262 = sbr.rel (%p260) target = $region36
      $region35: #{_lambda_.18} parent=31 // pred_region
        %263 = vst [vmem:[#allocation2] sm:$0xff] 0.0
        %264 = vst [vmem:[#allocation2 + $0x8] sm:$0xff] 0.0
      $region36: #{_lambda_.18} parent=31 // pred_fallthru
        _
      %v265 = vld [vmem:[#allocation2] sm:$0xff]
      %v266 = vld [vmem:[#allocation2 + $0x8] sm:$0xff]
      %v267 = vld [vmem:[%s236] sm:$0xf]
      %v268 = vld [vmem:[%s236 + $0x4] sm:$0xf]
      %v269 = vld [vmem:[%s245] sm:$0xf]
      %v270 = vld [vmem:[%s245 + $0x4] sm:$0xf]
      %v271 = vld [vmem:[%s245 + $0x8] sm:$0xf]
      %v272 = vld [vmem:[%s245 + $0xc] sm:$0xf]
      %v273 = vld [vmem:[%s245 + $0x10] sm:$0xf]
      %v274 = vld [vmem:[%s245 + $0x14] sm:$0xf]
      %v275 = vld [vmem:[%s245 + $0x18] sm:$0xf]
      %v276 = vld [vmem:[%s245 + $0x1c] sm:$0xf]
      %v277 = vld [vmem:[%s245 + $0x20] sm:$0xf]
      %v278 = vld [vmem:[%s245 + $0x24] sm:$0xf]
      %v279 = vld [vmem:[%s245 + $0x28] sm:$0xf]
      %v280 = vld [vmem:[%s245 + $0x2c] sm:$0xf]
      %v281 = vld [vmem:[%s245 + $0x30] sm:$0xf]
      %v282 = vld [vmem:[%s245 + $0x34] sm:$0xf]
      %v283 = vld [vmem:[%s245 + $0x38] sm:$0xf]
      %v284 = vld [vmem:[%s245 + $0x3c] sm:$0xf]
      %v287 = vunpack.c.l.b16 %v267
      %v288 = vunpack.c.l.b16 %v268
      %v289 = vpack.c.b16 %v288, %v287
      %v307 = vunpack.c.l.b16 %v269
      %v308 = vunpack.c.l.b16 %v270
      %v309 = vunpack.c.l.b16 %v271
      %v310 = vunpack.c.l.b16 %v272
      %v311 = vunpack.c.l.b16 %v273
      %v312 = vunpack.c.l.b16 %v274
      %v313 = vunpack.c.l.b16 %v275
      %v314 = vunpack.c.l.b16 %v276
      %v315 = vunpack.c.l.b16 %v277
      %v316 = vunpack.c.l.b16 %v278
      %v317 = vunpack.c.l.b16 %v279
      %v318 = vunpack.c.l.b16 %v280
      %v319 = vunpack.c.l.b16 %v281
      %v320 = vunpack.c.l.b16 %v282
      %v321 = vunpack.c.l.b16 %v283
      %v322 = vunpack.c.l.b16 %v284
      %v323 = vpack.c.b16 %v308, %v307
      %v324 = vpack.c.b16 %v310, %v309
      %v325 = vpack.c.b16 %v312, %v311
      %v326 = vpack.c.b16 %v314, %v313
      %v327 = vpack.c.b16 %v316, %v315
      %v328 = vpack.c.b16 %v318, %v317
      %v329 = vpack.c.b16 %v320, %v319
      %v330 = vpack.c.b16 %v322, %v321
      %339 = vmatpush.bf16.msra.mxu0 %v330
      %340 = vmatpush.bf16.msra.mxu0 %v329
      %341 = vmatpush.bf16.msra.mxu0 %v328
      %342 = vmatpush.bf16.msra.mxu0 %v327
      %343 = vmatpush.bf16.msra.mxu0 %v326
      %344 = vmatpush.bf16.msra.mxu0 %v325
      %345 = vmatpush.bf16.msra.mxu0 %v324
      %346 = vmatpush.bf16.msra.mxu0 %v323
      %347 = vmatmul.bf16.gmra.mxu0 %v289
      %v348 = vpop.f32.mrf.mxu0
      %v349 = vadd.f32 0.0, %v348
      %v350 = vpop.f32.mrf.mxu0
      %v351 = vadd.f32 0.0, %v350
      %352 = vdwg.mxu0
      %v353 = vadd.f32 %v265, %v349
      %v354 = vadd.f32 %v266, %v351
      %355 = vst [vmem:[#allocation2] sm:$0xff] %v353
      %356 = vst [vmem:[#allocation2 + $0x8] sm:$0xff] %v354
      // Predicated region
      $region37: #{_lambda_.18} parent=31 // pred_check
        %p357 = pneg %p259
      $region38: #{_lambda_.18} parent=31 // pred_check_branch
        %359 = sbr.rel (%p357) target = $region40
      $region39: #{_lambda_.18} parent=31 // pred_region
        %v360 = vld [vmem:[#allocation2] sm:$0xff]
        %v361 = vld [vmem:[#allocation2 + $0x8] sm:$0xff]
        %v362 = vld [vmem:[%s249] sm:$0x1]
        %v364 = vperm.slane %v362, 0
        %v366 = vadd.f32 %v360, %v364
        %v367 = vadd.f32 %v361, %v364
        %vm368 = vcmp.gt.f32.partialorder %v366, 0.0
        %vm369 = vcmp.gt.f32.partialorder %v367, 0.0
        %v370 = vmul.f32 %v366, 0.1
        %v371 = vmul.f32 %v367, 0.1
        %v372 = vsel %vm368, %v366, %v370
        %v373 = vsel %vm369, %v367, %v371
        %v374 = vpack.c.bf16 %v372, %v372
        %v375 = vpack.c.bf16 %v373, %v373
        %376 = vst [vmem:[%s257] sm:$0xf] %v374
        %377 = vst [vmem:[%s257 + $0x4] sm:$0xf] %v375
      $region40: #{_lambda_.18} parent=31 // pred_fallthru
        _
      %s378 = smul.u32 2, %s19
      %p379 = scmp.lt.s32.totalorder %s378, 3
      %s380 = scalar_select %p379, %s378, 3
      %p381 = scmp.lt.s32.totalorder %s20, 0
      %s382 = scalar_select %p381, %s20, 0
      %s383 = sadd.s32 %s382, %s380
      %s384 = smul.addr %s383, 4
      %s385 = scalar_lea.vmem %s3, %s384
      // Predicated region
      $region41: #{_lambda_.18} parent=31 // pred_check
        %p386 = pneg %p135
      $region42: #{_lambda_.18} parent=31 // pred_check_branch
        %388 = sbr.rel (%p386) target = $region44
      $region43: #{_lambda_.18} parent=31 // pred_region
        %s389 = smul.u32 2, %s19
      $region44: #{_lambda_.18} parent=31 // pred_fallthru
        _
    $region32: #{_lambda_.18} parent=5 // pred_fallthru
      _
    %p390 = scmp.le.s32.totalorder 2, %s9
    // Predicated region
    $region45: #{_lambda_.18} parent=5 // pred_check
      %p391 = pneg %p390
    $region46: #{_lambda_.18} parent=5 // pred_check_branch
      %393 = sbr.rel (%p391) target = $region48
    $region47: #{_lambda_.18} parent=5 // pred_region
      %s394 = ssub.s32 %s9, 2
      // Predicated region
      $region49: #{_lambda_.18} parent=47 // pred_check
        %p395 = pneg %p141
      $region50: #{_lambda_.18} parent=47 // pred_check_branch
        %397 = sbr.rel (%p395) target = $region52
      $region51: #{_lambda_.18} parent=47 // pred_region
        %s398 = smul.u32 2, %s22
        %p399 = scmp.lt.s32.totalorder %s398, 3
        %s400 = scalar_select %p399, %s398, 3
        %p401 = scmp.lt.s32.totalorder %s23, 0
        %s402 = scalar_select %p401, %s23, 0
        %s403 = sadd.s32 %s402, %s400
        %s404 = smul.addr %s403, 4
        %s405 = scalar_lea.vmem %s3, %s404
      $region52: #{_lambda_.18} parent=47 // pred_fallthru
        _
    $region48: #{_lambda_.18} parent=5 // pred_fallthru
      _
  $region6: #{_lambda_.18} parent=0 // loop_footer
    %s13 = sadd.s32 1, %s9
  $region7: #{_lambda_.18} parent=0 // loop_footer_branch
    %8 = sbr.rel target = $region3
  $region8: #{_lambda_.18} parent=0 // loop_exit
    _

// kernel: _lambda_.20
$region0: #{_lambda_.20}
  #allocation0 [shape = 'u32[]', space=smem, size = 0x4, offset = 0x4, fixed_abs, tag = 'smem constant byte address 0x4 - core index']
  #allocation1 [shape = 'u32[72,128]{1,0:T(1,128)}', space=vmem, size = 0x9000, scoped, tag = 'internal scratch']
  #allocation2 [shape = 'f32[64,128]{1,0:T(8,128)}', space=vmem, size = 0x8000, scoped, tag = 'scratch operand']
  %s0 = inlined_call_operand.vmem [shape: bf16[128,128], index: 0, kind: input, shape index: {}]
  %s1 = inlined_call_operand.vmem [shape: bf16[128,128], index: 1, kind: input, shape index: {}]
  %s2 = inlined_call_operand.vmem [shape: f32[1,128], index: 2, kind: input, shape index: {}]
  %s3 = inlined_call_operand.vmem [shape: bf16[128,128], index: 3, kind: output, shape index: {}]
  %s4 = sld [smem:[#allocation0]]
  $region53: #{_lambda_.20} parent=0
    _
  %s6 = ssub.s32 1, %s4
  %s7 = scalar_select 0, %s6, %s4
  loop: start=0, step=1, limit=4
  $region2: #{_lambda_.20} parent=0 // loop_pre_header
    _
  $region3: #{_lambda_.20} parent=0 // loop_header
    %s9 = sphi 0, %s13
    %p10 = scmp.ge.s32.totalorder %s9, 4
    %s16 = sphi 0, %s35
    %s17 = sphi 0, %s31
    %s18 = sphi 0, %s27
    %s19 = sphi 0, %s16
    %s20 = sphi 0, %s17
    %s21 = sphi 0, %s18
    %s22 = sphi 0, %s19
    %s23 = sphi 0, %s20
    %s24 = sphi 0, %s21
    %s40 = sphi 0, %s42
    %s43 = sphi 0, %s40
    %s44 = sphi 0, %s43
    %s60 = sphi 0, %s44
    %s68 = sphi 0, %s70
    %s71 = sphi 0, %s68
    %s72 = sphi 0, %s71
    %s88 = sphi 0, %s72
    %s94 = sphi 0, %s96
    %s97 = sphi 0, %s94
    %s98 = sphi 0, %s97
    %s114 = sphi 0, %s98
    %s122 = sphi 0, %s124
    %s125 = sphi 0, %s122
    %s126 = sphi 0, %s125
    %s142 = sphi 0, %s126
  $region4: #{_lambda_.20} parent=0 // loop_header_branch
    %12 = sbr.rel (%p10) target = $region8
  $region5: #{_lambda_.20} parent=0 // loop_body
    %s14 = ssub.s32 %s9, 1
    %s15 = ssub.s32 %s9, 2
    %s25 = sadd.s32 1, %s18
    %p26 = scmp.ge.s32.totalorder %s25, 1
    %s27 = scalar_select %p26, 0, %s25
    %s28 = sadd.s32 1, %s17
    %s29 = scalar_select %p26, %s28, %s17
    %p30 = scmp.ge.s32.totalorder %s29, 1
    %s31 = scalar_select %p30, 0, %s29
    %s32 = sadd.s32 1, %s16
    %s33 = scalar_select %p30, %s32, %s16
    %p34 = scmp.ge.s32.totalorder %s33, 2
    %s35 = scalar_select %p34, 0, %s33
    %s36 = ssub.s32 %s16, %s35
    %s37 = ssub.s32 %s18, %s27
    %s38 = sor.u32 %s36, %s37
    %p39 = scmp.eq.s32.totalorder %s38, 0
    %s41 = sadd.s32 %s40, 1
    %s42 = scalar_select %p39, %s40, %s41
    %p45 = pneg %p39
    %p46 = scmp.eq.s32.totalorder %s9, 1
    %p47 = por %p45, %p46
    %p48 = scmp.ne.s32.totalorder %s40, %s43
    %p49 = scmp.eq.s32.totalorder %s9, 0
    %p50 = por %p48, %p49
    %p51 = scmp.ne.s32.totalorder %s40, %s43
    %p52 = scmp.eq.s32.totalorder %s14, 1
    %p53 = por %p51, %p52
    %p54 = scmp.ne.s32.totalorder %s43, %s44
    %p55 = scmp.eq.s32.totalorder %s14, 0
    %p56 = por %p54, %p55
    %p57 = scmp.ne.s32.totalorder %s43, %s44
    %p58 = scmp.eq.s32.totalorder %s15, 1
    %p59 = por %p57, %p58
    %p61 = scmp.ne.s32.totalorder %s44, %s60
    %p62 = scmp.eq.s32.totalorder %s15, 0
    %p63 = por %p61, %p62
    %s64 = ssub.s32 %s18, %s27
    %s65 = ssub.s32 %s17, %s31
    %s66 = sor.u32 %s64, %s65
    %p67 = scmp.eq.s32.totalorder %s66, 0
    %s69 = sadd.s32 %s68, 1
    %s70 = scalar_select %p67, %s68, %s69
    %p73 = pneg %p67
    %p74 = scmp.eq.s32.totalorder %s9, 1
    %p75 = por %p73, %p74
    %p76 = scmp.ne.s32.totalorder %s68, %s71
    %p77 = scmp.eq.s32.totalorder %s9, 0
    %p78 = por %p76, %p77
    %p79 = scmp.ne.s32.totalorder %s68, %s71
    %p80 = scmp.eq.s32.totalorder %s14, 1
    %p81 = por %p79, %p80
    %p82 = scmp.ne.s32.totalorder %s71, %s72
    %p83 = scmp.eq.s32.totalorder %s14, 0
    %p84 = por %p82, %p83
    %p85 = scmp.ne.s32.totalorder %s71, %s72
    %p86 = scmp.eq.s32.totalorder %s15, 1
    %p87 = por %p85, %p86
    %p89 = scmp.ne.s32.totalorder %s72, %s88
    %p90 = scmp.eq.s32.totalorder %s15, 0
    %p91 = por %p89, %p90
    %s92 = ssub.s32 %s17, %s31
    %p93 = scmp.eq.s32.totalorder %s92, 0
    %s95 = sadd.s32 %s94, 1
    %s96 = scalar_select %p93, %s94, %s95
    %p99 = pneg %p93
    %p100 = scmp.eq.s32.totalorder %s9, 1
    %p101 = por %p99, %p100
    %p102 = scmp.ne.s32.totalorder %s94, %s97
    %p103 = scmp.eq.s32.totalorder %s9, 0
    %p104 = por %p102, %p103
    %p105 = scmp.ne.s32.totalorder %s94, %s97
    %p106 = scmp.eq.s32.totalorder %s14, 1
    %p107 = por %p105, %p106
    %p108 = scmp.ne.s32.totalorder %s97, %s98
    %p109 = scmp.eq.s32.totalorder %s14, 0
    %p110 = por %p108, %p109
    %p111 = scmp.ne.s32.totalorder %s97, %s98
    %p112 = scmp.eq.s32.totalorder %s15, 1
    %p113 = por %p111, %p112
    %p115 = scmp.ne.s32.totalorder %s98, %s114
    %p116 = scmp.eq.s32.totalorder %s15, 0
    %p117 = por %p115, %p116
    %s118 = ssub.s32 %s16, %s35
    %s119 = ssub.s32 %s17, %s31
    %s120 = sor.u32 %s118, %s119
    %p121 = scmp.eq.s32.totalorder %s120, 0
    %s123 = sadd.s32 %s122, 1
    %s124 = scalar_select %p121, %s122, %s123
    %p127 = pneg %p121
    %p128 = scmp.eq.s32.totalorder %s9, 1
    %p129 = por %p127, %p128
    %p130 = scmp.ne.s32.totalorder %s122, %s125
    %p131 = scmp.eq.s32.totalorder %s9, 0
    %p132 = por %p130, %p131
    %p133 = scmp.ne.s32.totalorder %s122, %s125
    %p134 = scmp.eq.s32.totalorder %s14, 1
    %p135 = por %p133, %p134
    %p136 = scmp.ne.s32.totalorder %s125, %s126
    %p137 = scmp.eq.s32.totalorder %s14, 0
    %p138 = por %p136, %p137
    %p139 = scmp.ne.s32.totalorder %s125, %s126
    %p140 = scmp.eq.s32.totalorder %s15, 1
    %p141 = por %p139, %p140
    %p143 = scmp.ne.s32.totalorder %s126, %s142
    %p144 = scmp.eq.s32.totalorder %s15, 0
    %p145 = por %p143, %p144
    %p146 = scmp.le.s32.totalorder 1, %s9
    %p147 = scmp.lt.s32.totalorder %s9, 3
    %p148 = pnand %p146, %p147
    %p149 = pneg %p148
    // Predicated region
    $region9: #{_lambda_.20} parent=5 // pred_check
      _
    $region10: #{_lambda_.20} parent=5 // pred_check_branch
      %151 = sbr.rel (%p148) target = $region12
    $region11: #{_lambda_.20} parent=5 // pred_region
      %s152 = ssub.s32 %s9, 1
      // Predicated region
      $region13: #{_lambda_.20} parent=11 // pred_check
        %p153 = pneg %p84
      $region14: #{_lambda_.20} parent=11 // pred_check_branch
        %155 = sbr.rel (%p153) target = $region16
      $region15: #{_lambda_.20} parent=11 // pred_region
        %s156 = smul.u32 16, %s21
        %p157 = scmp.lt.s32.totalorder %s156, 15
        %s158 = scalar_select %p157, %s156, 15
        %p159 = scmp.lt.s32.totalorder %s20, 0
        %s160 = scalar_select %p159, %s20, 0
        %s161 = sadd.s32 %s160, %s158
        %s162 = smul.addr %s161, 4
        %s163 = scalar_lea.vmem %s1, %s162
        %s164 = smul.u32 16, %s21
      $region16: #{_lambda_.20} parent=11 // pred_fallthru
        _
      // Predicated region
      $region17: #{_lambda_.20} parent=11 // pred_check
        %p165 = pneg %p110
      $region18: #{_lambda_.20} parent=11 // pred_check_branch
        %167 = sbr.rel (%p165) target = $region20
      $region19: #{_lambda_.20} parent=11 // pred_region
        %p168 = scmp.lt.s32.totalorder %s20, 0
        %s169 = scalar_select %p168, %s20, 0
        %s170 = scalar_lea.vmem %s2, %s169
      $region20: #{_lambda_.20} parent=11 // pred_fallthru
        _
    $region12: #{_lambda_.20} parent=5 // pred_fallthru
      _
    %p171 = scmp.lt.s32.totalorder %s9, 2
    // Predicated region
    $region21: #{_lambda_.20} parent=5 // pred_check
      %p172 = pneg %p171
    $region22: #{_lambda_.20} parent=5 // pred_check_branch
      %174 = sbr.rel (%p172) target = $region24
    $region23: #{_lambda_.20} parent=5 // pred_region
      // Predicated region
      $region25: #{_lambda_.20} parent=23 // pred_check
        %p175 = pneg %p50
      $region26: #{_lambda_.20} parent=23 // pred_check_branch
        %177 = sbr.rel (%p175) target = $region28
      $region27: #{_lambda_.20} parent=23 // pred_region
        %s178 = smul.u32 8, %s16
        %p179 = scmp.lt.s32.totalorder %s178, 15
        %s180 = scalar_select %p179, %s178, 15
        %p181 = scmp.lt.s32.totalorder %s18, 0
        %s182 = scalar_select %p181, %s18, 0
        %s183 = sadd.s32 %s182, %s180
        %s184 = smul.addr %s183, 4
        %s185 = scalar_lea.vmem %s0, %s184
        %s186 = smul.u32 8, %s16
      $region28: #{_lambda_.20} parent=23 // pred_fallthru
        _
    $region24: #{_lambda_.20} parent=5 // pred_fallthru
      _
    %p187 = scmp.le.s32.totalorder 1, %s9
    %p188 = scmp.lt.s32.totalorder %s9, 3
    %p189 = pnand %p187, %p188
    %p190 = pneg %p189
    // Predicated region
    $region29: #{_lambda_.20} parent=5 // pred_check
      _
    $region30: #{_lambda_.20} parent=5 // pred_check_branch
      %192 = sbr.rel (%p189) target = $region32
    $region31: #{_lambda_.20} parent=5 // pred_region
      %s193 = ssub.s32 %s9, 1
      %s194 = smul.u32 8, %s19
      %p195 = scmp.lt.s32.totalorder %s194, 15
      %s196 = scalar_select %p195, %s194, 15
      %p197 = scmp.lt.s32.totalorder %s21, 0
      %s198 = scalar_select %p197, %s21, 0
      %s199 = sadd.s32 %s198, %s196
      %s200 = smul.addr %s199, 4
      %s201 = scalar_lea.vmem %s0, %s200
      %p202 = pneg %p56
      %p203 = pneg %p53
      %s204 = smul.u32 16, %s21
      %p205 = scmp.lt.s32.totalorder %s204, 15
      %s206 = scalar_select %p205, %s204, 15
      %p207 = scmp.lt.s32.totalorder %s20, 0
      %s208 = scalar_select %p207, %s20, 0
      %s209 = sadd.s32 %s208, %s206
      %s210 = smul.addr %s209, 4
      %s211 = scalar_lea.vmem %s1, %s210
      %p212 = pneg %p84
      %p213 = pneg %p81
      %p214 = scmp.lt.s32.totalorder %s20, 0
      %s215 = scalar_select %p214, %s20, 0
      %s216 = scalar_lea.vmem %s2, %s215
      %p217 = pneg %p110
      %p218 = pneg %p107
      %p219 = pneg %p138
      %p220 = pneg %p135
      %s221 = smul.u32 8, %s19
      %p222 = scmp.lt.s32.totalorder %s221, 15
      %s223 = scalar_select %p222, %s221, 15
      %p224 = scmp.lt.s32.totalorder %s20, 0
      %s225 = scalar_select %p224, %s20, 0
      %s226 = sadd.s32 %s225, %s223
      %s227 = smul.addr %s226, 4
      %s228 = scalar_lea.vmem %s3, %s227
      %s229 = smul.u32 8, %s19
      %p230 = scmp.lt.s32.totalorder %s229, 15
      %s231 = scalar_select %p230, %s229, 15
      %p232 = scmp.lt.s32.totalorder %s21, 0
      %s233 = scalar_select %p232, %s21, 0
      %s234 = sadd.s32 %s233, %s231
      %s235 = smul.addr %s234, 4
      %s236 = scalar_lea.vmem %s0, %s235
      %s237 = smul.u32 8, %s19
      %s238 = smul.u32 16, %s21
      %p239 = scmp.lt.s32.totalorder %s238, 15
      %s240 = scalar_select %p239, %s238, 15
      %p241 = scmp.lt.s32.totalorder %s20, 0
      %s242 = scalar_select %p241, %s20, 0
      %s243 = sadd.s32 %s242, %s240
      %s244 = smul.addr %s243, 4
      %s245 = scalar_lea.vmem %s1, %s244
      %s246 = smul.u32 16, %s21
      %p247 = scmp.lt.s32.totalorder %s20, 0
      %s248 = scalar_select %p247, %s20, 0
      %s249 = scalar_lea.vmem %s2, %s248
      %s250 = smul.u32 8, %s19
      %p251 = scmp.lt.s32.totalorder %s250, 15
      %s252 = scalar_select %p251, %s250, 15
      %p253 = scmp.lt.s32.totalorder %s20, 0
      %s254 = scalar_select %p253, %s20, 0
      %s255 = sadd.s32 %s254, %s252
      %s256 = smul.addr %s255, 4
      %s257 = scalar_lea.vmem %s3, %s256
      %s258 = smul.u32 8, %s19
      %p259 = scmp.eq.s32.totalorder %s21, 0
      // Predicated region
      $region33: #{_lambda_.20} parent=31 // pred_check
        %p260 = pneg %p259
      $region34: #{_lambda_.20} parent=31 // pred_check_branch
        %262 = sbr.rel (%p260) target = $region36
      $region35: #{_lambda_.20} parent=31 // pred_region
        %263 = vst [vmem:[#allocation2] sm:$0xff] 0.0
        %264 = vst [vmem:[#allocation2 + $0x8] sm:$0xff] 0.0
        %265 = vst [vmem:[#allocation2 + $0x10] sm:$0xff] 0.0
        %266 = vst [vmem:[#allocation2 + $0x18] sm:$0xff] 0.0
        %267 = vst [vmem:[#allocation2 + $0x20] sm:$0xff] 0.0
        %268 = vst [vmem:[#allocation2 + $0x28] sm:$0xff] 0.0
        %269 = vst [vmem:[#allocation2 + $0x30] sm:$0xff] 0.0
        %270 = vst [vmem:[#allocation2 + $0x38] sm:$0xff] 0.0
      $region36: #{_lambda_.20} parent=31 // pred_fallthru
        _
      %v271 = vld [vmem:[#allocation2] sm:$0xff]
      %v272 = vld [vmem:[#allocation2 + $0x8] sm:$0xff]
      %v273 = vld [vmem:[#allocation2 + $0x10] sm:$0xff]
      %v274 = vld [vmem:[#allocation2 + $0x18] sm:$0xff]
      %v275 = vld [vmem:[#allocation2 + $0x20] sm:$0xff]
      %v276 = vld [vmem:[#allocation2 + $0x28] sm:$0xff]
      %v277 = vld [vmem:[#allocation2 + $0x30] sm:$0xff]
      %v278 = vld [vmem:[#allocation2 + $0x38] sm:$0xff]
      %v279 = vld [vmem:[%s236] sm:$0xf]
      %v280 = vld [vmem:[%s236 + $0x4] sm:$0xf]
      %v281 = vld [vmem:[%s236 + $0x8] sm:$0xf]
      %v282 = vld [vmem:[%s236 + $0xc] sm:$0xf]
      %v283 = vld [vmem:[%s236 + $0x10] sm:$0xf]
      %v284 = vld [vmem:[%s236 + $0x14] sm:$0xf]
      %v285 = vld [vmem:[%s236 + $0x18] sm:$0xf]
      %v286 = vld [vmem:[%s236 + $0x1c] sm:$0xf]
      %v287 = vld [vmem:[%s245] sm:$0xf]
      %v288 = vld [vmem:[%s245 + $0x4] sm:$0xf]
      %v289 = vld [vmem:[%s245 + $0x8] sm:$0xf]
      %v290 = vld [vmem:[%s245 + $0xc] sm:$0xf]
      %v291 = vld [vmem:[%s245 + $0x10] sm:$0xf]
      %v292 = vld [vmem:[%s245 + $0x14] sm:$0xf]
      %v293 = vld [vmem:[%s245 + $0x18] sm:$0xf]
      %v294 = vld [vmem:[%s245 + $0x1c] sm:$0xf]
      %v295 = vld [vmem:[%s245 + $0x20] sm:$0xf]
      %v296 = vld [vmem:[%s245 + $0x24] sm:$0xf]
      %v297 = vld [vmem:[%s245 + $0x28] sm:$0xf]
      %v298 = vld [vmem:[%s245 + $0x2c] sm:$0xf]
      %v299 = vld [vmem:[%s245 + $0x30] sm:$0xf]
      %v300 = vld [vmem:[%s245 + $0x34] sm:$0xf]
      %v301 = vld [vmem:[%s245 + $0x38] sm:$0xf]
      %v302 = vld [vmem:[%s245 + $0x3c] sm:$0xf]
      %v311 = vunpack.c.l.b16 %v279
      %v312 = vunpack.c.l.b16 %v280
      %v313 = vunpack.c.l.b16 %v281
      %v314 = vunpack.c.l.b16 %v282
      %v315 = vunpack.c.l.b16 %v283
      %v316 = vunpack.c.l.b16 %v284
      %v317 = vunpack.c.l.b16 %v285
      %v318 = vunpack.c.l.b16 %v286
      %v319 = vpack.c.b16 %v312, %v311
      %v320 = vpack.c.b16 %v314, %v313
      %v321 = vpack.c.b16 %v316, %v315
      %v322 = vpack.c.b16 %v318, %v317
      %v343 = vunpack.c.l.b16 %v287
      %v344 = vunpack.c.l.b16 %v288
      %v345 = vunpack.c.l.b16 %v289
      %v346 = vunpack.c.l.b16 %v290
      %v347 = vunpack.c.l.b16 %v291
      %v348 = vunpack.c.l.b16 %v292
      %v349 = vunpack.c.l.b16 %v293
      %v350 = vunpack.c.l.b16 %v294
      %v351 = vunpack.c.l.b16 %v295
      %v352 = vunpack.c.l.b16 %v296
      %v353 = vunpack.c.l.b16 %v297
      %v354 = vunpack.c.l.b16 %v298
      %v355 = vunpack.c.l.b16 %v299
      %v356 = vunpack.c.l.b16 %v300
      %v357 = vunpack.c.l.b16 %v301
      %v358 = vunpack.c.l.b16 %v302
      %v359 = vpack.c.b16 %v344, %v343
      %v360 = vpack.c.b16 %v346, %v345
      %v361 = vpack.c.b16 %v348, %v347
      %v362 = vpack.c.b16 %v350, %v349
      %v363 = vpack.c.b16 %v352, %v351
      %v364 = vpack.c.b16 %v354, %v353
      %v365 = vpack.c.b16 %v356, %v355
      %v366 = vpack.c.b16 %v358, %v357
      %375 = vmatpush.bf16.msra.mxu0 %v366
      %376 = vmatpush.bf16.msra.mxu0 %v365
      %377 = vmatpush.bf16.msra.mxu0 %v364
      %378 = vmatpush.bf16.msra.mxu0 %v363
      %379 = vmatpush.bf16.msra.mxu0 %v362
      %380 = vmatpush.bf16.msra.mxu0 %v361
      %381 = vmatpush.bf16.msra.mxu0 %v360
      %382 = vmatpush.bf16.msra.mxu0 %v359
      %383 = vmatmul.bf16.gmra.mxu0 %v319
      %v384 = vpop.f32.mrf.mxu0
      %v385 = vadd.f32 0.0, %v384
      %v386 = vpop.f32.mrf.mxu0
      %v387 = vadd.f32 0.0, %v386
      %388 = vmatmul.bf16.gmra.mxu0 %v320
      %v389 = vpop.f32.mrf.mxu0
      %v390 = vadd.f32 0.0, %v389
      %v391 = vpop.f32.mrf.mxu0
      %v392 = vadd.f32 0.0, %v391
      %393 = vmatmul.bf16.gmra.mxu0 %v321
      %v394 = vpop.f32.mrf.mxu0
      %v395 = vadd.f32 0.0, %v394
      %v396 = vpop.f32.mrf.mxu0
      %v397 = vadd.f32 0.0, %v396
      %398 = vmatmul.bf16.gmra.mxu0 %v322
      %v399 = vpop.f32.mrf.mxu0
      %v400 = vadd.f32 0.0, %v399
      %v401 = vpop.f32.mrf.mxu0
      %v402 = vadd.f32 0.0, %v401
      %403 = vdwg.mxu0
      %v404 = vadd.f32 %v271, %v385
      %v405 = vadd.f32 %v272, %v387
      %v406 = vadd.f32 %v273, %v390
      %v407 = vadd.f32 %v274, %v392
      %v408 = vadd.f32 %v275, %v395
      %v409 = vadd.f32 %v276, %v397
      %v410 = vadd.f32 %v277, %v400
      %v411 = vadd.f32 %v278, %v402
      %412 = vst [vmem:[#allocation2] sm:$0xff] %v404
      %413 = vst [vmem:[#allocation2 + $0x8] sm:$0xff] %v405
      %414 = vst [vmem:[#allocation2 + $0x10] sm:$0xff] %v406
      %415 = vst [vmem:[#allocation2 + $0x18] sm:$0xff] %v407
      %416 = vst [vmem:[#allocation2 + $0x20] sm:$0xff] %v408
      %417 = vst [vmem:[#allocation2 + $0x28] sm:$0xff] %v409
      %418 = vst [vmem:[#allocation2 + $0x30] sm:$0xff] %v410
      %419 = vst [vmem:[#allocation2 + $0x38] sm:$0xff] %v411
      // Predicated region
      $region37: #{_lambda_.20} parent=31 // pred_check
        %p420 = pneg %p259
      $region38: #{_lambda_.20} parent=31 // pred_check_branch
        %422 = sbr.rel (%p420) target = $region40
      $region39: #{_lambda_.20} parent=31 // pred_region
        %v423 = vld [vmem:[#allocation2] sm:$0xff]
        %v424 = vld [vmem:[#allocation2 + $0x8] sm:$0xff]
        %v425 = vld [vmem:[#allocation2 + $0x10] sm:$0xff]
        %v426 = vld [vmem:[#allocation2 + $0x18] sm:$0xff]
        %v427 = vld [vmem:[#allocation2 + $0x20] sm:$0xff]
        %v428 = vld [vmem:[#allocation2 + $0x28] sm:$0xff]
        %v429 = vld [vmem:[#allocation2 + $0x30] sm:$0xff]
        %v430 = vld [vmem:[#allocation2 + $0x38] sm:$0xff]
        %v431 = vld [vmem:[%s249] sm:$0x1]
        %v433 = vperm.slane %v431, 0
        %v435 = vadd.f32 %v423, %v433
        %v436 = vadd.f32 %v424, %v433
        %v437 = vadd.f32 %v425, %v433
        %v438 = vadd.f32 %v426, %v433
        %v439 = vadd.f32 %v427, %v433
        %v440 = vadd.f32 %v428, %v433
        %v441 = vadd.f32 %v429, %v433
        %v442 = vadd.f32 %v430, %v433
        %v443 = vpack.c.bf16 %v435, %v435
        %v444 = vpack.c.bf16 %v436, %v436
        %v445 = vpack.c.bf16 %v437, %v437
        %v446 = vpack.c.bf16 %v438, %v438
        %v447 = vpack.c.bf16 %v439, %v439
        %v448 = vpack.c.bf16 %v440, %v440
        %v449 = vpack.c.bf16 %v441, %v441
        %v450 = vpack.c.bf16 %v442, %v442
        %451 = vst [vmem:[%s257] sm:$0xf] %v443
        %452 = vst [vmem:[%s257 + $0x4] sm:$0xf] %v444
        %453 = vst [vmem:[%s257 + $0x8] sm:$0xf] %v445
        %454 = vst [vmem:[%s257 + $0xc] sm:$0xf] %v446
        %455 = vst [vmem:[%s257 + $0x10] sm:$0xf] %v447
        %456 = vst [vmem:[%s257 + $0x14] sm:$0xf] %v448
        %457 = vst [vmem:[%s257 + $0x18] sm:$0xf] %v449
        %458 = vst [vmem:[%s257 + $0x1c] sm:$0xf] %v450
      $region40: #{_lambda_.20} parent=31 // pred_fallthru
        _
      %s459 = smul.u32 8, %s19
      %p460 = scmp.lt.s32.totalorder %s459, 15
      %s461 = scalar_select %p460, %s459, 15
      %p462 = scmp.lt.s32.totalorder %s20, 0
      %s463 = scalar_select %p462, %s20, 0
      %s464 = sadd.s32 %s463, %s461
      %s465 = smul.addr %s464, 4
      %s466 = scalar_lea.vmem %s3, %s465
      // Predicated region
      $region41: #{_lambda_.20} parent=31 // pred_check
        %p467 = pneg %p135
      $region42: #{_lambda_.20} parent=31 // pred_check_branch
        %469 = sbr.rel (%p467) target = $region44
      $region43: #{_lambda_.20} parent=31 // pred_region
        %s470 = smul.u32 8, %s19
      $region44: #{_lambda_.20} parent=31 // pred_fallthru
        _
    $region32: #{_lambda_.20} parent=5 // pred_fallthru
      _
    %p471 = scmp.le.s32.totalorder 2, %s9
    // Predicated region
    $region45: #{_lambda_.20} parent=5 // pred_check
      %p472 = pneg %p471
    $region46: #{_lambda_.20} parent=5 // pred_check_branch
      %474 = sbr.rel (%p472) target = $region48
    $region47: #{_lambda_.20} parent=5 // pred_region
      %s475 = ssub.s32 %s9, 2
      // Predicated region
      $region49: #{_lambda_.20} parent=47 // pred_check
        %p476 = pneg %p141
      $region50: #{_lambda_.20} parent=47 // pred_check_branch
        %478 = sbr.rel (%p476) target = $region52
      $region51: #{_lambda_.20} parent=47 // pred_region
        %s479 = smul.u32 8, %s22
        %p480 = scmp.lt.s32.totalorder %s479, 15
        %s481 = scalar_select %p480, %s479, 15
        %p482 = scmp.lt.s32.totalorder %s23, 0
        %s483 = scalar_select %p482, %s23, 0
        %s484 = sadd.s32 %s483, %s481
        %s485 = smul.addr %s484, 4
        %s486 = scalar_lea.vmem %s3, %s485
      $region52: #{_lambda_.20} parent=47 // pred_fallthru
        _
    $region48: #{_lambda_.20} parent=5 // pred_fallthru
      _
  $region6: #{_lambda_.20} parent=0 // loop_footer
    %s13 = sadd.s32 1, %s9
  $region7: #{_lambda_.20} parent=0 // loop_footer_branch
    %8 = sbr.rel target = $region3
  $region8: #{_lambda_.20} parent=0 // loop_exit
    _

// kernel: _lambda_.19
$region0: #{_lambda_.19}
  #allocation0 [shape = 'u32[]', space=smem, size = 0x4, offset = 0x4, fixed_abs, tag = 'smem constant byte address 0x4 - core index']
  #allocation1 [shape = 'u32[72,128]{1,0:T(1,128)}', space=vmem, size = 0x9000, scoped, tag = 'internal scratch']
  #allocation2 [shape = 'f32[64,128]{1,0:T(8,128)}', space=vmem, size = 0x8000, scoped, tag = 'scratch operand']
  %s0 = inlined_call_operand.vmem [shape: bf16[128,256], index: 0, kind: input, shape index: {}]
  %s1 = inlined_call_operand.vmem [shape: bf16[256,128], index: 1, kind: input, shape index: {}]
  %s2 = inlined_call_operand.vmem [shape: f32[1,128], index: 2, kind: input, shape index: {}]
  %s3 = inlined_call_operand.vmem [shape: bf16[128,128], index: 3, kind: output, shape index: {}]
  %s4 = sld [smem:[#allocation0]]
  $region53: #{_lambda_.19} parent=0
    _
  %s6 = ssub.s32 1, %s4
  %s7 = scalar_select 0, %s6, %s4
  loop: start=0, step=1, limit=4
  $region2: #{_lambda_.19} parent=0 // loop_pre_header
    _
  $region3: #{_lambda_.19} parent=0 // loop_header
    %s9 = sphi 0, %s13
    %p10 = scmp.ge.s32.totalorder %s9, 4
    %s16 = sphi 0, %s35
    %s17 = sphi 0, %s31
    %s18 = sphi 0, %s27
    %s19 = sphi 0, %s16
    %s20 = sphi 0, %s17
    %s21 = sphi 0, %s18
    %s22 = sphi 0, %s19
    %s23 = sphi 0, %s20
    %s24 = sphi 0, %s21
    %s40 = sphi 0, %s42
    %s43 = sphi 0, %s40
    %s44 = sphi 0, %s43
    %s60 = sphi 0, %s44
    %s68 = sphi 0, %s70
    %s71 = sphi 0, %s68
    %s72 = sphi 0, %s71
    %s88 = sphi 0, %s72
    %s94 = sphi 0, %s96
    %s97 = sphi 0, %s94
    %s98 = sphi 0, %s97
    %s114 = sphi 0, %s98
    %s122 = sphi 0, %s124
    %s125 = sphi 0, %s122
    %s126 = sphi 0, %s125
    %s142 = sphi 0, %s126
  $region4: #{_lambda_.19} parent=0 // loop_header_branch
    %12 = sbr.rel (%p10) target = $region8
  $region5: #{_lambda_.19} parent=0 // loop_body
    %s14 = ssub.s32 %s9, 1
    %s15 = ssub.s32 %s9, 2
    %s25 = sadd.s32 1, %s18
    %p26 = scmp.ge.s32.totalorder %s25, 1
    %s27 = scalar_select %p26, 0, %s25
    %s28 = sadd.s32 1, %s17
    %s29 = scalar_select %p26, %s28, %s17
    %p30 = scmp.ge.s32.totalorder %s29, 1
    %s31 = scalar_select %p30, 0, %s29
    %s32 = sadd.s32 1, %s16
    %s33 = scalar_select %p30, %s32, %s16
    %p34 = scmp.ge.s32.totalorder %s33, 2
    %s35 = scalar_select %p34, 0, %s33
    %s36 = ssub.s32 %s16, %s35
    %s37 = ssub.s32 %s18, %s27
    %s38 = sor.u32 %s36, %s37
    %p39 = scmp.eq.s32.totalorder %s38, 0
    %s41 = sadd.s32 %s40, 1
    %s42 = scalar_select %p39, %s40, %s41
    %p45 = pneg %p39
    %p46 = scmp.eq.s32.totalorder %s9, 1
    %p47 = por %p45, %p46
    %p48 = scmp.ne.s32.totalorder %s40, %s43
    %p49 = scmp.eq.s32.totalorder %s9, 0
    %p50 = por %p48, %p49
    %p51 = scmp.ne.s32.totalorder %s40, %s43
    %p52 = scmp.eq.s32.totalorder %s14, 1
    %p53 = por %p51, %p52
    %p54 = scmp.ne.s32.totalorder %s43, %s44
    %p55 = scmp.eq.s32.totalorder %s14, 0
    %p56 = por %p54, %p55
    %p57 = scmp.ne.s32.totalorder %s43, %s44
    %p58 = scmp.eq.s32.totalorder %s15, 1
    %p59 = por %p57, %p58
    %p61 = scmp.ne.s32.totalorder %s44, %s60
    %p62 = scmp.eq.s32.totalorder %s15, 0
    %p63 = por %p61, %p62
    %s64 = ssub.s32 %s18, %s27
    %s65 = ssub.s32 %s17, %s31
    %s66 = sor.u32 %s64, %s65
    %p67 = scmp.eq.s32.totalorder %s66, 0
    %s69 = sadd.s32 %s68, 1
    %s70 = scalar_select %p67, %s68, %s69
    %p73 = pneg %p67
    %p74 = scmp.eq.s32.totalorder %s9, 1
    %p75 = por %p73, %p74
    %p76 = scmp.ne.s32.totalorder %s68, %s71
    %p77 = scmp.eq.s32.totalorder %s9, 0
    %p78 = por %p76, %p77
    %p79 = scmp.ne.s32.totalorder %s68, %s71
    %p80 = scmp.eq.s32.totalorder %s14, 1
    %p81 = por %p79, %p80
    %p82 = scmp.ne.s32.totalorder %s71, %s72
    %p83 = scmp.eq.s32.totalorder %s14, 0
    %p84 = por %p82, %p83
    %p85 = scmp.ne.s32.totalorder %s71, %s72
    %p86 = scmp.eq.s32.totalorder %s15, 1
    %p87 = por %p85, %p86
    %p89 = scmp.ne.s32.totalorder %s72, %s88
    %p90 = scmp.eq.s32.totalorder %s15, 0
    %p91 = por %p89, %p90
    %s92 = ssub.s32 %s17, %s31
    %p93 = scmp.eq.s32.totalorder %s92, 0
    %s95 = sadd.s32 %s94, 1
    %s96 = scalar_select %p93, %s94, %s95
    %p99 = pneg %p93
    %p100 = scmp.eq.s32.totalorder %s9, 1
    %p101 = por %p99, %p100
    %p102 = scmp.ne.s32.totalorder %s94, %s97
    %p103 = scmp.eq.s32.totalorder %s9, 0
    %p104 = por %p102, %p103
    %p105 = scmp.ne.s32.totalorder %s94, %s97
    %p106 = scmp.eq.s32.totalorder %s14, 1
    %p107 = por %p105, %p106
    %p108 = scmp.ne.s32.totalorder %s97, %s98
    %p109 = scmp.eq.s32.totalorder %s14, 0
    %p110 = por %p108, %p109
    %p111 = scmp.ne.s32.totalorder %s97, %s98
    %p112 = scmp.eq.s32.totalorder %s15, 1
    %p113 = por %p111, %p112
    %p115 = scmp.ne.s32.totalorder %s98, %s114
    %p116 = scmp.eq.s32.totalorder %s15, 0
    %p117 = por %p115, %p116
    %s118 = ssub.s32 %s16, %s35
    %s119 = ssub.s32 %s17, %s31
    %s120 = sor.u32 %s118, %s119
    %p121 = scmp.eq.s32.totalorder %s120, 0
    %s123 = sadd.s32 %s122, 1
    %s124 = scalar_select %p121, %s122, %s123
    %p127 = pneg %p121
    %p128 = scmp.eq.s32.totalorder %s9, 1
    %p129 = por %p127, %p128
    %p130 = scmp.ne.s32.totalorder %s122, %s125
    %p131 = scmp.eq.s32.totalorder %s9, 0
    %p132 = por %p130, %p131
    %p133 = scmp.ne.s32.totalorder %s122, %s125
    %p134 = scmp.eq.s32.totalorder %s14, 1
    %p135 = por %p133, %p134
    %p136 = scmp.ne.s32.totalorder %s125, %s126
    %p137 = scmp.eq.s32.totalorder %s14, 0
    %p138 = por %p136, %p137
    %p139 = scmp.ne.s32.totalorder %s125, %s126
    %p140 = scmp.eq.s32.totalorder %s15, 1
    %p141 = por %p139, %p140
    %p143 = scmp.ne.s32.totalorder %s126, %s142
    %p144 = scmp.eq.s32.totalorder %s15, 0
    %p145 = por %p143, %p144
    %p146 = scmp.le.s32.totalorder 1, %s9
    %p147 = scmp.lt.s32.totalorder %s9, 3
    %p148 = pnand %p146, %p147
    %p149 = pneg %p148
    // Predicated region
    $region9: #{_lambda_.19} parent=5 // pred_check
      _
    $region10: #{_lambda_.19} parent=5 // pred_check_branch
      %151 = sbr.rel (%p148) target = $region12
    $region11: #{_lambda_.19} parent=5 // pred_region
      %s152 = ssub.s32 %s9, 1
      // Predicated region
      $region13: #{_lambda_.19} parent=11 // pred_check
        %p153 = pneg %p84
      $region14: #{_lambda_.19} parent=11 // pred_check_branch
        %155 = sbr.rel (%p153) target = $region16
      $region15: #{_lambda_.19} parent=11 // pred_region
        %s156 = smul.u32 32, %s21
        %p157 = scmp.lt.s32.totalorder %s156, 31
        %s158 = scalar_select %p157, %s156, 31
        %p159 = scmp.lt.s32.totalorder %s20, 0
        %s160 = scalar_select %p159, %s20, 0
        %s161 = sadd.s32 %s160, %s158
        %s162 = smul.addr %s161, 4
        %s163 = scalar_lea.vmem %s1, %s162
        %s164 = smul.u32 32, %s21
      $region16: #{_lambda_.19} parent=11 // pred_fallthru
        _
      // Predicated region
      $region17: #{_lambda_.19} parent=11 // pred_check
        %p165 = pneg %p110
      $region18: #{_lambda_.19} parent=11 // pred_check_branch
        %167 = sbr.rel (%p165) target = $region20
      $region19: #{_lambda_.19} parent=11 // pred_region
        %p168 = scmp.lt.s32.totalorder %s20, 0
        %s169 = scalar_select %p168, %s20, 0
        %s170 = scalar_lea.vmem %s2, %s169
      $region20: #{_lambda_.19} parent=11 // pred_fallthru
        _
    $region12: #{_lambda_.19} parent=5 // pred_fallthru
      _
    %p171 = scmp.lt.s32.totalorder %s9, 2
    // Predicated region
    $region21: #{_lambda_.19} parent=5 // pred_check
      %p172 = pneg %p171
    $region22: #{_lambda_.19} parent=5 // pred_check_branch
      %174 = sbr.rel (%p172) target = $region24
    $region23: #{_lambda_.19} parent=5 // pred_region
      // Predicated region
      $region25: #{_lambda_.19} parent=23 // pred_check
        %p175 = pneg %p50
      $region26: #{_lambda_.19} parent=23 // pred_check_branch
        %177 = sbr.rel (%p175) target = $region28
      $region27: #{_lambda_.19} parent=23 // pred_region
        %s178 = smul.u32 8, %s16
        %s179 = smul.u32 2, %s18
        %p180 = scmp.lt.s32.totalorder %s178, 15
        %s181 = scalar_select %p180, %s178, 15
        %p182 = scmp.lt.s32.totalorder %s179, 1
        %s183 = scalar_select %p182, %s179, 1
        %s184 = smul.addr %s181, 2
        %s185 = sadd.s32 %s183, %s184
        %s186 = smul.addr %s185, 4
        %s187 = scalar_lea.vmem %s0, %s186
        %s188 = smul.u32 8, %s16
        %s189 = smul.u32 2, %s18
      $region28: #{_lambda_.19} parent=23 // pred_fallthru
        _
    $region24: #{_lambda_.19} parent=5 // pred_fallthru
      _
    %p190 = scmp.le.s32.totalorder 1, %s9
    %p191 = scmp.lt.s32.totalorder %s9, 3
    %p192 = pnand %p190, %p191
    %p193 = pneg %p192
    // Predicated region
    $region29: #{_lambda_.19} parent=5 // pred_check
      _
    $region30: #{_lambda_.19} parent=5 // pred_check_branch
      %195 = sbr.rel (%p192) target = $region32
    $region31: #{_lambda_.19} parent=5 // pred_region
      %s196 = ssub.s32 %s9, 1
      %s197 = smul.u32 8, %s19
      %s198 = smul.u32 2, %s21
      %p199 = scmp.lt.s32.totalorder %s197, 15
      %s200 = scalar_select %p199, %s197, 15
      %p201 = scmp.lt.s32.totalorder %s198, 1
      %s202 = scalar_select %p201, %s198, 1
      %s203 = smul.addr %s200, 2
      %s204 = sadd.s32 %s202, %s203
      %s205 = smul.addr %s204, 4
      %s206 = scalar_lea.vmem %s0, %s205
      %p207 = pneg %p56
      %p208 = pneg %p53
      %s209 = smul.u32 32, %s21
      %p210 = scmp.lt.s32.totalorder %s209, 31
      %s211 = scalar_select %p210, %s209, 31
      %p212 = scmp.lt.s32.totalorder %s20, 0
      %s213 = scalar_select %p212, %s20, 0
      %s214 = sadd.s32 %s213, %s211
      %s215 = smul.addr %s214, 4
      %s216 = scalar_lea.vmem %s1, %s215
      %p217 = pneg %p84
      %p218 = pneg %p81
      %p219 = scmp.lt.s32.totalorder %s20, 0
      %s220 = scalar_select %p219, %s20, 0
      %s221 = scalar_lea.vmem %s2, %s220
      %p222 = pneg %p110
      %p223 = pneg %p107
      %p224 = pneg %p138
      %p225 = pneg %p135
      %s226 = smul.u32 8, %s19
      %p227 = scmp.lt.s32.totalorder %s226, 15
      %s228 = scalar_select %p227, %s226, 15
      %p229 = scmp.lt.s32.totalorder %s20, 0
      %s230 = scalar_select %p229, %s20, 0
      %s231 = sadd.s32 %s230, %s228
      %s232 = smul.addr %s231, 4
      %s233 = scalar_lea.vmem %s3, %s232
      %s234 = smul.u32 8, %s19
      %s235 = smul.u32 2, %s21
      %p236 = scmp.lt.s32.totalorder %s234, 15
      %s237 = scalar_select %p236, %s234, 15
      %p238 = scmp.lt.s32.totalorder %s235, 1
      %s239 = scalar_select %p238, %s235, 1
      %s240 = smul.addr %s237, 2
      %s241 = sadd.s32 %s239, %s240
      %s242 = smul.addr %s241, 4
      %s243 = scalar_lea.vmem %s0, %s242
      %s244 = smul.u32 8, %s19
      %s245 = smul.u32 2, %s21
      %s246 = smul.u32 32, %s21
      %p247 = scmp.lt.s32.totalorder %s246, 31
      %s248 = scalar_select %p247, %s246, 31
      %p249 = scmp.lt.s32.totalorder %s20, 0
      %s250 = scalar_select %p249, %s20, 0
      %s251 = sadd.s32 %s250, %s248
      %s252 = smul.addr %s251, 4
      %s253 = scalar_lea.vmem %s1, %s252
      %s254 = smul.u32 32, %s21
      %p255 = scmp.lt.s32.totalorder %s20, 0
      %s256 = scalar_select %p255, %s20, 0
      %s257 = scalar_lea.vmem %s2, %s256
      %s258 = smul.u32 8, %s19
      %p259 = scmp.lt.s32.totalorder %s258, 15
      %s260 = scalar_select %p259, %s258, 15
      %p261 = scmp.lt.s32.totalorder %s20, 0
      %s262 = scalar_select %p261, %s20, 0
      %s263 = sadd.s32 %s262, %s260
      %s264 = smul.addr %s263, 4
      %s265 = scalar_lea.vmem %s3, %s264
      %s266 = smul.u32 8, %s19
      %p267 = scmp.eq.s32.totalorder %s21, 0
      // Predicated region
      $region33: #{_lambda_.19} parent=31 // pred_check
        %p268 = pneg %p267
      $region34: #{_lambda_.19} parent=31 // pred_check_branch
        %270 = sbr.rel (%p268) target = $region36
      $region35: #{_lambda_.19} parent=31 // pred_region
        %271 = vst [vmem:[#allocation2] sm:$0xff] 0.0
        %272 = vst [vmem:[#allocation2 + $0x8] sm:$0xff] 0.0
        %273 = vst [vmem:[#allocation2 + $0x10] sm:$0xff] 0.0
        %274 = vst [vmem:[#allocation2 + $0x18] sm:$0xff] 0.0
        %275 = vst [vmem:[#allocation2 + $0x20] sm:$0xff] 0.0
        %276 = vst [vmem:[#allocation2 + $0x28] sm:$0xff] 0.0
        %277 = vst [vmem:[#allocation2 + $0x30] sm:$0xff] 0.0
        %278 = vst [vmem:[#allocation2 + $0x38] sm:$0xff] 0.0
      $region36: #{_lambda_.19} parent=31 // pred_fallthru
        _
      %v279 = vld [vmem:[#allocation2] sm:$0xff]
      %v280 = vld [vmem:[#allocation2 + $0x8] sm:$0xff]
      %v281 = vld [vmem:[#allocation2 + $0x10] sm:$0xff]
      %v282 = vld [vmem:[#allocation2 + $0x18] sm:$0xff]
      %v283 = vld [vmem:[#allocation2 + $0x20] sm:$0xff]
      %v284 = vld [vmem:[#allocation2 + $0x28] sm:$0xff]
      %v285 = vld [vmem:[#allocation2 + $0x30] sm:$0xff]
      %v286 = vld [vmem:[#allocation2 + $0x38] sm:$0xff]
      %v287 = vld [vmem:[%s243] sm:$0xff]
      %v288 = vld [vmem:[%s243 + $0x8] sm:$0xff]
      %v289 = vld [vmem:[%s243 + $0x10] sm:$0xff]
      %v290 = vld [vmem:[%s243 + $0x18] sm:$0xff]
      %v291 = vld [vmem:[%s243 + $0x20] sm:$0xff]
      %v292 = vld [vmem:[%s243 + $0x28] sm:$0xff]
      %v293 = vld [vmem:[%s243 + $0x30] sm:$0xff]
      %v294 = vld [vmem:[%s243 + $0x38] sm:$0xff]
      %v295 = vld [vmem:[%s253] sm:$0xf]
      %v296 = vld [vmem:[%s253 + $0x4] sm:$0xf]
      %v297 = vld [vmem:[%s253 + $0x8] sm:$0xf]
      %v298 = vld [vmem:[%s253 + $0xc] sm:$0xf]
      %v299 = vld [vmem:[%s253 + $0x10] sm:$0xf]
      %v300 = vld [vmem:[%s253 + $0x14] sm:$0xf]
      %v301 = vld [vmem:[%s253 + $0x18] sm:$0xf]
      %v302 = vld [vmem:[%s253 + $0x1c] sm:$0xf]
      %v303 = vld [vmem:[%s253 + $0x20] sm:$0xf]
      %v304 = vld [vmem:[%s253 + $0x24] sm:$0xf]
      %v305 = vld [vmem:[%s253 + $0x28] sm:$0xf]
      %v306 = vld [vmem:[%s253 + $0x2c] sm:$0xf]
      %v307 = vld [vmem:[%s253 + $0x30] sm:$0xf]
      %v308 = vld [vmem:[%s253 + $0x34] sm:$0xf]
      %v309 = vld [vmem:[%s253 + $0x38] sm:$0xf]
      %v310 = vld [vmem:[%s253 + $0x3c] sm:$0xf]
      %v311 = vld [vmem:[%s253 + $0x40] sm:$0xf]
      %v312 = vld [vmem:[%s253 + $0x44] sm:$0xf]
      %v313 = vld [vmem:[%s253 + $0x48] sm:$0xf]
      %v314 = vld [vmem:[%s253 + $0x4c] sm:$0xf]
      %v315 = vld [vmem:[%s253 + $0x50] sm:$0xf]
      %v316 = vld [vmem:[%s253 + $0x54] sm:$0xf]
      %v317 = vld [vmem:[%s253 + $0x58] sm:$0xf]
      %v318 = vld [vmem:[%s253 + $0x5c] sm:$0xf]
      %v319 = vld [vmem:[%s253 + $0x60] sm:$0xf]
      %v320 = vld [vmem:[%s253 + $0x64] sm:$0xf]
      %v321 = vld [vmem:[%s253 + $0x68] sm:$0xf]
      %v322 = vld [vmem:[%s253 + $0x6c] sm:$0xf]
      %v323 = vld [vmem:[%s253 + $0x70] sm:$0xf]
      %v324 = vld [vmem:[%s253 + $0x74] sm:$0xf]
      %v325 = vld [vmem:[%s253 + $0x78] sm:$0xf]
      %v326 = vld [vmem:[%s253 + $0x7c] sm:$0xf]
      %v335 = vunpack.c.l.b16 %v287
      %v336 = vunpack.c.h.b16 %v287
      %v337 = vunpack.c.l.b16 %v288
      %v338 = vunpack.c.h.b16 %v288
      %v339 = vunpack.c.l.b16 %v289
      %v340 = vunpack.c.h.b16 %v289
      %v341 = vunpack.c.l.b16 %v290
      %v342 = vunpack.c.h.b16 %v290
      %v343 = vunpack.c.l.b16 %v291
      %v344 = vunpack.c.h.b16 %v291
      %v345 = vunpack.c.l.b16 %v292
      %v346 = vunpack.c.h.b16 %v292
      %v347 = vunpack.c.l.b16 %v293
      %v348 = vunpack.c.h.b16 %v293
      %v349 = vunpack.c.l.b16 %v294
      %v350 = vunpack.c.h.b16 %v294
      %v351 = vpack.c.b16 %v337, %v335
      %v352 = vpack.c.b16 %v338, %v336
      %v353 = vpack.c.b16 %v341, %v339
      %v354 = vpack.c.b16 %v342, %v340
      %v355 = vpack.c.b16 %v345, %v343
      %v356 = vpack.c.b16 %v346, %v344
      %v357 = vpack.c.b16 %v349, %v347
      %v358 = vpack.c.b16 %v350, %v348
      %v399 = vunpack.c.l.b16 %v295
      %v400 = vunpack.c.l.b16 %v296
      %v401 = vunpack.c.l.b16 %v297
      %v402 = vunpack.c.l.b16 %v298
      %v403 = vunpack.c.l.b16 %v299
      %v404 = vunpack.c.l.b16 %v300
      %v405 = vunpack.c.l.b16 %v301
      %v406 = vunpack.c.l.b16 %v302
      %v407 = vunpack.c.l.b16 %v303
      %v408 = vunpack.c.l.b16 %v304
      %v409 = vunpack.c.l.b16 %v305
      %v410 = vunpack.c.l.b16 %v306
      %v411 = vunpack.c.l.b16 %v307
      %v412 = vunpack.c.l.b16 %v308
      %v413 = vunpack.c.l.b16 %v309
      %v414 = vunpack.c.l.b16 %v310
      %v415 = vunpack.c.l.b16 %v311
      %v416 = vunpack.c.l.b16 %v312
      %v417 = vunpack.c.l.b16 %v313
      %v418 = vunpack.c.l.b16 %v314
      %v419 = vunpack.c.l.b16 %v315
      %v420 = vunpack.c.l.b16 %v316
      %v421 = vunpack.c.l.b16 %v317
      %v422 = vunpack.c.l.b16 %v318
      %v423 = vunpack.c.l.b16 %v319
      %v424 = vunpack.c.l.b16 %v320
      %v425 = vunpack.c.l.b16 %v321
      %v426 = vunpack.c.l.b16 %v322
      %v427 = vunpack.c.l.b16 %v323
      %v428 = vunpack.c.l.b16 %v324
      %v429 = vunpack.c.l.b16 %v325
      %v430 = vunpack.c.l.b16 %v326
      %v431 = vpack.c.b16 %v400, %v399
      %v432 = vpack.c.b16 %v402, %v401
      %v433 = vpack.c.b16 %v404, %v403
      %v434 = vpack.c.b16 %v406, %v405
      %v435 = vpack.c.b16 %v408, %v407
      %v436 = vpack.c.b16 %v410, %v409
      %v437 = vpack.c.b16 %v412, %v411
      %v438 = vpack.c.b16 %v414, %v413
      %v439 = vpack.c.b16 %v416, %v415
      %v440 = vpack.c.b16 %v418, %v417
      %v441 = vpack.c.b16 %v420, %v419
      %v442 = vpack.c.b16 %v422, %v421
      %v443 = vpack.c.b16 %v424, %v423
      %v444 = vpack.c.b16 %v426, %v425
      %v445 = vpack.c.b16 %v428, %v427
      %v446 = vpack.c.b16 %v430, %v429
      %463 = vmatpush.bf16.msra.mxu0 %v438
      %464 = vmatpush.bf16.msra.mxu0 %v437
      %465 = vmatpush.bf16.msra.mxu0 %v436
      %466 = vmatpush.bf16.msra.mxu0 %v435
      %467 = vmatpush.bf16.msra.mxu0 %v434
      %468 = vmatpush.bf16.msra.mxu0 %v433
      %469 = vmatpush.bf16.msra.mxu0 %v432
      %470 = vmatpush.bf16.msra.mxu0 %v431
      %471 = vmatmul.bf16.gmra.mxu0 %v351
      %v472 = vpop.f32.mrf.mxu0
      %v473 = vadd.f32 0.0, %v472
      %v474 = vpop.f32.mrf.mxu0
      %v475 = vadd.f32 0.0, %v474
      %476 = vmatmul.bf16.gmra.mxu0 %v353
      %v477 = vpop.f32.mrf.mxu0
      %v478 = vadd.f32 0.0, %v477
      %v479 = vpop.f32.mrf.mxu0
      %v480 = vadd.f32 0.0, %v479
      %481 = vmatmul.bf16.gmra.mxu0 %v355
      %v482 = vpop.f32.mrf.mxu0
      %v483 = vadd.f32 0.0, %v482
      %v484 = vpop.f32.mrf.mxu0
      %v485 = vadd.f32 0.0, %v484
      %486 = vmatmul.bf16.gmra.mxu0 %v357
      %v487 = vpop.f32.mrf.mxu0
      %v488 = vadd.f32 0.0, %v487
      %v489 = vpop.f32.mrf.mxu0
      %v490 = vadd.f32 0.0, %v489
      %491 = vdwg.mxu0
      %492 = vmatpush.bf16.msra.mxu0 %v446
      %493 = vmatpush.bf16.msra.mxu0 %v445
      %494 = vmatpush.bf16.msra.mxu0 %v444
      %495 = vmatpush.bf16.msra.mxu0 %v443
      %496 = vmatpush.bf16.msra.mxu0 %v442
      %497 = vmatpush.bf16.msra.mxu0 %v441
      %498 = vmatpush.bf16.msra.mxu0 %v440
      %499 = vmatpush.bf16.msra.mxu0 %v439
      %500 = vmatmul.bf16.gmra.mxu0 %v352
      %v501 = vpop.f32.mrf.mxu0
      %v502 = vadd.f32 %v473, %v501
      %v503 = vpop.f32.mrf.mxu0
      %v504 = vadd.f32 %v475, %v503
      %505 = vmatmul.bf16.gmra.mxu0 %v354
      %v506 = vpop.f32.mrf.mxu0
      %v507 = vadd.f32 %v478, %v506
      %v508 = vpop.f32.mrf.mxu0
      %v509 = vadd.f32 %v480, %v508
      %510 = vmatmul.bf16.gmra.mxu0 %v356
      %v511 = vpop.f32.mrf.mxu0
      %v512 = vadd.f32 %v483, %v511
      %v513 = vpop.f32.mrf.mxu0
      %v514 = vadd.f32 %v485, %v513
      %515 = vmatmul.bf16.gmra.mxu0 %v358
      %v516 = vpop.f32.mrf.mxu0
      %v517 = vadd.f32 %v488, %v516
      %v518 = vpop.f32.mrf.mxu0
      %v519 = vadd.f32 %v490, %v518
      %520 = vdwg.mxu0
      %v521 = vadd.f32 %v279, %v502
      %v522 = vadd.f32 %v280, %v504
      %v523 = vadd.f32 %v281, %v507
      %v524 = vadd.f32 %v282, %v509
      %v525 = vadd.f32 %v283, %v512
      %v526 = vadd.f32 %v284, %v514
      %v527 = vadd.f32 %v285, %v517
      %v528 = vadd.f32 %v286, %v519
      %529 = vst [vmem:[#allocation2] sm:$0xff] %v521
      %530 = vst [vmem:[#allocation2 + $0x8] sm:$0xff] %v522
      %531 = vst [vmem:[#allocation2 + $0x10] sm:$0xff] %v523
      %532 = vst [vmem:[#allocation2 + $0x18] sm:$0xff] %v524
      %533 = vst [vmem:[#allocation2 + $0x20] sm:$0xff] %v525
      %534 = vst [vmem:[#allocation2 + $0x28] sm:$0xff] %v526
      %535 = vst [vmem:[#allocation2 + $0x30] sm:$0xff] %v527
      %536 = vst [vmem:[#allocation2 + $0x38] sm:$0xff] %v528
      // Predicated region
      $region37: #{_lambda_.19} parent=31 // pred_check
        %p537 = pneg %p267
      $region38: #{_lambda_.19} parent=31 // pred_check_branch
        %539 = sbr.rel (%p537) target = $region40
      $region39: #{_lambda_.19} parent=31 // pred_region
        %v540 = vld [vmem:[#allocation2] sm:$0xff]
        %v541 = vld [vmem:[#allocation2 + $0x8] sm:$0xff]
        %v542 = vld [vmem:[#allocation2 + $0x10] sm:$0xff]
        %v543 = vld [vmem:[#allocation2 + $0x18] sm:$0xff]
        %v544 = vld [vmem:[#allocation2 + $0x20] sm:$0xff]
        %v545 = vld [vmem:[#allocation2 + $0x28] sm:$0xff]
        %v546 = vld [vmem:[#allocation2 + $0x30] sm:$0xff]
        %v547 = vld [vmem:[#allocation2 + $0x38] sm:$0xff]
        %v548 = vld [vmem:[%s257] sm:$0x1]
        %v550 = vperm.slane %v548, 0
        %v552 = vadd.f32 %v540, %v550
        %v553 = vadd.f32 %v541, %v550
        %v554 = vadd.f32 %v542, %v550
        %v555 = vadd.f32 %v543, %v550
        %v556 = vadd.f32 %v544, %v550
        %v557 = vadd.f32 %v545, %v550
        %v558 = vadd.f32 %v546, %v550
        %v559 = vadd.f32 %v547, %v550
        %vm560 = vcmp.gt.f32.partialorder %v552, 0.0
        %vm561 = vcmp.gt.f32.partialorder %v553, 0.0
        %vm562 = vcmp.gt.f32.partialorder %v554, 0.0
        %vm563 = vcmp.gt.f32.partialorder %v555, 0.0
        %vm564 = vcmp.gt.f32.partialorder %v556, 0.0
        %vm565 = vcmp.gt.f32.partialorder %v557, 0.0
        %vm566 = vcmp.gt.f32.partialorder %v558, 0.0
        %vm567 = vcmp.gt.f32.partialorder %v559, 0.0
        %v568 = vmul.f32 %v552, 0.1
        %v569 = vmul.f32 %v553, 0.1
        %v570 = vmul.f32 %v554, 0.1
        %v571 = vmul.f32 %v555, 0.1
        %v572 = vmul.f32 %v556, 0.1
        %v573 = vmul.f32 %v557, 0.1
        %v574 = vmul.f32 %v558, 0.1
        %v575 = vmul.f32 %v559, 0.1
        %v576 = vsel %vm560, %v552, %v568
        %v577 = vsel %vm561, %v553, %v569
        %v578 = vsel %vm562, %v554, %v570
        %v579 = vsel %vm563, %v555, %v571
        %v580 = vsel %vm564, %v556, %v572
        %v581 = vsel %vm565, %v557, %v573
        %v582 = vsel %vm566, %v558, %v574
        %v583 = vsel %vm567, %v559, %v575
        %v584 = vpack.c.bf16 %v576, %v576
        %v585 = vpack.c.bf16 %v577, %v577
        %v586 = vpack.c.bf16 %v578, %v578
        %v587 = vpack.c.bf16 %v579, %v579
        %v588 = vpack.c.bf16 %v580, %v580
        %v589 = vpack.c.bf16 %v581, %v581
        %v590 = vpack.c.bf16 %v582, %v582
        %v591 = vpack.c.bf16 %v583, %v583
        %592 = vst [vmem:[%s265] sm:$0xf] %v584
        %593 = vst [vmem:[%s265 + $0x4] sm:$0xf] %v585
        %594 = vst [vmem:[%s265 + $0x8] sm:$0xf] %v586
        %595 = vst [vmem:[%s265 + $0xc] sm:$0xf] %v587
        %596 = vst [vmem:[%s265 + $0x10] sm:$0xf] %v588
        %597 = vst [vmem:[%s265 + $0x14] sm:$0xf] %v589
        %598 = vst [vmem:[%s265 + $0x18] sm:$0xf] %v590
        %599 = vst [vmem:[%s265 + $0x1c] sm:$0xf] %v591
      $region40: #{_lambda_.19} parent=31 // pred_fallthru
        _
      %s600 = smul.u32 8, %s19
      %p601 = scmp.lt.s32.totalorder %s600, 15
      %s602 = scalar_select %p601, %s600, 15
      %p603 = scmp.lt.s32.totalorder %s20, 0
      %s604 = scalar_select %p603, %s20, 0
      %s605 = sadd.s32 %s604, %s602
      %s606 = smul.addr %s605, 4
      %s607 = scalar_lea.vmem %s3, %s606
      // Predicated region
      $region41: #{_lambda_.19} parent=31 // pred_check
        %p608 = pneg %p135
      $region42: #{_lambda_.19} parent=31 // pred_check_branch
        %610 = sbr.rel (%p608) target = $region44
      $region43: #{_lambda_.19} parent=31 // pred_region
        %s611 = smul.u32 8, %s19
      $region44: #{_lambda_.19} parent=31 // pred_fallthru
        _
    $region32: #{_lambda_.19} parent=5 // pred_fallthru
      _
    %p612 = scmp.le.s32.totalorder 2, %s9
    // Predicated region
    $region45: #{_lambda_.19} parent=5 // pred_check
      %p613 = pneg %p612
    $region46: #{_lambda_.19} parent=5 // pred_check_branch
      %615 = sbr.rel (%p613) target = $region48
    $region47: #{_lambda_.19} parent=5 // pred_region
      %s616 = ssub.s32 %s9, 2
      // Predicated region
      $region49: #{_lambda_.19} parent=47 // pred_check
        %p617 = pneg %p141
      $region50: #{_lambda_.19} parent=47 // pred_check_branch
        %619 = sbr.rel (%p617) target = $region52
      $region51: #{_lambda_.19} parent=47 // pred_region
        %s620 = smul.u32 8, %s22
        %p621 = scmp.lt.s32.totalorder %s620, 15
        %s622 = scalar_select %p621, %s620, 15
        %p623 = scmp.lt.s32.totalorder %s23, 0
        %s624 = scalar_select %p623, %s23, 0
        %s625 = sadd.s32 %s624, %s622
        %s626 = smul.addr %s625, 4
        %s627 = scalar_lea.vmem %s3, %s626
      $region52: #{_lambda_.19} parent=47 // pred_fallthru
        _
    $region48: #{_lambda_.19} parent=5 // pred_fallthru
      _
  $region6: #{_lambda_.19} parent=0 // loop_footer
    %s13 = sadd.s32 1, %s9
  $region7: #{_lambda_.19} parent=0 // loop_footer_branch
    %8 = sbr.rel target = $region3
  $region8: #{_lambda_.19} parent=0 // loop_exit
    _

// kernel: tile.26
$region0: #{tile.26}
  #allocation0 [shape = 's32[1]{0}', space=sflag, size = 0x4, scoped, tag = 'scoped memory for tile.26']
  %s0 = inlined_call_operand.vmem [shape: f32[3], index: 0, kind: input, shape index: {}]
  %s1 = inlined_call_operand.vmem [shape: f32[64,3], index: 1, kind: output, shape index: {}]
  // Predicated region
  $region2: #{tile.26} parent=0 // pred_check
    _
  $region3: #{tile.26} parent=0 // pred_check_branch
    %3 = sbr.rel (0) target = $region5
  $region4: #{tile.26} parent=0 // pred_region
    _
  $region5: #{tile.26} parent=0 // pred_fallthru
    _
  %v4 = vld [vmem:[%s0] ss:$0 sm:$0xff]
  %5 = vst [vmem:[%s1] sm:$0xff] %v4
  %s6 = scalar_lea.vmem %s1, 8
  %7 = vst [vmem:[%s6] sm:$0xff] %v4
  %s8 = scalar_lea.vmem %s1, 16
  %9 = vst [vmem:[%s8] sm:$0xff] %v4
  %s10 = scalar_lea.vmem %s1, 24
  %11 = vst [vmem:[%s10] sm:$0xff] %v4
  %s12 = scalar_lea.vmem %s1, 32
  %13 = vst [vmem:[%s12] sm:$0xff] %v4
  %s14 = scalar_lea.vmem %s1, 40
  %15 = vst [vmem:[%s14] sm:$0xff] %v4
  %s16 = scalar_lea.vmem %s1, 48
  %17 = vst [vmem:[%s16] sm:$0xff] %v4
  %s18 = scalar_lea.vmem %s1, 56
  %19 = vst [vmem:[%s18] sm:$0xff] %v4

// kernel: _lambda_.21
$region0: #{_lambda_.21}
  #allocation0 [shape = 'u32[]', space=smem, size = 0x4, offset = 0x4, fixed_abs, tag = 'smem constant byte address 0x4 - core index']
  #allocation1 [shape = 'u32[72,128]{1,0:T(1,128)}', space=vmem, size = 0x9000, scoped, tag = 'internal scratch']
  %s0 = inlined_call_operand.vmem [shape: bf16[2,7,192], index: 0, kind: input, shape index: {}]
  %s1 = inlined_call_operand.vmem [shape: f32[4,192], index: 1, kind: input, shape index: {}]
  %s2 = inlined_call_operand.vmem [shape: f32[2,7,192], index: 2, kind: output, shape index: {}]
  %s3 = sld [smem:[#allocation0]]
  $region41: #{_lambda_.21} parent=0
    _
  %s5 = ssub.s32 1, %s3
  %s6 = scalar_select 0, %s5, %s3
  loop: start=0, step=1, limit=4
  $region2: #{_lambda_.21} parent=0 // loop_pre_header
    _
  $region3: #{_lambda_.21} parent=0 // loop_header
    %s8 = sphi 0, %s12
    %p9 = scmp.ge.s32.totalorder %s8, 4
    %s18 = sphi 0, %s20
    %s21 = sphi 0, %s18
    %s22 = sphi 0, %s21
    %s38 = sphi 0, %s22
    %s42 = sphi 0, %s42
    %s44 = sphi 0, %s42
    %s45 = sphi 0, %s44
    %s59 = sphi 0, %s45
    %s65 = sphi 0, %s67
    %s68 = sphi 0, %s65
    %s69 = sphi 0, %s68
    %s85 = sphi 0, %s69
  $region4: #{_lambda_.21} parent=0 // loop_header_branch
    %11 = sbr.rel (%p9) target = $region8
  $region5: #{_lambda_.21} parent=0 // loop_body
    %s13 = ssub.s32 %s8, 1
    %s14 = ssub.s32 %s8, 2
    %s15 = sadd.s32 %s8, 1
    %s16 = ssub.s32 %s8, %s15
    %p17 = scmp.eq.s32.totalorder %s16, 0
    %s19 = sadd.s32 %s18, 1
    %s20 = scalar_select %p17, %s18, %s19
    %p23 = pneg %p17
    %p24 = scmp.eq.s32.totalorder %s8, 1
    %p25 = por %p23, %p24
    %p26 = scmp.ne.s32.totalorder %s18, %s21
    %p27 = scmp.eq.s32.totalorder %s8, 0
    %p28 = por %p26, %p27
    %p29 = scmp.ne.s32.totalorder %s18, %s21
    %p30 = scmp.eq.s32.totalorder %s13, 1
    %p31 = por %p29, %p30
    %p32 = scmp.ne.s32.totalorder %s21, %s22
    %p33 = scmp.eq.s32.totalorder %s13, 0
    %p34 = por %p32, %p33
    %p35 = scmp.ne.s32.totalorder %s21, %s22
    %p36 = scmp.eq.s32.totalorder %s14, 1
    %p37 = por %p35, %p36
    %p39 = scmp.ne.s32.totalorder %s22, %s38
    %p40 = scmp.eq.s32.totalorder %s14, 0
    %p41 = por %p39, %p40
    %s43 = sadd.s32 %s42, 1
    %p46 = scmp.eq.s32.totalorder %s8, 1
    %p47 = scmp.ne.s32.totalorder %s42, %s44
    %p48 = scmp.eq.s32.totalorder %s8, 0
    %p49 = por %p47, %p48
    %p50 = scmp.ne.s32.totalorder %s42, %s44
    %p51 = scmp.eq.s32.totalorder %s13, 1
    %p52 = por %p50, %p51
    %p53 = scmp.ne.s32.totalorder %s44, %s45
    %p54 = scmp.eq.s32.totalorder %s13, 0
    %p55 = por %p53, %p54
    %p56 = scmp.ne.s32.totalorder %s44, %s45
    %p57 = scmp.eq.s32.totalorder %s14, 1
    %p58 = por %p56, %p57
    %p60 = scmp.ne.s32.totalorder %s45, %s59
    %p61 = scmp.eq.s32.totalorder %s14, 0
    %p62 = por %p60, %p61
    %s63 = ssub.s32 %s8, %s15
    %p64 = scmp.eq.s32.totalorder %s63, 0
    %s66 = sadd.s32 %s65, 1
    %s67 = scalar_select %p64, %s65, %s66
    %p70 = pneg %p64
    %p71 = scmp.eq.s32.totalorder %s8, 1
    %p72 = por %p70, %p71
    %p73 = scmp.ne.s32.totalorder %s65, %s68
    %p74 = scmp.eq.s32.totalorder %s8, 0
    %p75 = por %p73, %p74
    %p76 = scmp.ne.s32.totalorder %s65, %s68
    %p77 = scmp.eq.s32.totalorder %s13, 1
    %p78 = por %p76, %p77
    %p79 = scmp.ne.s32.totalorder %s68, %s69
    %p80 = scmp.eq.s32.totalorder %s13, 0
    %p81 = por %p79, %p80
    %p82 = scmp.ne.s32.totalorder %s68, %s69
    %p83 = scmp.eq.s32.totalorder %s14, 1
    %p84 = por %p82, %p83
    %p86 = scmp.ne.s32.totalorder %s69, %s85
    %p87 = scmp.eq.s32.totalorder %s14, 0
    %p88 = por %p86, %p87
    %p89 = scmp.le.s32.totalorder 1, %s8
    %p90 = scmp.lt.s32.totalorder %s8, 3
    %p91 = pnand %p89, %p90
    %p92 = pneg %p91
    // Predicated region
    $region9: #{_lambda_.21} parent=5 // pred_check
      _
    $region10: #{_lambda_.21} parent=5 // pred_check_branch
      %94 = sbr.rel (%p91) target = $region12
    $region11: #{_lambda_.21} parent=5 // pred_region
      %s95 = ssub.s32 %s8, 1
      // Predicated region
      $region13: #{_lambda_.21} parent=11 // pred_check
        %p96 = pneg %p55
      $region14: #{_lambda_.21} parent=11 // pred_check_branch
        %98 = sbr.rel (%p96) target = $region16
      $region15: #{_lambda_.21} parent=11 // pred_region
        _
      $region16: #{_lambda_.21} parent=11 // pred_fallthru
        _
    $region12: #{_lambda_.21} parent=5 // pred_fallthru
      _
    %p99 = scmp.lt.s32.totalorder %s8, 2
    // Predicated region
    $region17: #{_lambda_.21} parent=5 // pred_check
      %p100 = pneg %p99
    $region18: #{_lambda_.21} parent=5 // pred_check_branch
      %102 = sbr.rel (%p100) target = $region20
    $region19: #{_lambda_.21} parent=5 // pred_region
      // Predicated region
      $region21: #{_lambda_.21} parent=19 // pred_check
        %p103 = pneg %p28
      $region22: #{_lambda_.21} parent=19 // pred_check_branch
        %105 = sbr.rel (%p103) target = $region24
      $region23: #{_lambda_.21} parent=19 // pred_region
        %p106 = scmp.lt.s32.totalorder %s8, 1
        %s107 = scalar_select %p106, %s8, 1
        %s108 = smul.addr %s107, 2
        %s109 = smul.addr %s108, 4
        %s110 = scalar_lea.vmem %s0, %s109
      $region24: #{_lambda_.21} parent=19 // pred_fallthru
        _
    $region20: #{_lambda_.21} parent=5 // pred_fallthru
      _
    %p111 = scmp.le.s32.totalorder 1, %s8
    %p112 = scmp.lt.s32.totalorder %s8, 3
    %p113 = pnand %p111, %p112
    %p114 = pneg %p113
    // Predicated region
    $region25: #{_lambda_.21} parent=5 // pred_check
      _
    $region26: #{_lambda_.21} parent=5 // pred_check_branch
      %116 = sbr.rel (%p113) target = $region28
    $region27: #{_lambda_.21} parent=5 // pred_region
      %s117 = ssub.s32 %s8, 1
      %p118 = scmp.lt.s32.totalorder %s13, 1
      %s119 = scalar_select %p118, %s13, 1
      %s120 = smul.addr %s119, 2
      %s121 = smul.addr %s120, 4
      %s122 = scalar_lea.vmem %s0, %s121
      %p123 = pneg %p34
      %p124 = pneg %p31
      %p125 = pneg %p55
      %p126 = pneg %p52
      %p127 = pneg %p81
      %p128 = pneg %p78
      %p129 = scmp.lt.s32.totalorder %s13, 1
      %s130 = scalar_select %p129, %s13, 1
      %s131 = smul.addr %s130, 2
      %s132 = smul.addr %s131, 8
      %s133 = scalar_lea.vmem %s2, %s132
      %p134 = scmp.lt.s32.totalorder %s13, 1
      %s135 = scalar_select %p134, %s13, 1
      %s136 = smul.addr %s135, 2
      %s137 = smul.addr %s136, 4
      %s138 = scalar_lea.vmem %s0, %s137
      %p139 = scmp.lt.s32.totalorder %s13, 1
      %s140 = scalar_select %p139, %s13, 1
      %s141 = smul.addr %s140, 2
      %s142 = smul.addr %s141, 8
      %s143 = scalar_lea.vmem %s2, %s142
      %v144 = vld [vmem:[%s138] sm:$0xff]
      %v145 = vunpack.c.l.bf16 %v144
      %v146 = vunpack.c.h.bf16 %v144
      %v147 = vld [vmem:[%s1] sm:$0xff]
      %v148 = vxor.u32 %v145, 2147483648
      %v149 = vxor.u32 %v146, 2147483648
      %v150 = vmul.f32 %v148, 1.442695
      %v151 = vpow.pop %v150
      %v152 = vmul.f32 %v149, 1.442695
      %v153 = vpow.pop %v152
      %v154 = vadd.f32 %v151, 1.0
      %v155 = vadd.f32 %v153, 1.0
      %v156 = vrcp.pop %v154
      %v157 = vmul.f32 %v154, %v156
      %v158 = vsub.f32 1.0, %v157
      %v159 = vmul.f32 %v156, %v158
      %v160 = vadd.f32 %v156, %v159
      %vm161 = vweird.f32 %v154
      %vm162 = vweird.f32 %v156
      %vm163 = vmor %vm161, %vm162
      %v164 = vsel %vm163, %v156, %v160
      %v165 = vand.u32 2147483647, %v154
      %vm166 = vcmp.eq.f32.partialorder %v165, 8.507059e+37
      %v167 = vand.u32 %v154, 2147483648
      %v168 = vor.u32 1.1754944e-38, %v167
      %v169 = vsel %vm166, %v168, %v164
      %v170 = vmul.f32 1.0, %v169
      %v171 = vrcp.pop %v155
      %v172 = vmul.f32 %v155, %v171
      %v173 = vsub.f32 1.0, %v172
      %v174 = vmul.f32 %v171, %v173
      %v175 = vadd.f32 %v171, %v174
      %vm176 = vweird.f32 %v155
      %vm177 = vweird.f32 %v171
      %vm178 = vmor %vm176, %vm177
      %v179 = vsel %vm178, %v171, %v175
      %v180 = vand.u32 2147483647, %v155
      %vm181 = vcmp.eq.f32.partialorder %v180, 8.507059e+37
      %v182 = vand.u32 %v155, 2147483648
      %v183 = vor.u32 1.1754944e-38, %v182
      %v184 = vsel %vm181, %v183, %v179
      %v185 = vmul.f32 1.0, %v184
      %187 = vst [vmem:[#allocation1] ss:$2 sm:$0xff] %v147
      %v188 = vld.sshfl [vmem:[#allocation1] sm:$0xff pattern:$0x75316420]
      %v189 = vld.sshfl [vmem:[#allocation1 + $0x8] sm:$0xff pattern:$0x75316420]
      %v192 = vadd.f32 %v170, %v188
      %v193 = vadd.f32 %v185, %v189
      %v194 = vmul.f32 %v145, 1.442695
      %v195 = vpow.pop %v194
      %v196 = vmul.f32 %v146, 1.442695
      %v197 = vpow.pop %v196
      %198 = vst [vmem:[#allocation1] ss:$2 sm:$0xff] %v147
      %v199 = vld.sshfl [vmem:[#allocation1] sm:$0xff pattern:$0x75316420]
      %v200 = vld.sshfl [vmem:[#allocation1 + $0x8] sm:$0xff pattern:$0x75316420]
      %v203 = vmul.f32 %v195, %v199
      %v204 = vmul.f32 %v197, %v200
      %vm205 = vcmask 1041408
      %v206 = vsel %vm205, %v192, %v203
      %v207 = vsel %vm205, %v193, %v204
      %v208 = vmul.f32 %v206, 2.0
      %v209 = vmul.f32 %v207, 2.0
      %vm210 = vcmask 1043456
      %v211 = vsel %vm210, %v208, %v170
      %v212 = vsel %vm210, %v209, %v185
      %213 = vst [vmem:[%s143] sm:$0x7f] %v211
      %vm214 = vcmask 522240
      %215 = vst.msk [vmem:[%s143 + $0x8] sm:$0x7f] %vm214, %v212
      %p216 = scmp.lt.s32.totalorder %s13, 1
      %s217 = scalar_select %p216, %s13, 1
      %s218 = smul.addr %s217, 2
      %s219 = smul.addr %s218, 8
      %s220 = scalar_lea.vmem %s2, %s219
      // Predicated region
      $region29: #{_lambda_.21} parent=27 // pred_check
        %p221 = pneg %p78
      $region30: #{_lambda_.21} parent=27 // pred_check_branch
        %223 = sbr.rel (%p221) target = $region32
      $region31: #{_lambda_.21} parent=27 // pred_region
        _
      $region32: #{_lambda_.21} parent=27 // pred_fallthru
        _
    $region28: #{_lambda_.21} parent=5 // pred_fallthru
      _
    %p224 = scmp.le.s32.totalorder 2, %s8
    // Predicated region
    $region33: #{_lambda_.21} parent=5 // pred_check
      %p225 = pneg %p224
    $region34: #{_lambda_.21} parent=5 // pred_check_branch
      %227 = sbr.rel (%p225) target = $region36
    $region35: #{_lambda_.21} parent=5 // pred_region
      %s228 = ssub.s32 %s8, 2
      // Predicated region
      $region37: #{_lambda_.21} parent=35 // pred_check
        %p229 = pneg %p84
      $region38: #{_lambda_.21} parent=35 // pred_check_branch
        %231 = sbr.rel (%p229) target = $region40
      $region39: #{_lambda_.21} parent=35 // pred_region
        %p232 = scmp.lt.s32.totalorder %s14, 1
        %s233 = scalar_select %p232, %s14, 1
        %s234 = smul.addr %s233, 2
        %s235 = smul.addr %s234, 8
        %s236 = scalar_lea.vmem %s2, %s235
      $region40: #{_lambda_.21} parent=35 // pred_fallthru
        _
    $region36: #{_lambda_.21} parent=5 // pred_fallthru
      _
  $region6: #{_lambda_.21} parent=0 // loop_footer
    %s12 = sadd.s32 1, %s8
  $region7: #{_lambda_.21} parent=0 // loop_footer_branch
    %7 = sbr.rel target = $region3
  $region8: #{_lambda_.21} parent=0 // loop_exit
    _

// kernel: _lambda_.16
$region0: #{_lambda_.16}
  #allocation0 [shape = 'u32[]', space=smem, size = 0x4, offset = 0x4, fixed_abs, tag = 'smem constant byte address 0x4 - core index']
  #allocation1 [shape = 'u32[72,128]{1,0:T(1,128)}', space=vmem, size = 0x9000, scoped, tag = 'internal scratch']
  #allocation2 [shape = 'f32[16,128]{1,0:T(8,128)}', space=vmem, size = 0x2000, scoped, tag = 'scratch operand']
  %s0 = inlined_call_operand.vmem [shape: bf16[32,128], index: 0, kind: input, shape index: {}]
  %s1 = inlined_call_operand.vmem [shape: bf16[128,128], index: 1, kind: input, shape index: {}]
  %s2 = inlined_call_operand.vmem [shape: f32[1,128], index: 2, kind: input, shape index: {}]
  %s3 = inlined_call_operand.vmem [shape: bf16[32,128], index: 3, kind: output, shape index: {}]
  %s4 = sld [smem:[#allocation0]]
  $region53: #{_lambda_.16} parent=0
    _
  %s6 = ssub.s32 1, %s4
  %s7 = scalar_select 0, %s6, %s4
  loop: start=0, step=1, limit=4
  $region2: #{_lambda_.16} parent=0 // loop_pre_header
    _
  $region3: #{_lambda_.16} parent=0 // loop_header
    %s9 = sphi 0, %s13
    %p10 = scmp.ge.s32.totalorder %s9, 4
    %s16 = sphi 0, %s35
    %s17 = sphi 0, %s31
    %s18 = sphi 0, %s27
    %s19 = sphi 0, %s16
    %s20 = sphi 0, %s17
    %s21 = sphi 0, %s18
    %s22 = sphi 0, %s19
    %s23 = sphi 0, %s20
    %s24 = sphi 0, %s21
    %s40 = sphi 0, %s42
    %s43 = sphi 0, %s40
    %s44 = sphi 0, %s43
    %s60 = sphi 0, %s44
    %s68 = sphi 0, %s70
    %s71 = sphi 0, %s68
    %s72 = sphi 0, %s71
    %s88 = sphi 0, %s72
    %s94 = sphi 0, %s96
    %s97 = sphi 0, %s94
    %s98 = sphi 0, %s97
    %s114 = sphi 0, %s98
    %s122 = sphi 0, %s124
    %s125 = sphi 0, %s122
    %s126 = sphi 0, %s125
    %s142 = sphi 0, %s126
  $region4: #{_lambda_.16} parent=0 // loop_header_branch
    %12 = sbr.rel (%p10) target = $region8
  $region5: #{_lambda_.16} parent=0 // loop_body
    %s14 = ssub.s32 %s9, 1
    %s15 = ssub.s32 %s9, 2
    %s25 = sadd.s32 1, %s18
    %p26 = scmp.ge.s32.totalorder %s25, 1
    %s27 = scalar_select %p26, 0, %s25
    %s28 = sadd.s32 1, %s17
    %s29 = scalar_select %p26, %s28, %s17
    %p30 = scmp.ge.s32.totalorder %s29, 1
    %s31 = scalar_select %p30, 0, %s29
    %s32 = sadd.s32 1, %s16
    %s33 = scalar_select %p30, %s32, %s16
    %p34 = scmp.ge.s32.totalorder %s33, 2
    %s35 = scalar_select %p34, 0, %s33
    %s36 = ssub.s32 %s16, %s35
    %s37 = ssub.s32 %s18, %s27
    %s38 = sor.u32 %s36, %s37
    %p39 = scmp.eq.s32.totalorder %s38, 0
    %s41 = sadd.s32 %s40, 1
    %s42 = scalar_select %p39, %s40, %s41
    %p45 = pneg %p39
    %p46 = scmp.eq.s32.totalorder %s9, 1
    %p47 = por %p45, %p46
    %p48 = scmp.ne.s32.totalorder %s40, %s43
    %p49 = scmp.eq.s32.totalorder %s9, 0
    %p50 = por %p48, %p49
    %p51 = scmp.ne.s32.totalorder %s40, %s43
    %p52 = scmp.eq.s32.totalorder %s14, 1
    %p53 = por %p51, %p52
    %p54 = scmp.ne.s32.totalorder %s43, %s44
    %p55 = scmp.eq.s32.totalorder %s14, 0
    %p56 = por %p54, %p55
    %p57 = scmp.ne.s32.totalorder %s43, %s44
    %p58 = scmp.eq.s32.totalorder %s15, 1
    %p59 = por %p57, %p58
    %p61 = scmp.ne.s32.totalorder %s44, %s60
    %p62 = scmp.eq.s32.totalorder %s15, 0
    %p63 = por %p61, %p62
    %s64 = ssub.s32 %s18, %s27
    %s65 = ssub.s32 %s17, %s31
    %s66 = sor.u32 %s64, %s65
    %p67 = scmp.eq.s32.totalorder %s66, 0
    %s69 = sadd.s32 %s68, 1
    %s70 = scalar_select %p67, %s68, %s69
    %p73 = pneg %p67
    %p74 = scmp.eq.s32.totalorder %s9, 1
    %p75 = por %p73, %p74
    %p76 = scmp.ne.s32.totalorder %s68, %s71
    %p77 = scmp.eq.s32.totalorder %s9, 0
    %p78 = por %p76, %p77
    %p79 = scmp.ne.s32.totalorder %s68, %s71
    %p80 = scmp.eq.s32.totalorder %s14, 1
    %p81 = por %p79, %p80
    %p82 = scmp.ne.s32.totalorder %s71, %s72
    %p83 = scmp.eq.s32.totalorder %s14, 0
    %p84 = por %p82, %p83
    %p85 = scmp.ne.s32.totalorder %s71, %s72
    %p86 = scmp.eq.s32.totalorder %s15, 1
    %p87 = por %p85, %p86
    %p89 = scmp.ne.s32.totalorder %s72, %s88
    %p90 = scmp.eq.s32.totalorder %s15, 0
    %p91 = por %p89, %p90
    %s92 = ssub.s32 %s17, %s31
    %p93 = scmp.eq.s32.totalorder %s92, 0
    %s95 = sadd.s32 %s94, 1
    %s96 = scalar_select %p93, %s94, %s95
    %p99 = pneg %p93
    %p100 = scmp.eq.s32.totalorder %s9, 1
    %p101 = por %p99, %p100
    %p102 = scmp.ne.s32.totalorder %s94, %s97
    %p103 = scmp.eq.s32.totalorder %s9, 0
    %p104 = por %p102, %p103
    %p105 = scmp.ne.s32.totalorder %s94, %s97
    %p106 = scmp.eq.s32.totalorder %s14, 1
    %p107 = por %p105, %p106
    %p108 = scmp.ne.s32.totalorder %s97, %s98
    %p109 = scmp.eq.s32.totalorder %s14, 0
    %p110 = por %p108, %p109
    %p111 = scmp.ne.s32.totalorder %s97, %s98
    %p112 = scmp.eq.s32.totalorder %s15, 1
    %p113 = por %p111, %p112
    %p115 = scmp.ne.s32.totalorder %s98, %s114
    %p116 = scmp.eq.s32.totalorder %s15, 0
    %p117 = por %p115, %p116
    %s118 = ssub.s32 %s16, %s35
    %s119 = ssub.s32 %s17, %s31
    %s120 = sor.u32 %s118, %s119
    %p121 = scmp.eq.s32.totalorder %s120, 0
    %s123 = sadd.s32 %s122, 1
    %s124 = scalar_select %p121, %s122, %s123
    %p127 = pneg %p121
    %p128 = scmp.eq.s32.totalorder %s9, 1
    %p129 = por %p127, %p128
    %p130 = scmp.ne.s32.totalorder %s122, %s125
    %p131 = scmp.eq.s32.totalorder %s9, 0
    %p132 = por %p130, %p131
    %p133 = scmp.ne.s32.totalorder %s122, %s125
    %p134 = scmp.eq.s32.totalorder %s14, 1
    %p135 = por %p133, %p134
    %p136 = scmp.ne.s32.totalorder %s125, %s126
    %p137 = scmp.eq.s32.totalorder %s14, 0
    %p138 = por %p136, %p137
    %p139 = scmp.ne.s32.totalorder %s125, %s126
    %p140 = scmp.eq.s32.totalorder %s15, 1
    %p141 = por %p139, %p140
    %p143 = scmp.ne.s32.totalorder %s126, %s142
    %p144 = scmp.eq.s32.totalorder %s15, 0
    %p145 = por %p143, %p144
    %p146 = scmp.le.s32.totalorder 1, %s9
    %p147 = scmp.lt.s32.totalorder %s9, 3
    %p148 = pnand %p146, %p147
    %p149 = pneg %p148
    // Predicated region
    $region9: #{_lambda_.16} parent=5 // pred_check
      _
    $region10: #{_lambda_.16} parent=5 // pred_check_branch
      %151 = sbr.rel (%p148) target = $region12
    $region11: #{_lambda_.16} parent=5 // pred_region
      %s152 = ssub.s32 %s9, 1
      // Predicated region
      $region13: #{_lambda_.16} parent=11 // pred_check
        %p153 = pneg %p84
      $region14: #{_lambda_.16} parent=11 // pred_check_branch
        %155 = sbr.rel (%p153) target = $region16
      $region15: #{_lambda_.16} parent=11 // pred_region
        %s156 = smul.u32 16, %s21
        %p157 = scmp.lt.s32.totalorder %s156, 15
        %s158 = scalar_select %p157, %s156, 15
        %p159 = scmp.lt.s32.totalorder %s20, 0
        %s160 = scalar_select %p159, %s20, 0
        %s161 = sadd.s32 %s160, %s158
        %s162 = smul.addr %s161, 4
        %s163 = scalar_lea.vmem %s1, %s162
        %s164 = smul.u32 16, %s21
      $region16: #{_lambda_.16} parent=11 // pred_fallthru
        _
      // Predicated region
      $region17: #{_lambda_.16} parent=11 // pred_check
        %p165 = pneg %p110
      $region18: #{_lambda_.16} parent=11 // pred_check_branch
        %167 = sbr.rel (%p165) target = $region20
      $region19: #{_lambda_.16} parent=11 // pred_region
        %p168 = scmp.lt.s32.totalorder %s20, 0
        %s169 = scalar_select %p168, %s20, 0
        %s170 = scalar_lea.vmem %s2, %s169
      $region20: #{_lambda_.16} parent=11 // pred_fallthru
        _
    $region12: #{_lambda_.16} parent=5 // pred_fallthru
      _
    %p171 = scmp.lt.s32.totalorder %s9, 2
    // Predicated region
    $region21: #{_lambda_.16} parent=5 // pred_check
      %p172 = pneg %p171
    $region22: #{_lambda_.16} parent=5 // pred_check_branch
      %174 = sbr.rel (%p172) target = $region24
    $region23: #{_lambda_.16} parent=5 // pred_region
      // Predicated region
      $region25: #{_lambda_.16} parent=23 // pred_check
        %p175 = pneg %p50
      $region26: #{_lambda_.16} parent=23 // pred_check_branch
        %177 = sbr.rel (%p175) target = $region28
      $region27: #{_lambda_.16} parent=23 // pred_region
        %s178 = smul.u32 2, %s16
        %p179 = scmp.lt.s32.totalorder %s178, 3
        %s180 = scalar_select %p179, %s178, 3
        %p181 = scmp.lt.s32.totalorder %s18, 0
        %s182 = scalar_select %p181, %s18, 0
        %s183 = sadd.s32 %s182, %s180
        %s184 = smul.addr %s183, 4
        %s185 = scalar_lea.vmem %s0, %s184
        %s186 = smul.u32 2, %s16
      $region28: #{_lambda_.16} parent=23 // pred_fallthru
        _
    $region24: #{_lambda_.16} parent=5 // pred_fallthru
      _
    %p187 = scmp.le.s32.totalorder 1, %s9
    %p188 = scmp.lt.s32.totalorder %s9, 3
    %p189 = pnand %p187, %p188
    %p190 = pneg %p189
    // Predicated region
    $region29: #{_lambda_.16} parent=5 // pred_check
      _
    $region30: #{_lambda_.16} parent=5 // pred_check_branch
      %192 = sbr.rel (%p189) target = $region32
    $region31: #{_lambda_.16} parent=5 // pred_region
      %s193 = ssub.s32 %s9, 1
      %s194 = smul.u32 2, %s19
      %p195 = scmp.lt.s32.totalorder %s194, 3
      %s196 = scalar_select %p195, %s194, 3
      %p197 = scmp.lt.s32.totalorder %s21, 0
      %s198 = scalar_select %p197, %s21, 0
      %s199 = sadd.s32 %s198, %s196
      %s200 = smul.addr %s199, 4
      %s201 = scalar_lea.vmem %s0, %s200
      %p202 = pneg %p56
      %p203 = pneg %p53
      %s204 = smul.u32 16, %s21
      %p205 = scmp.lt.s32.totalorder %s204, 15
      %s206 = scalar_select %p205, %s204, 15
      %p207 = scmp.lt.s32.totalorder %s20, 0
      %s208 = scalar_select %p207, %s20, 0
      %s209 = sadd.s32 %s208, %s206
      %s210 = smul.addr %s209, 4
      %s211 = scalar_lea.vmem %s1, %s210
      %p212 = pneg %p84
      %p213 = pneg %p81
      %p214 = scmp.lt.s32.totalorder %s20, 0
      %s215 = scalar_select %p214, %s20, 0
      %s216 = scalar_lea.vmem %s2, %s215
      %p217 = pneg %p110
      %p218 = pneg %p107
      %p219 = pneg %p138
      %p220 = pneg %p135
      %s221 = smul.u32 2, %s19
      %p222 = scmp.lt.s32.totalorder %s221, 3
      %s223 = scalar_select %p222, %s221, 3
      %p224 = scmp.lt.s32.totalorder %s20, 0
      %s225 = scalar_select %p224, %s20, 0
      %s226 = sadd.s32 %s225, %s223
      %s227 = smul.addr %s226, 4
      %s228 = scalar_lea.vmem %s3, %s227
      %s229 = smul.u32 2, %s19
      %p230 = scmp.lt.s32.totalorder %s229, 3
      %s231 = scalar_select %p230, %s229, 3
      %p232 = scmp.lt.s32.totalorder %s21, 0
      %s233 = scalar_select %p232, %s21, 0
      %s234 = sadd.s32 %s233, %s231
      %s235 = smul.addr %s234, 4
      %s236 = scalar_lea.vmem %s0, %s235
      %s237 = smul.u32 2, %s19
      %s238 = smul.u32 16, %s21
      %p239 = scmp.lt.s32.totalorder %s238, 15
      %s240 = scalar_select %p239, %s238, 15
      %p241 = scmp.lt.s32.totalorder %s20, 0
      %s242 = scalar_select %p241, %s20, 0
      %s243 = sadd.s32 %s242, %s240
      %s244 = smul.addr %s243, 4
      %s245 = scalar_lea.vmem %s1, %s244
      %s246 = smul.u32 16, %s21
      %p247 = scmp.lt.s32.totalorder %s20, 0
      %s248 = scalar_select %p247, %s20, 0
      %s249 = scalar_lea.vmem %s2, %s248
      %s250 = smul.u32 2, %s19
      %p251 = scmp.lt.s32.totalorder %s250, 3
      %s252 = scalar_select %p251, %s250, 3
      %p253 = scmp.lt.s32.totalorder %s20, 0
      %s254 = scalar_select %p253, %s20, 0
      %s255 = sadd.s32 %s254, %s252
      %s256 = smul.addr %s255, 4
      %s257 = scalar_lea.vmem %s3, %s256
      %s258 = smul.u32 2, %s19
      %p259 = scmp.eq.s32.totalorder %s21, 0
      // Predicated region
      $region33: #{_lambda_.16} parent=31 // pred_check
        %p260 = pneg %p259
      $region34: #{_lambda_.16} parent=31 // pred_check_branch
        %262 = sbr.rel (%p260) target = $region36
      $region35: #{_lambda_.16} parent=31 // pred_region
        %263 = vst [vmem:[#allocation2] sm:$0xff] 0.0
        %264 = vst [vmem:[#allocation2 + $0x8] sm:$0xff] 0.0
      $region36: #{_lambda_.16} parent=31 // pred_fallthru
        _
      %v265 = vld [vmem:[#allocation2] sm:$0xff]
      %v266 = vld [vmem:[#allocation2 + $0x8] sm:$0xff]
      %v267 = vld [vmem:[%s236] sm:$0xf]
      %v268 = vld [vmem:[%s236 + $0x4] sm:$0xf]
      %v269 = vld [vmem:[%s245] sm:$0xf]
      %v270 = vld [vmem:[%s245 + $0x4] sm:$0xf]
      %v271 = vld [vmem:[%s245 + $0x8] sm:$0xf]
      %v272 = vld [vmem:[%s245 + $0xc] sm:$0xf]
      %v273 = vld [vmem:[%s245 + $0x10] sm:$0xf]
      %v274 = vld [vmem:[%s245 + $0x14] sm:$0xf]
      %v275 = vld [vmem:[%s245 + $0x18] sm:$0xf]
      %v276 = vld [vmem:[%s245 + $0x1c] sm:$0xf]
      %v277 = vld [vmem:[%s245 + $0x20] sm:$0xf]
      %v278 = vld [vmem:[%s245 + $0x24] sm:$0xf]
      %v279 = vld [vmem:[%s245 + $0x28] sm:$0xf]
      %v280 = vld [vmem:[%s245 + $0x2c] sm:$0xf]
      %v281 = vld [vmem:[%s245 + $0x30] sm:$0xf]
      %v282 = vld [vmem:[%s245 + $0x34] sm:$0xf]
      %v283 = vld [vmem:[%s245 + $0x38] sm:$0xf]
      %v284 = vld [vmem:[%s245 + $0x3c] sm:$0xf]
      %v287 = vunpack.c.l.b16 %v267
      %v288 = vunpack.c.l.b16 %v268
      %v289 = vpack.c.b16 %v288, %v287
      %v307 = vunpack.c.l.b16 %v269
      %v308 = vunpack.c.l.b16 %v270
      %v309 = vunpack.c.l.b16 %v271
      %v310 = vunpack.c.l.b16 %v272
      %v311 = vunpack.c.l.b16 %v273
      %v312 = vunpack.c.l.b16 %v274
      %v313 = vunpack.c.l.b16 %v275
      %v314 = vunpack.c.l.b16 %v276
      %v315 = vunpack.c.l.b16 %v277
      %v316 = vunpack.c.l.b16 %v278
      %v317 = vunpack.c.l.b16 %v279
      %v318 = vunpack.c.l.b16 %v280
      %v319 = vunpack.c.l.b16 %v281
      %v320 = vunpack.c.l.b16 %v282
      %v321 = vunpack.c.l.b16 %v283
      %v322 = vunpack.c.l.b16 %v284
      %v323 = vpack.c.b16 %v308, %v307
      %v324 = vpack.c.b16 %v310, %v309
      %v325 = vpack.c.b16 %v312, %v311
      %v326 = vpack.c.b16 %v314, %v313
      %v327 = vpack.c.b16 %v316, %v315
      %v328 = vpack.c.b16 %v318, %v317
      %v329 = vpack.c.b16 %v320, %v319
      %v330 = vpack.c.b16 %v322, %v321
      %339 = vmatpush.bf16.msra.mxu0 %v330
      %340 = vmatpush.bf16.msra.mxu0 %v329
      %341 = vmatpush.bf16.msra.mxu0 %v328
      %342 = vmatpush.bf16.msra.mxu0 %v327
      %343 = vmatpush.bf16.msra.mxu0 %v326
      %344 = vmatpush.bf16.msra.mxu0 %v325
      %345 = vmatpush.bf16.msra.mxu0 %v324
      %346 = vmatpush.bf16.msra.mxu0 %v323
      %347 = vmatmul.bf16.gmra.mxu0 %v289
      %v348 = vpop.f32.mrf.mxu0
      %v349 = vadd.f32 0.0, %v348
      %v350 = vpop.f32.mrf.mxu0
      %v351 = vadd.f32 0.0, %v350
      %352 = vdwg.mxu0
      %v353 = vadd.f32 %v265, %v349
      %v354 = vadd.f32 %v266, %v351
      %355 = vst [vmem:[#allocation2] sm:$0xff] %v353
      %356 = vst [vmem:[#allocation2 + $0x8] sm:$0xff] %v354
      // Predicated region
      $region37: #{_lambda_.16} parent=31 // pred_check
        %p357 = pneg %p259
      $region38: #{_lambda_.16} parent=31 // pred_check_branch
        %359 = sbr.rel (%p357) target = $region40
      $region39: #{_lambda_.16} parent=31 // pred_region
        %v360 = vld [vmem:[#allocation2] sm:$0xff]
        %v361 = vld [vmem:[#allocation2 + $0x8] sm:$0xff]
        %v362 = vld [vmem:[%s249] sm:$0x1]
        %v364 = vperm.slane %v362, 0
        %v366 = vadd.f32 %v360, %v364
        %v367 = vadd.f32 %v361, %v364
        %v368 = vpack.c.bf16 %v366, %v366
        %v369 = vpack.c.bf16 %v367, %v367
        %370 = vst [vmem:[%s257] sm:$0xf] %v368
        %371 = vst [vmem:[%s257 + $0x4] sm:$0xf] %v369
      $region40: #{_lambda_.16} parent=31 // pred_fallthru
        _
      %s372 = smul.u32 2, %s19
      %p373 = scmp.lt.s32.totalorder %s372, 3
      %s374 = scalar_select %p373, %s372, 3
      %p375 = scmp.lt.s32.totalorder %s20, 0
      %s376 = scalar_select %p375, %s20, 0
      %s377 = sadd.s32 %s376, %s374
      %s378 = smul.addr %s377, 4
      %s379 = scalar_lea.vmem %s3, %s378
      // Predicated region
      $region41: #{_lambda_.16} parent=31 // pred_check
        %p380 = pneg %p135
      $region42: #{_lambda_.16} parent=31 // pred_check_branch
        %382 = sbr.rel (%p380) target = $region44
      $region43: #{_lambda_.16} parent=31 // pred_region
        %s383 = smul.u32 2, %s19
      $region44: #{_lambda_.16} parent=31 // pred_fallthru
        _
    $region32: #{_lambda_.16} parent=5 // pred_fallthru
      _
    %p384 = scmp.le.s32.totalorder 2, %s9
    // Predicated region
    $region45: #{_lambda_.16} parent=5 // pred_check
      %p385 = pneg %p384
    $region46: #{_lambda_.16} parent=5 // pred_check_branch
      %387 = sbr.rel (%p385) target = $region48
    $region47: #{_lambda_.16} parent=5 // pred_region
      %s388 = ssub.s32 %s9, 2
      // Predicated region
      $region49: #{_lambda_.16} parent=47 // pred_check
        %p389 = pneg %p141
      $region50: #{_lambda_.16} parent=47 // pred_check_branch
        %391 = sbr.rel (%p389) target = $region52
      $region51: #{_lambda_.16} parent=47 // pred_region
        %s392 = smul.u32 2, %s22
        %p393 = scmp.lt.s32.totalorder %s392, 3
        %s394 = scalar_select %p393, %s392, 3
        %p395 = scmp.lt.s32.totalorder %s23, 0
        %s396 = scalar_select %p395, %s23, 0
        %s397 = sadd.s32 %s396, %s394
        %s398 = smul.addr %s397, 4
        %s399 = scalar_lea.vmem %s3, %s398
      $region52: #{_lambda_.16} parent=47 // pred_fallthru
        _
    $region48: #{_lambda_.16} parent=5 // pred_fallthru
      _
  $region6: #{_lambda_.16} parent=0 // loop_footer
    %s13 = sadd.s32 1, %s9
  $region7: #{_lambda_.16} parent=0 // loop_footer_branch
    %8 = sbr.rel target = $region3
  $region8: #{_lambda_.16} parent=0 // loop_exit
    _

// kernel: tile.18
$region0: #{tile.18}
  #allocation0 [shape = 's32[1]{0}', space=sflag, size = 0x4, scoped, tag = 'scoped memory for tile.18']
  %s0 = inlined_call_operand.vmem [shape: f32[3], index: 0, kind: input, shape index: {}]
  %s1 = inlined_call_operand.vmem [shape: f32[16,3], index: 1, kind: output, shape index: {}]
  // Predicated region
  $region2: #{tile.18} parent=0 // pred_check
    _
  $region3: #{tile.18} parent=0 // pred_check_branch
    %3 = sbr.rel (0) target = $region5
  $region4: #{tile.18} parent=0 // pred_region
    _
  $region5: #{tile.18} parent=0 // pred_fallthru
    _
  %v4 = vld [vmem:[%s0] ss:$0 sm:$0xff]
  %5 = vst [vmem:[%s1] sm:$0xff] %v4
  %s6 = scalar_lea.vmem %s1, 8
  %7 = vst [vmem:[%s6] sm:$0xff] %v4

// kernel: _lambda_.17
$region0: #{_lambda_.17}
  #allocation0 [shape = 'u32[]', space=smem, size = 0x4, offset = 0x4, fixed_abs, tag = 'smem constant byte address 0x4 - core index']
  #allocation1 [shape = 'u32[72,128]{1,0:T(1,128)}', space=vmem, size = 0x9000, scoped, tag = 'internal scratch']
  %s0 = inlined_call_operand.vmem [shape: bf16[2,7,48], index: 0, kind: input, shape index: {}]
  %s1 = inlined_call_operand.vmem [shape: f32[4,48], index: 1, kind: input, shape index: {}]
  %s2 = inlined_call_operand.vmem [shape: f32[2,7,48], index: 2, kind: output, shape index: {}]
  %s3 = sld [smem:[#allocation0]]
  $region41: #{_lambda_.17} parent=0
    _
  %s5 = ssub.s32 1, %s3
  %s6 = scalar_select 0, %s5, %s3
  loop: start=0, step=1, limit=4
  $region2: #{_lambda_.17} parent=0 // loop_pre_header
    _
  $region3: #{_lambda_.17} parent=0 // loop_header
    %s8 = sphi 0, %s12
    %p9 = scmp.ge.s32.totalorder %s8, 4
    %s18 = sphi 0, %s20
    %s21 = sphi 0, %s18
    %s22 = sphi 0, %s21
    %s38 = sphi 0, %s22
    %s42 = sphi 0, %s42
    %s44 = sphi 0, %s42
    %s45 = sphi 0, %s44
    %s59 = sphi 0, %s45
    %s65 = sphi 0, %s67
    %s68 = sphi 0, %s65
    %s69 = sphi 0, %s68
    %s85 = sphi 0, %s69
  $region4: #{_lambda_.17} parent=0 // loop_header_branch
    %11 = sbr.rel (%p9) target = $region8
  $region5: #{_lambda_.17} parent=0 // loop_body
    %s13 = ssub.s32 %s8, 1
    %s14 = ssub.s32 %s8, 2
    %s15 = sadd.s32 %s8, 1
    %s16 = ssub.s32 %s8, %s15
    %p17 = scmp.eq.s32.totalorder %s16, 0
    %s19 = sadd.s32 %s18, 1
    %s20 = scalar_select %p17, %s18, %s19
    %p23 = pneg %p17
    %p24 = scmp.eq.s32.totalorder %s8, 1
    %p25 = por %p23, %p24
    %p26 = scmp.ne.s32.totalorder %s18, %s21
    %p27 = scmp.eq.s32.totalorder %s8, 0
    %p28 = por %p26, %p27
    %p29 = scmp.ne.s32.totalorder %s18, %s21
    %p30 = scmp.eq.s32.totalorder %s13, 1
    %p31 = por %p29, %p30
    %p32 = scmp.ne.s32.totalorder %s21, %s22
    %p33 = scmp.eq.s32.totalorder %s13, 0
    %p34 = por %p32, %p33
    %p35 = scmp.ne.s32.totalorder %s21, %s22
    %p36 = scmp.eq.s32.totalorder %s14, 1
    %p37 = por %p35, %p36
    %p39 = scmp.ne.s32.totalorder %s22, %s38
    %p40 = scmp.eq.s32.totalorder %s14, 0
    %p41 = por %p39, %p40
    %s43 = sadd.s32 %s42, 1
    %p46 = scmp.eq.s32.totalorder %s8, 1
    %p47 = scmp.ne.s32.totalorder %s42, %s44
    %p48 = scmp.eq.s32.totalorder %s8, 0
    %p49 = por %p47, %p48
    %p50 = scmp.ne.s32.totalorder %s42, %s44
    %p51 = scmp.eq.s32.totalorder %s13, 1
    %p52 = por %p50, %p51
    %p53 = scmp.ne.s32.totalorder %s44, %s45
    %p54 = scmp.eq.s32.totalorder %s13, 0
    %p55 = por %p53, %p54
    %p56 = scmp.ne.s32.totalorder %s44, %s45
    %p57 = scmp.eq.s32.totalorder %s14, 1
    %p58 = por %p56, %p57
    %p60 = scmp.ne.s32.totalorder %s45, %s59
    %p61 = scmp.eq.s32.totalorder %s14, 0
    %p62 = por %p60, %p61
    %s63 = ssub.s32 %s8, %s15
    %p64 = scmp.eq.s32.totalorder %s63, 0
    %s66 = sadd.s32 %s65, 1
    %s67 = scalar_select %p64, %s65, %s66
    %p70 = pneg %p64
    %p71 = scmp.eq.s32.totalorder %s8, 1
    %p72 = por %p70, %p71
    %p73 = scmp.ne.s32.totalorder %s65, %s68
    %p74 = scmp.eq.s32.totalorder %s8, 0
    %p75 = por %p73, %p74
    %p76 = scmp.ne.s32.totalorder %s65, %s68
    %p77 = scmp.eq.s32.totalorder %s13, 1
    %p78 = por %p76, %p77
    %p79 = scmp.ne.s32.totalorder %s68, %s69
    %p80 = scmp.eq.s32.totalorder %s13, 0
    %p81 = por %p79, %p80
    %p82 = scmp.ne.s32.totalorder %s68, %s69
    %p83 = scmp.eq.s32.totalorder %s14, 1
    %p84 = por %p82, %p83
    %p86 = scmp.ne.s32.totalorder %s69, %s85
    %p87 = scmp.eq.s32.totalorder %s14, 0
    %p88 = por %p86, %p87
    %p89 = scmp.le.s32.totalorder 1, %s8
    %p90 = scmp.lt.s32.totalorder %s8, 3
    %p91 = pnand %p89, %p90
    %p92 = pneg %p91
    // Predicated region
    $region9: #{_lambda_.17} parent=5 // pred_check
      _
    $region10: #{_lambda_.17} parent=5 // pred_check_branch
      %94 = sbr.rel (%p91) target = $region12
    $region11: #{_lambda_.17} parent=5 // pred_region
      %s95 = ssub.s32 %s8, 1
      // Predicated region
      $region13: #{_lambda_.17} parent=11 // pred_check
        %p96 = pneg %p55
      $region14: #{_lambda_.17} parent=11 // pred_check_branch
        %98 = sbr.rel (%p96) target = $region16
      $region15: #{_lambda_.17} parent=11 // pred_region
        _
      $region16: #{_lambda_.17} parent=11 // pred_fallthru
        _
    $region12: #{_lambda_.17} parent=5 // pred_fallthru
      _
    %p99 = scmp.lt.s32.totalorder %s8, 2
    // Predicated region
    $region17: #{_lambda_.17} parent=5 // pred_check
      %p100 = pneg %p99
    $region18: #{_lambda_.17} parent=5 // pred_check_branch
      %102 = sbr.rel (%p100) target = $region20
    $region19: #{_lambda_.17} parent=5 // pred_region
      // Predicated region
      $region21: #{_lambda_.17} parent=19 // pred_check
        %p103 = pneg %p28
      $region22: #{_lambda_.17} parent=19 // pred_check_branch
        %105 = sbr.rel (%p103) target = $region24
      $region23: #{_lambda_.17} parent=19 // pred_region
        %p106 = scmp.lt.s32.totalorder %s8, 1
        %s107 = scalar_select %p106, %s8, 1
        %s108 = smul.addr %s107, 4
        %s109 = scalar_lea.vmem %s0, %s108
      $region24: #{_lambda_.17} parent=19 // pred_fallthru
        _
    $region20: #{_lambda_.17} parent=5 // pred_fallthru
      _
    %p110 = scmp.le.s32.totalorder 1, %s8
    %p111 = scmp.lt.s32.totalorder %s8, 3
    %p112 = pnand %p110, %p111
    %p113 = pneg %p112
    // Predicated region
    $region25: #{_lambda_.17} parent=5 // pred_check
      _
    $region26: #{_lambda_.17} parent=5 // pred_check_branch
      %115 = sbr.rel (%p112) target = $region28
    $region27: #{_lambda_.17} parent=5 // pred_region
      %s116 = ssub.s32 %s8, 1
      %p117 = scmp.lt.s32.totalorder %s13, 1
      %s118 = scalar_select %p117, %s13, 1
      %s119 = smul.addr %s118, 4
      %s120 = scalar_lea.vmem %s0, %s119
      %p121 = pneg %p34
      %p122 = pneg %p31
      %p123 = pneg %p55
      %p124 = pneg %p52
      %p125 = pneg %p81
      %p126 = pneg %p78
      %p127 = scmp.lt.s32.totalorder %s13, 1
      %s128 = scalar_select %p127, %s13, 1
      %s129 = smul.addr %s128, 8
      %s130 = scalar_lea.vmem %s2, %s129
      %p131 = scmp.lt.s32.totalorder %s13, 1
      %s132 = scalar_select %p131, %s13, 1
      %s133 = smul.addr %s132, 4
      %s134 = scalar_lea.vmem %s0, %s133
      %p135 = scmp.lt.s32.totalorder %s13, 1
      %s136 = scalar_select %p135, %s13, 1
      %s137 = smul.addr %s136, 8
      %s138 = scalar_lea.vmem %s2, %s137
      %v139 = vld [vmem:[%s134] sm:$0xf]
      %v140 = vunpack.c.l.bf16 %v139
      %v141 = vld [vmem:[%s1] sm:$0xf]
      %v142 = vxor.u32 %v140, 2147483648
      %v143 = vmul.f32 %v142, 1.442695
      %v144 = vpow.pop %v143
      %v145 = vadd.f32 %v144, 1.0
      %v146 = vrcp.pop %v145
      %v147 = vmul.f32 %v145, %v146
      %v148 = vsub.f32 1.0, %v147
      %v149 = vmul.f32 %v146, %v148
      %v150 = vadd.f32 %v146, %v149
      %vm151 = vweird.f32 %v145
      %vm152 = vweird.f32 %v146
      %vm153 = vmor %vm151, %vm152
      %v154 = vsel %vm153, %v146, %v150
      %v155 = vand.u32 2147483647, %v145
      %vm156 = vcmp.eq.f32.partialorder %v155, 8.507059e+37
      %v157 = vand.u32 %v145, 2147483648
      %v158 = vor.u32 1.1754944e-38, %v157
      %v159 = vsel %vm156, %v158, %v154
      %v160 = vmul.f32 1.0, %v159
      %v161 = vadd.f32 %v160, %v141
      %v162 = vmul.f32 %v140, 1.442695
      %v163 = vpow.pop %v162
      %v164 = vmul.f32 %v163, %v141
      %vm165 = vcmask 1041408
      %v166 = vsel %vm165, %v161, %v164
      %v167 = vmul.f32 %v166, 4.0
      %vm168 = vcmask 1043456
      %v169 = vsel %vm168, %v167, %v160
      %vm170 = vcmask 391168
      %171 = vst.msk [vmem:[%s138] sm:$0x7f] %vm170, %v169
      %p172 = scmp.lt.s32.totalorder %s13, 1
      %s173 = scalar_select %p172, %s13, 1
      %s174 = smul.addr %s173, 8
      %s175 = scalar_lea.vmem %s2, %s174
      // Predicated region
      $region29: #{_lambda_.17} parent=27 // pred_check
        %p176 = pneg %p78
      $region30: #{_lambda_.17} parent=27 // pred_check_branch
        %178 = sbr.rel (%p176) target = $region32
      $region31: #{_lambda_.17} parent=27 // pred_region
        _
      $region32: #{_lambda_.17} parent=27 // pred_fallthru
        _
    $region28: #{_lambda_.17} parent=5 // pred_fallthru
      _
    %p179 = scmp.le.s32.totalorder 2, %s8
    // Predicated region
    $region33: #{_lambda_.17} parent=5 // pred_check
      %p180 = pneg %p179
    $region34: #{_lambda_.17} parent=5 // pred_check_branch
      %182 = sbr.rel (%p180) target = $region36
    $region35: #{_lambda_.17} parent=5 // pred_region
      %s183 = ssub.s32 %s8, 2
      // Predicated region
      $region37: #{_lambda_.17} parent=35 // pred_check
        %p184 = pneg %p84
      $region38: #{_lambda_.17} parent=35 // pred_check_branch
        %186 = sbr.rel (%p184) target = $region40
      $region39: #{_lambda_.17} parent=35 // pred_region
        %p187 = scmp.lt.s32.totalorder %s14, 1
        %s188 = scalar_select %p187, %s14, 1
        %s189 = smul.addr %s188, 8
        %s190 = scalar_lea.vmem %s2, %s189
      $region40: #{_lambda_.17} parent=35 // pred_fallthru
        _
    $region36: #{_lambda_.17} parent=5 // pred_fallthru
      _
  $region6: #{_lambda_.17} parent=0 // loop_footer
    %s12 = sadd.s32 1, %s8
  $region7: #{_lambda_.17} parent=0 // loop_footer_branch
    %7 = sbr.rel target = $region3
  $region8: #{_lambda_.17} parent=0 // loop_exit
    _

</llo_original>
